<compile_context>
chip_gen: v5e
topology: v5e:2x2
jax: 0.10.0
libtpu: 0.0.40
codegen_flags: <defaults>
</compile_context>

<pallas_src>
import functools

import numpy as np
import jax
import jax.numpy as jnp
from jax.experimental import pallas as pl
from jax.experimental.pallas import tpu as pltpu  # noqa: F401  (TPU backend; no TPU-specific params needed at this size)

# ----------------------------- configuration ---------------------------------
B = 2                      # batch
H, W = 16, 16              # mesh_size = (lat_size, lon_size)
DYN, STA = 4, 4            # dynamic / static input channels (last 2 static = lat, lon)
HIDDEN = 8                 # cfg.model.latent_size
NUM_VELS = 4               # cfg.model.velocity_vectors
DIFF = 8                   # cfg.model.diffusion_size
NUM_LAYERS = 2             # cfg.model.num_layers
OUT_DIM = 4                # datamodule.num_out_features
NCF = 4                    # num_common_features
N_INPUTS = 1               # n_time_inputs
DT = 3600.0 / 729212.0     # base_dt / SYNOPTIC_TIME_SCALE (static python float)
N = B * H * W              # pixels = lane axis (512, multiple of 128)
G = HIDDEN * 9             # rows of a hidden-width patch slab (72)


# ----------------------------- Pallas kernels ---------------------------------
def _mm(a, b):
    return jnp.dot(a, b, preferred_element_type=jnp.float32)


def _grouped_ln(h, m, e, gamma, beta, eps=1e-5):
    """Per-pixel LayerNorm over the channel axis, applied per tap group of a
    (C*9, N) patch slab (row index = c*9 + t).  Stats use two tiny constant
    matmuls (M sums channels per tap, E broadcasts back), so no in-kernel
    reshape or gather is needed.  Exact: every patch column is a copy of a z column."""
    inv_c = 1.0 / HIDDEN
    mean = _mm(m, h) * inv_c                      # (9, N)
    xc = h - _mm(e, mean)                         # (C*9, N)
    var = _mm(m, xc * xc) * inv_c                 # (9, N)
    return xc * _mm(e, jax.lax.rsqrt(var + eps)) * gamma + beta


def _sepconv_kernel(p_ref, w_ref, b_ref, o_ref):
    # out = W @ patches + b   (geo-cyclic pad + depthwise 3x3 + pointwise, folded)
    o_ref[...] = _mm(w_ref[...], p_ref[...]) + b_ref[...]


def _sepconv_res_kernel(scale, p_ref, res_ref, w_ref, b_ref, o_ref):
    # out = res + scale * (W @ patches + b), written in place of `res` (io-aliased)
    o_ref[...] = res_ref[...] + scale * (_mm(w_ref[...], p_ref[...]) + b_ref[...])


def _advect_pre_kernel(p_ref, wv_ref, wdc_ref, m_ref, e_ref, vec_ref, vel_ref, proj_ref):
    # Fused: velocity-net pre-LN + velocity SepConv, and down-projection of raw z,
    # all from one load of the (72, 512) patch slab of z.
    v2 = 2 * NUM_VELS
    p = p_ref[...]
    vec = vec_ref[...]
    gamma, beta = vec[0:G, :], vec[G:2 * G, :]
    bv = vec[2 * G:2 * G + v2, :]
    bd = vec[2 * G + v2:2 * G + v2 + NUM_VELS, :]
    # down-projection acts on raw z (= center tap of the slab); center selection is
    # folded into wdc on the host, so this is a plain (V, 72) matmul.
    proj_ref[...] = _mm(wdc_ref[...], p) + bd
    ln = _grouped_ln(p, m_ref[...], e_ref[...], gamma, beta)
    vel_ref[...] = _mm(wv_ref[...], ln) + bv


def _diff_front_kernel(p_ref, wup_ref, wf_ref, m_ref, e_ref, vec_ref, o_ref):
    # Fused: up-projection (block-diagonal on the interp patch slab) + diffusion pre-LN
    # + folded SepConv0->CLinear.
    vec = vec_ref[...]
    bup, gamma, beta = vec[0:G, :], vec[G:2 * G, :], vec[2 * G:3 * G, :]
    bf = vec[3 * G:3 * G + HIDDEN, :]
    zp = _mm(wup_ref[...], p_ref[...]) + bup      # (72, N) patches of z_adv = up_proj(interp)
    ln = _grouped_ln(zp, m_ref[...], e_ref[...], gamma, beta)
    o_ref[...] = _mm(wf_ref[...], ln) + bf


# ----------------------------- kernel wrappers ---------------------------------
def run_sepconv(patches, w, b):
    return pl.pallas_call(
        _sepconv_kernel,
        out_shape=jax.ShapeDtypeStruct((w.shape[0], N), jnp.float32),
    )(patches, w, b)


def run_sepconv_res(patches, res, w, b, scale):
    return pl.pallas_call(
        functools.partial(_sepconv_res_kernel, float(scale)),
        out_shape=jax.ShapeDtypeStruct((w.shape[0], N), jnp.float32),
        input_output_aliases={1: 0},          # write the residual update in place
    )(patches, res, w, b)


def run_advect_pre(patches, lp, plan):
    return pl.pallas_call(
        _advect_pre_kernel,
        out_shape=(jax.ShapeDtypeStruct((2 * NUM_VELS, N), jnp.float32),
                   jax.ShapeDtypeStruct((NUM_VELS, N), jnp.float32)),
    )(patches, lp['adv_wv'], lp['adv_wdc'], plan['M'], plan['E'], lp['adv_vec'])


def run_diff_front(patches, lp, plan):
    return pl.pallas_call(
        _diff_front_kernel,
        out_shape=jax.ShapeDtypeStruct((HIDDEN, N), jnp.float32),
    )(patches, lp['dif_wup'], lp['dif_wf'], plan['M'], plan['E'], lp['dif_vec'])


# ------------------- host-side plan: index tables + weight folding -------------
def _np_geo_pad_index():
    """(H+2, W+2) int32 table of flat pixel indices after geo-cyclic padding (pad=1).
    TODO(synk): GeoCyclicPadding source not provided; circular in longitude, pole rows
    shifted by half the padded width — same interpretation as the previous version."""
    idx = np.arange(H * W, dtype=np.int32).reshape(H, W)
    xp = np.concatenate([idx[:, -1:], idx, idx[:, :1]], axis=1)     # (H, W+2)
    wp = xp.shape[1]
    top = np.roll(xp[:1], shift=wp // 2, axis=1)
    bot = np.roll(xp[-1:], shift=wp // 2, axis=1)
    return np.concatenate([top, xp, bot], axis=0)                   # (H+2, W+2)


def _sepconv_fold(layer):
    """Fold depthwise (Cin,3,3) + pointwise (Cin,Cout) into one (Cout, Cin*9) matrix
    (exact because there is no nonlinearity between the two)."""
    f32 = np.float32
    dw_w = np.asarray(layer['dw_w'], f32)
    dw_b = np.asarray(layer['dw_b'], f32)
    pw_w = np.asarray(layer['pw_w'], f32)
    pw_b = np.asarray(layer['pw_b'], f32)
    cin = dw_w.shape[0]
    dw = dw_w.reshape(cin, 9)                                       # tap t = ki*3 + kj
    w = (pw_w.T[:, :, None] * dw[None, :, :]).reshape(pw_w.shape[1], cin * 9)
    b = pw_b + dw_b @ pw_w
    return w, b


def prepare_plan(params):
    """Fold ALL weights into final per-kernel operands outside the traced forward."""
    f32 = np.float32
    C, V = HIDDEN, NUM_VELS

    padded = _np_geo_pad_index()
    taps = np.stack([padded[ki:ki + H, kj:kj + W].reshape(H * W)
                     for ki in range(3) for kj in range(3)], axis=0)          # (9, 256)
    offs = np.arange(B, dtype=np.int32) * (H * W)
    tap_full = (taps[:, None, :] + offs[None, :, None]).reshape(9, N)
    pad_full = (padded.reshape(1, -1) + offs[:, None]).reshape(-1)

    def col(v):
        return jnp.asarray(np.asarray(v, f32).reshape(-1, 1))

    plan = {
        'tap': jnp.asarray(tap_full, jnp.int32),
        'pad': jnp.asarray(pad_full, jnp.int32),
        # grouped-LN helper matrices (channel-sum / broadcast per tap group)
        'M': jnp.asarray(np.kron(np.ones((1, C), f32), np.eye(9, dtype=f32))),   # (9, 72)
        'E': jnp.asarray(np.kron(np.ones((C, 1), f32), np.eye(9, dtype=f32))),   # (72, 9)
    }

    # ---- input projection: two SepConvs (no activation -> fold exact) ----
    ip = params['input_proj']
    assert not ip['activation']
    w0, b0 = _sepconv_fold(ip['layers'][0])
    w1, b1 = _sepconv_fold(ip['layers'][1])
    plan['in1_w'], plan['in1_b'] = jnp.asarray(w0), col(b0)
    plan['in2_w'], plan['in2_b'] = jnp.asarray(w1), col(b1)

    center = np.eye(9, dtype=f32)[4:5]                                        # center tap one-hot (1, 9)
    plan['layers'] = []
    for i in range(NUM_LAYERS):
        adv, diff = params['advection'][i], params['diffusion'][i]
        lp = {}

        # ---- kernel A: velocity-net (pre-LN + SepConv) + raw-z down-projection ----
        vb = adv['velocity_net']
        assert not vb['activation']
        wv, bv = _sepconv_fold(vb['layers'][0])                               # (2V, 72)
        dwn = adv['down_projection']['layers'][0]
        wd_t = np.asarray(dwn['w'], f32).T                                    # (V, C)
        lp['adv_wv'] = jnp.asarray(wv)
        lp['adv_wdc'] = jnp.asarray(np.kron(wd_t, center))                    # (V, 72) center-tap fold
        lp['adv_vec'] = col(np.concatenate([
            np.repeat(np.asarray(vb['ln']['g'], f32), 9),
            np.repeat(np.asarray(vb['ln']['b'], f32), 9),
            np.asarray(bv, f32),
            np.asarray(dwn['b'], f32)]))                                      # (156, 1)

        # ---- kernel B1: up-projection + diffusion pre-LN + SepConv0->CLinear fold ----
        assert not diff['activation']
        up = adv['up_projection']['layers'][0]
        up_t = np.asarray(up['w'], f32).T                                     # (C, V)
        w_s0, b_s0 = _sepconv_fold(diff['layers'][0])                         # (C, 72)
        cl = diff['layers'][1]
        cl_t = np.asarray(cl['w'], f32).T                                     # (C, C)
        lp['dif_wup'] = jnp.asarray(np.kron(up_t, np.eye(9, dtype=f32)))      # (72, 36) block-diag
        lp['dif_wf'] = jnp.asarray(cl_t @ w_s0)                               # (C, 72) folded
        bf = cl_t @ b_s0 + np.asarray(cl['b'], f32)
        lp['dif_vec'] = col(np.concatenate([
            np.repeat(np.asarray(up['b'], f32), 9),
            np.repeat(np.asarray(diff['ln']['g'], f32), 9),
            np.repeat(np.asarray(diff['ln']['b'], f32), 9),
            bf]))                                                             # (224, 1)

        # ---- kernel B2: final diffusion SepConv + residual ----
        w_s2, b_s2 = _sepconv_fold(diff['layers'][2])
        lp['dif_back_w'] = jnp.asarray(w_s2)
        lp['dif_back_b'] = col(b_s2)
        plan['layers'].append(lp)

    # ---- output projection: SepConv -> CLinear fold (+ x_res residual, aliased) ----
    op = params['output_proj']
    assert not op['activation']
    w_s, b_s = _sepconv_fold(op['layers'][0])
    cl = op['layers'][1]
    cl_t = np.asarray(cl['w'], f32).T                                         # (OUT_DIM, C)
    plan['out_w'] = jnp.asarray(cl_t @ w_s)
    plan['out_b'] = col(cl_t @ b_s + np.asarray(cl['b'], f32))
    return plan


# ----------------------------- parameter init ---------------------------------
def init_gmblock(key, input_dim, output_dim, hidden_dim=None, layers=('CLinear',),
                 kernel_size=3, activation=False, pre_normalize=False, scale=0.1):
    if hidden_dim is None:
        hidden_dim = output_dim
    dims = [input_dim] + [hidden_dim] * (len(layers) - 1) + [output_dim]
    params = {'activation': activation, 'kernel_size': kernel_size, 'layers': []}
    if pre_normalize:
        params['ln'] = {'g': jnp.ones((input_dim,), jnp.float32),
                        'b': jnp.zeros((input_dim,), jnp.float32)}
    for li, ltype in enumerate(layers):
        cin, cout = dims[li], dims[li + 1]
        key, k1, k2 = jax.random.split(key, 3)
        if ltype == 'CLinear':
            params['layers'].append({
                'type': 'clinear',
                'w': scale * jax.random.normal(k1, (cin, cout), jnp.float32),
                'b': jnp.zeros((cout,), jnp.float32)})
        else:  # 'SepConv'
            params['layers'].append({
                'type': 'sepconv',
                'dw_w': scale * jax.random.normal(k1, (cin, kernel_size, kernel_size), jnp.float32),
                'dw_b': jnp.zeros((cin,), jnp.float32),
                'pw_w': scale * jax.random.normal(k2, (cin, cout), jnp.float32),
                'pw_b': jnp.zeros((cout,), jnp.float32)})
    return params


def init_paradis(key):
    params = {}
    key, k = jax.random.split(key)
    params['input_proj'] = init_gmblock(k, DYN + STA, HIDDEN, hidden_dim=HIDDEN,
                                        layers=('SepConv', 'SepConv'), activation=False)
    params['advection'] = []
    params['diffusion'] = []
    for _ in range(NUM_LAYERS):
        key, k1, k2, k3, k4 = jax.random.split(key, 5)
        params['advection'].append({
            'velocity_net': init_gmblock(k1, HIDDEN, 2 * NUM_VELS, hidden_dim=HIDDEN,
                                         layers=('SepConv',), activation=False,
                                         pre_normalize=True),
            'down_projection': init_gmblock(k2, HIDDEN, NUM_VELS, layers=('CLinear',),
                                            activation=False),
            'up_projection': init_gmblock(k3, NUM_VELS, HIDDEN, layers=('CLinear',),
                                          activation=False),
        })
        params['diffusion'].append(
            init_gmblock(k4, HIDDEN, HIDDEN, hidden_dim=DIFF,
                         layers=('SepConv', 'CLinear', 'SepConv'),
                         activation=False, pre_normalize=True))
    key, k = jax.random.split(key)
    params['output_proj'] = init_gmblock(k, HIDDEN, OUT_DIM, hidden_dim=HIDDEN,
                                         layers=('SepConv', 'CLinear'), activation=False)
    return params


# --------------------------- semi-Lagrangian advection --------------------------
def transform_to_latlon(lat_prime, lon_prime, lat_p, lon_p):
    sin_lat_prime, cos_lat_prime = jnp.sin(lat_prime), jnp.cos(lat_prime)
    sin_lon_prime, cos_lon_prime = jnp.sin(lon_prime), jnp.cos(lon_prime)
    sin_lat_p, cos_lat_p = jnp.sin(lat_p), jnp.cos(lat_p)
    sin_lat = sin_lat_prime * cos_lat_p + cos_lat_prime * cos_lon_prime * sin_lat_p
    lat = jnp.arcsin(jnp.clip(sin_lat, -1 + 1e-7, 1 - 1e-7))
    num = cos_lat_prime * sin_lon_prime
    den = cos_lat_prime * cos_lon_prime * cos_lat_p - sin_lat_prime * sin_lat_p
    lon = lon_p + jnp.arctan2(num, den)
    lon = jnp.remainder(lon + 2 * jnp.pi, 2 * jnp.pi)
    return lat, lon


def grid_sample_bilinear_border(img, grid):
    """torch.grid_sample(mode='bilinear', padding_mode='border', align_corners=True).
    img: (M,1,Hin,Win), grid: (M,Hout,Wout,2) with (x, y) in [-1, 1].
    TODO(synk): reference default is 'bicubic'; bilinear used (same as previous version)."""
    _, _, Hin, Win = img.shape
    gx, gy = grid[..., 0], grid[..., 1]
    ix = jnp.clip((gx + 1.0) * 0.5 * (Win - 1), 0.0, Win - 1.0)
    iy = jnp.clip((gy + 1.0) * 0.5 * (Hin - 1), 0.0, Hin - 1.0)
    x0 = jnp.floor(ix)
    y0 = jnp.floor(iy)
    wx, wy = ix - x0, iy - y0
    x0i = jnp.clip(x0.astype(jnp.int32), 0, Win - 1)
    y0i = jnp.clip(y0.astype(jnp.int32), 0, Hin - 1)
    x1i = jnp.clip(x0i + 1, 0, Win - 1)
    y1i = jnp.clip(y0i + 1, 0, Hin - 1)

    def one(im, y0i, y1i, x0i, x1i, wx, wy):
        f = im[0].reshape(-1)
        v00 = f[y0i * Win + x0i]
        v01 = f[y0i * Win + x1i]
        v10 = f[y1i * Win + x0i]
        v11 = f[y1i * Win + x1i]
        top = v00 * (1 - wx) + v01 * wx
        bot = v10 * (1 - wx) + v11 * wx
        return top * (1 - wy) + bot * wy

    out = jax.vmap(one)(img, y0i, y1i, x0i, x1i, wx, wy)
    return out[:, None]


def semi_lagrangian_interp(vel, proj, lat_grid, lon_grid, lat_minmax, lon_minmax, pad_idx, dt):
    """Departure points + bilinear resample of the down-projected field.
    TODO(synk): kept in plain JAX (arcsin/atan2 + data-dependent gathers have no robust
    Mosaic lowering); these are ~25 tiny elementwise/gather ops per layer."""
    min_lat, max_lat = lat_minmax
    min_lon, max_lon = lon_minmax
    V = NUM_VELS
    velr = vel.reshape(2, V, B, H, W)
    u, v = velr[0], velr[1]
    lon_prime = -u * dt
    lat_prime = -v * dt
    lat_p = jnp.broadcast_to(lat_grid[None], (V, B, H, W))
    lon_p = jnp.broadcast_to(lon_grid[None], (V, B, H, W))
    lat_dep, lon_dep = transform_to_latlon(lat_prime, lon_prime, lat_p, lon_p)
    grid_x = 2 * (lon_dep - min_lon) / (max_lon - min_lon) - 1
    grid_y = 2 * (lat_dep - min_lat) / (max_lat - min_lat) - 1
    grid_x = jnp.remainder(grid_x + 1, 2) - 1
    geo_left = grid_x <= 0
    geo_right = grid_x > 0
    lat_outer = jnp.abs(grid_y) > 1
    grid_x = jnp.where(lat_outer & geo_left, grid_x + 1, grid_x)
    grid_x = jnp.where(lat_outer & geo_right, grid_x - 1, grid_x)
    grid_y = jnp.where(grid_y < -1, -(2 + grid_y), grid_y)
    grid_y = jnp.where(grid_y > 1, 2 - grid_y, grid_y)

    Hp, Wp = H + 2, W + 2
    dyn_padded = jnp.take(proj, pad_idx, axis=1).reshape(V, B, Hp, Wp)   # geo-cyclic pad
    grid_x = grid_x * W / Wp
    grid_y = grid_y * H / Hp
    grid = jnp.stack([grid_x, grid_y], axis=-1).reshape(V * B, H, W, 2)
    dp = dyn_padded.reshape(V * B, 1, Hp, Wp)
    interp = grid_sample_bilinear_border(dp, grid)                       # (V*B, 1, H, W)
    return interp.reshape(V, N)


# ----------------------------- forward pass -------------------------------------
def paradis_forward(plan, x):
    lat_grid = x[:, DYN + STA - 2]
    lon_grid = x[:, DYN + STA - 1]

    # persistent lane-dense layout: channels on sublanes, pixels (B*H*W = 512) on lanes
    x_cn = jnp.transpose(x, (1, 0, 2, 3)).reshape(DYN + STA, N)
    x_res = x_cn[(N_INPUTS - 1) * NCF:N_INPUTS * NCF]

    tap = plan['tap']

    def patches(v):
        # geo-cyclic pad + 3x3 im2col = one constant-index gather; row index = c*9 + t
        return jnp.take(v, tap, axis=1).reshape(v.shape[0] * 9, N)

    # grid normalization constants (depend on input lat/lon; computed once, not per layer)
    min_lat, max_lat = jnp.min(lat_grid), jnp.max(lat_grid)
    min_lon, max_lon = jnp.min(lon_grid), jnp.max(lon_grid)

    # input projection: two fused SepConv kernels
    h = run_sepconv(patches(x_cn), plan['in1_w'], plan['in1_b'])
    z = run_sepconv(patches(h), plan['in2_w'], plan['in2_b'])

    for i in range(NUM_LAYERS):
        lp = plan['layers'][i]
        # kernel A: velocity-net pre-LN + SepConv, and raw-z down-projection
        vel, proj = run_advect_pre(patches(z), lp, plan)
        # departure points + bilinear resample (plain JAX, see TODO in helper)
        interp = semi_lagrangian_interp(vel, proj, lat_grid, lon_grid,
                                        (min_lat, max_lat), (min_lon, max_lon),
                                        plan['pad'], DT)
        # kernel B1: up-projection + diffusion pre-LN + folded SepConv0->CLinear
        a = run_diff_front(patches(interp), lp, plan)
        # kernel B2: final diffusion SepConv + in-place residual z += dt * dz
        z = run_sepconv_res(patches(a), z, lp['dif_back_w'], lp['dif_back_b'], DT)

    # output projection (SepConv->CLinear folded) + in-place residual on x_res
    out = run_sepconv_res(patches(z), x_res, plan['out_w'], plan['out_b'], 1.0)
    return jnp.transpose(out.reshape(OUT_DIM, B, H, W), (1, 0, 2, 3))


# ----------------------------- main -------------------------------------------
if __name__ == "__main__":
    key = jax.random.PRNGKey(0)
    kp, kd, ks = jax.random.split(key, 3)
    params = init_paradis(kp)
    plan = prepare_plan(params)          # all weight folding / index tables, outside jit

    # Input x: NCHW, channels = [dynamic (4) | static (4)], last two static = lat/lon grids.
    x_dyn = jax.random.normal(kd, (B, DYN, H, W), jnp.float32)
    x_sta_other = jax.random.normal(ks, (B, STA - 2, H, W), jnp.float32)
    lat = jnp.linspace(-jnp.pi / 2 + 0.05, jnp.pi / 2 - 0.05, H)
    lon = jnp.linspace(0.0, 2 * jnp.pi * (1.0 - 1.0 / W), W)
    lat2d = jnp.broadcast_to(lat[:, None], (H, W))
    lon2d = jnp.broadcast_to(lon[None, :], (H, W))
    latb = jnp.broadcast_to(lat2d[None, None], (B, 1, H, W))
    lonb = jnp.broadcast_to(lon2d[None, None], (B, 1, H, W))
    x = jnp.concatenate([x_dyn, x_sta_other, latb, lonb], axis=1)

    fwd = jax.jit(functools.partial(paradis_forward, plan))
    out = jax.block_until_ready(fwd(x))
    assert out.shape == (B, OUT_DIM, H, W)
    assert bool(jnp.all(jnp.isfinite(out)))
    print("KERNEL_OK")
</pallas_src>

<mosaic_0001>
module attributes {stable_mosaic.version = 11 : i64} {
  func.func @_sepconv_kernel(%arg0: memref<72x512xf32, #tpu.memory_space<vmem>>, %arg1: memref<8x72xf32, #tpu.memory_space<vmem>>, %arg2: memref<8x1xf32, #tpu.memory_space<vmem>>, %arg3: memref<8x512xf32, #tpu.memory_space<vmem>>) attributes {dimension_semantics = [], scalar_prefetch = 0 : i64, scratch_operands = 0 : i64, tpu.core_type = #tpu.core_type<tc>} {
    %c0 = arith.constant 0 : index
    %c0_0 = arith.constant 0 : index
    %0 = vector.load %arg1[%c0, %c0_0] : memref<8x72xf32, #tpu.memory_space<vmem>>, vector<8x72xf32>
    %c0_1 = arith.constant 0 : index
    %c0_2 = arith.constant 0 : index
    %1 = vector.load %arg0[%c0_1, %c0_2] : memref<72x512xf32, #tpu.memory_space<vmem>>, vector<72x512xf32>
    %cst = arith.constant dense<0.000000e+00> : vector<8x512xf32>
    %2 = tpu.matmul %0, %1, %cst {dimension_numbers = #tpu.dot_dimension_numbers<[1], [0], [0], [1], [0, 0, 1, 1], [], []>} : vector<8x72xf32>, vector<72x512xf32>, vector<8x512xf32> -> vector<8x512xf32>
    %c0_3 = arith.constant 0 : index
    %c0_4 = arith.constant 0 : index
    %3 = vector.load %arg2[%c0_3, %c0_4] : memref<8x1xf32, #tpu.memory_space<vmem>>, vector<8x1xf32>
    %4 = vector.broadcast %3 : vector<8x1xf32> to vector<8x512xf32>
    %5 = arith.addf %2, %4 : vector<8x512xf32>
    %c0_5 = arith.constant 0 : index
    %c0_6 = arith.constant 0 : index
    %6 = vector.load %arg3[%c0_5, %c0_6] : memref<8x512xf32, #tpu.memory_space<vmem>>, vector<8x512xf32>
    tpu.vector_store %arg3[%c0_5, %c0_6], %5 {strides = array<i32>} : memref<8x512xf32, #tpu.memory_space<vmem>>, vector<8x512xf32>,
    return
  }
}

module attributes {stable_mosaic.version = 11 : i64} {
  func.func @_advect_pre_kernel(%arg0: memref<72x512xf32, #tpu.memory_space<vmem>>, %arg1: memref<8x72xf32, #tpu.memory_space<vmem>>, %arg2: memref<4x72xf32, #tpu.memory_space<vmem>>, %arg3: memref<9x72xf32, #tpu.memory_space<vmem>>, %arg4: memref<72x9xf32, #tpu.memory_space<vmem>>, %arg5: memref<156x1xf32, #tpu.memory_space<vmem>>, %arg6: memref<8x512xf32, #tpu.memory_space<vmem>>, %arg7: memref<4x512xf32, #tpu.memory_space<vmem>>) attributes {dimension_semantics = [], scalar_prefetch = 0 : i64, scratch_operands = 0 : i64, tpu.core_type = #tpu.core_type<tc>} {
    %c0 = arith.constant 0 : index
    %c0_0 = arith.constant 0 : index
    %0 = vector.load %arg0[%c0, %c0_0] : memref<72x512xf32, #tpu.memory_space<vmem>>, vector<72x512xf32>
    %c0_1 = arith.constant 0 : index
    %c0_2 = arith.constant 0 : index
    %1 = vector.load %arg5[%c0_1, %c0_2] : memref<156x1xf32, #tpu.memory_space<vmem>>, vector<156x1xf32>
    %2 = vector.extract_strided_slice %1 {offsets = [0, 0], sizes = [72, 1], strides = [1, 1]} : vector<156x1xf32> to vector<72x1xf32>
    %3 = vector.extract_strided_slice %1 {offsets = [72, 0], sizes = [72, 1], strides = [1, 1]} : vector<156x1xf32> to vector<72x1xf32>
    %4 = vector.extract_strided_slice %1 {offsets = [144, 0], sizes = [8, 1], strides = [1, 1]} : vector<156x1xf32> to vector<8x1xf32>
    %5 = vector.extract_strided_slice %1 {offsets = [152, 0], sizes = [4, 1], strides = [1, 1]} : vector<156x1xf32> to vector<4x1xf32>
    %c0_3 = arith.constant 0 : index
    %c0_4 = arith.constant 0 : index
    %6 = vector.load %arg2[%c0_3, %c0_4] : memref<4x72xf32, #tpu.memory_space<vmem>>, vector<4x72xf32>
    %cst = arith.constant dense<0.000000e+00> : vector<4x512xf32>
    %7 = tpu.matmul %6, %0, %cst {dimension_numbers = #tpu.dot_dimension_numbers<[1], [0], [0], [1], [0, 0, 1, 1], [], []>} : vector<4x72xf32>, vector<72x512xf32>, vector<4x512xf32> -> vector<4x512xf32>
    %8 = vector.broadcast %5 : vector<4x1xf32> to vector<4x512xf32>
    %9 = arith.addf %7, %8 : vector<4x512xf32>
    %c0_5 = arith.constant 0 : index
    %c0_6 = arith.constant 0 : index
    %10 = vector.load %arg7[%c0_5, %c0_6] : memref<4x512xf32, #tpu.memory_space<vmem>>, vector<4x512xf32>
    tpu.vector_store %arg7[%c0_5, %c0_6], %9 {strides = array<i32>} : memref<4x512xf32, #tpu.memory_space<vmem>>, vector<4x512xf32>,
    %c0_7 = arith.constant 0 : index
    %c0_8 = arith.constant 0 : index
    %11 = vector.load %arg3[%c0_7, %c0_8] : memref<9x72xf32, #tpu.memory_space<vmem>>, vector<9x72xf32>
    %c0_9 = arith.constant 0 : index
    %c0_10 = arith.constant 0 : index
    %12 = vector.load %arg4[%c0_9, %c0_10] : memref<72x9xf32, #tpu.memory_space<vmem>>, vector<72x9xf32>
    %cst_11 = arith.constant dense<0.000000e+00> : vector<9x512xf32>
    %13 = tpu.matmul %11, %0, %cst_11 {dimension_numbers = #tpu.dot_dimension_numbers<[1], [0], [0], [1], [0, 0, 1, 1], [], []>} : vector<9x72xf32>, vector<72x512xf32>, vector<9x512xf32> -> vector<9x512xf32>
    %cst_12 = arith.constant 1.250000e-01 : f32
    %14 = vector.broadcast %cst_12 : f32 to vector<9x512xf32>
    %15 = arith.mulf %13, %14 : vector<9x512xf32>
    %cst_13 = arith.constant dense<0.000000e+00> : vector<72x512xf32>
    %16 = tpu.matmul %12, %15, %cst_13 {dimension_numbers = #tpu.dot_dimension_numbers<[1], [0], [0], [1], [0, 0, 1, 1], [], []>} : vector<72x9xf32>, vector<9x512xf32>, vector<72x512xf32> -> vector<72x512xf32>
    %17 = arith.subf %0, %16 : vector<72x512xf32>
    %18 = arith.mulf %17, %17 : vector<72x512xf32>
    %cst_14 = arith.constant dense<0.000000e+00> : vector<9x512xf32>
    %19 = tpu.matmul %11, %18, %cst_14 {dimension_numbers = #tpu.dot_dimension_numbers<[1], [0], [0], [1], [0, 0, 1, 1], [], []>} : vector<9x72xf32>, vector<72x512xf32>, vector<9x512xf32> -> vector<9x512xf32>
    %cst_15 = arith.constant 1.250000e-01 : f32
    %20 = vector.broadcast %cst_15 : f32 to vector<9x512xf32>
    %21 = arith.mulf %19, %20 : vector<9x512xf32>
    %cst_16 = arith.constant 9.99999974E-6 : f32
    %22 = vector.broadcast %cst_16 : f32 to vector<9x512xf32>
    %23 = arith.addf %21, %22 : vector<9x512xf32>
    %24 = math.rsqrt %23 : vector<9x512xf32>
    %cst_17 = arith.constant dense<0.000000e+00> : vector<72x512xf32>
    %25 = tpu.matmul %12, %24, %cst_17 {dimension_numbers = #tpu.dot_dimension_numbers<[1], [0], [0], [1], [0, 0, 1, 1], [], []>} : vector<72x9xf32>, vector<9x512xf32>, vector<72x512xf32> -> vector<72x512xf32>
    %26 = arith.mulf %17, %25 : vector<72x512xf32>
    %27 = vector.broadcast %2 : vector<72x1xf32> to vector<72x512xf32>
    %28 = arith.mulf %26, %27 : vector<72x512xf32>
    %29 = vector.broadcast %3 : vector<72x1xf32> to vector<72x512xf32>
    %30 = arith.addf %28, %29 : vector<72x512xf32>
    %c0_18 = arith.constant 0 : index
    %c0_19 = arith.constant 0 : index
    %31 = vector.load %arg1[%c0_18, %c0_19] : memref<8x72xf32, #tpu.memory_space<vmem>>, vector<8x72xf32>
    %cst_20 = arith.constant dense<0.000000e+00> : vector<8x512xf32>
    %32 = tpu.matmul %31, %30, %cst_20 {dimension_numbers = #tpu.dot_dimension_numbers<[1], [0], [0], [1], [0, 0, 1, 1], [], []>} : vector<8x72xf32>, vector<72x512xf32>, vector<8x512xf32> -> vector<8x512xf32>
    %33 = vector.broadcast %4 : vector<8x1xf32> to vector<8x512xf32>
    %34 = arith.addf %32, %33 : vector<8x512xf32>
    %c0_21 = arith.constant 0 : index
    %c0_22 = arith.constant 0 : index
    %35 = vector.load %arg6[%c0_21, %c0_22] : memref<8x512xf32, #tpu.memory_space<vmem>>, vector<8x512xf32>
    tpu.vector_store %arg6[%c0_21, %c0_22], %34 {strides = array<i32>} : memref<8x512xf32, #tpu.memory_space<vmem>>, vector<8x512xf32>,
    return
  }
}

module attributes {stable_mosaic.version = 11 : i64} {
  func.func @_diff_front_kernel(%arg0: memref<36x512xf32, #tpu.memory_space<vmem>>, %arg1: memref<72x36xf32, #tpu.memory_space<vmem>>, %arg2: memref<8x72xf32, #tpu.memory_space<vmem>>, %arg3: memref<9x72xf32, #tpu.memory_space<vmem>>, %arg4: memref<72x9xf32, #tpu.memory_space<vmem>>, %arg5: memref<224x1xf32, #tpu.memory_space<vmem>>, %arg6: memref<8x512xf32, #tpu.memory_space<vmem>>) attributes {dimension_semantics = [], scalar_prefetch = 0 : i64, scratch_operands = 0 : i64, tpu.core_type = #tpu.core_type<tc>} {
    %c0 = arith.constant 0 : index
    %c0_0 = arith.constant 0 : index
    %0 = vector.load %arg5[%c0, %c0_0] : memref<224x1xf32, #tpu.memory_space<vmem>>, vector<224x1xf32>
    %1 = vector.extract_strided_slice %0 {offsets = [0, 0], sizes = [72, 1], strides = [1, 1]} : vector<224x1xf32> to vector<72x1xf32>
    %2 = vector.extract_strided_slice %0 {offsets = [72, 0], sizes = [72, 1], strides = [1, 1]} : vector<224x1xf32> to vector<72x1xf32>
    %3 = vector.extract_strided_slice %0 {offsets = [144, 0], sizes = [72, 1], strides = [1, 1]} : vector<224x1xf32> to vector<72x1xf32>
    %4 = vector.extract_strided_slice %0 {offsets = [216, 0], sizes = [8, 1], strides = [1, 1]} : vector<224x1xf32> to vector<8x1xf32>
    %c0_1 = arith.constant 0 : index
    %c0_2 = arith.constant 0 : index
    %5 = vector.load %arg1[%c0_1, %c0_2] : memref<72x36xf32, #tpu.memory_space<vmem>>, vector<72x36xf32>
    %c0_3 = arith.constant 0 : index
    %c0_4 = arith.constant 0 : index
    %6 = vector.load %arg0[%c0_3, %c0_4] : memref<36x512xf32, #tpu.memory_space<vmem>>, vector<36x512xf32>
    %cst = arith.constant dense<0.000000e+00> : vector<72x512xf32>
    %7 = tpu.matmul %5, %6, %cst {dimension_numbers = #tpu.dot_dimension_numbers<[1], [0], [0], [1], [0, 0, 1, 1], [], []>} : vector<72x36xf32>, vector<36x512xf32>, vector<72x512xf32> -> vector<72x512xf32>
    %8 = vector.broadcast %1 : vector<72x1xf32> to vector<72x512xf32>
    %9 = arith.addf %7, %8 : vector<72x512xf32>
    %c0_5 = arith.constant 0 : index
    %c0_6 = arith.constant 0 : index
    %10 = vector.load %arg3[%c0_5, %c0_6] : memref<9x72xf32, #tpu.memory_space<vmem>>, vector<9x72xf32>
    %c0_7 = arith.constant 0 : index
    %c0_8 = arith.constant 0 : index
    %11 = vector.load %arg4[%c0_7, %c0_8] : memref<72x9xf32, #tpu.memory_space<vmem>>, vector<72x9xf32>
    %cst_9 = arith.constant dense<0.000000e+00> : vector<9x512xf32>
    %12 = tpu.matmul %10, %9, %cst_9 {dimension_numbers = #tpu.dot_dimension_numbers<[1], [0], [0], [1], [0, 0, 1, 1], [], []>} : vector<9x72xf32>, vector<72x512xf32>, vector<9x512xf32> -> vector<9x512xf32>
    %cst_10 = arith.constant 1.250000e-01 : f32
    %13 = vector.broadcast %cst_10 : f32 to vector<9x512xf32>
    %14 = arith.mulf %12, %13 : vector<9x512xf32>
    %cst_11 = arith.constant dense<0.000000e+00> : vector<72x512xf32>
    %15 = tpu.matmul %11, %14, %cst_11 {dimension_numbers = #tpu.dot_dimension_numbers<[1], [0], [0], [1], [0, 0, 1, 1], [], []>} : vector<72x9xf32>, vector<9x512xf32>, vector<72x512xf32> -> vector<72x512xf32>
    %16 = arith.subf %9, %15 : vector<72x512xf32>
    %17 = arith.mulf %16, %16 : vector<72x512xf32>
    %cst_12 = arith.constant dense<0.000000e+00> : vector<9x512xf32>
    %18 = tpu.matmul %10, %17, %cst_12 {dimension_numbers = #tpu.dot_dimension_numbers<[1], [0], [0], [1], [0, 0, 1, 1], [], []>} : vector<9x72xf32>, vector<72x512xf32>, vector<9x512xf32> -> vector<9x512xf32>
    %cst_13 = arith.constant 1.250000e-01 : f32
    %19 = vector.broadcast %cst_13 : f32 to vector<9x512xf32>
    %20 = arith.mulf %18, %19 : vector<9x512xf32>
    %cst_14 = arith.constant 9.99999974E-6 : f32
    %21 = vector.broadcast %cst_14 : f32 to vector<9x512xf32>
    %22 = arith.addf %20, %21 : vector<9x512xf32>
    %23 = math.rsqrt %22 : vector<9x512xf32>
    %cst_15 = arith.constant dense<0.000000e+00> : vector<72x512xf32>
    %24 = tpu.matmul %11, %23, %cst_15 {dimension_numbers = #tpu.dot_dimension_numbers<[1], [0], [0], [1], [0, 0, 1, 1], [], []>} : vector<72x9xf32>, vector<9x512xf32>, vector<72x512xf32> -> vector<72x512xf32>
    %25 = arith.mulf %16, %24 : vector<72x512xf32>
    %26 = vector.broadcast %2 : vector<72x1xf32> to vector<72x512xf32>
    %27 = arith.mulf %25, %26 : vector<72x512xf32>
    %28 = vector.broadcast %3 : vector<72x1xf32> to vector<72x512xf32>
    %29 = arith.addf %27, %28 : vector<72x512xf32>
    %c0_16 = arith.constant 0 : index
    %c0_17 = arith.constant 0 : index
    %30 = vector.load %arg2[%c0_16, %c0_17] : memref<8x72xf32, #tpu.memory_space<vmem>>, vector<8x72xf32>
    %cst_18 = arith.constant dense<0.000000e+00> : vector<8x512xf32>
    %31 = tpu.matmul %30, %29, %cst_18 {dimension_numbers = #tpu.dot_dimension_numbers<[1], [0], [0], [1], [0, 0, 1, 1], [], []>} : vector<8x72xf32>, vector<72x512xf32>, vector<8x512xf32> -> vector<8x512xf32>
    %32 = vector.broadcast %4 : vector<8x1xf32> to vector<8x512xf32>
    %33 = arith.addf %31, %32 : vector<8x512xf32>
    %c0_19 = arith.constant 0 : index
    %c0_20 = arith.constant 0 : index
    %34 = vector.load %arg6[%c0_19, %c0_20] : memref<8x512xf32, #tpu.memory_space<vmem>>, vector<8x512xf32>
    tpu.vector_store %arg6[%c0_19, %c0_20], %33 {strides = array<i32>} : memref<8x512xf32, #tpu.memory_space<vmem>>, vector<8x512xf32>,
    return
  }
}

module attributes {stable_mosaic.version = 11 : i64} {
  func.func @_sepconv_res_kernel(%arg0: memref<72x512xf32, #tpu.memory_space<vmem>>, %arg1: memref<8x512xf32, #tpu.memory_space<vmem>>, %arg2: memref<8x72xf32, #tpu.memory_space<vmem>>, %arg3: memref<8x1xf32, #tpu.memory_space<vmem>>, %arg4: memref<8x512xf32, #tpu.memory_space<vmem>>) attributes {dimension_semantics = [], scalar_prefetch = 0 : i64, scratch_operands = 0 : i64, tpu.core_type = #tpu.core_type<tc>} {
    %c0 = arith.constant 0 : index
    %c0_0 = arith.constant 0 : index
    %0 = vector.load %arg1[%c0, %c0_0] : memref<8x512xf32, #tpu.memory_space<vmem>>, vector<8x512xf32>
    %c0_1 = arith.constant 0 : index
    %c0_2 = arith.constant 0 : index
    %1 = vector.load %arg2[%c0_1, %c0_2] : memref<8x72xf32, #tpu.memory_space<vmem>>, vector<8x72xf32>
    %c0_3 = arith.constant 0 : index
    %c0_4 = arith.constant 0 : index
    %2 = vector.load %arg0[%c0_3, %c0_4] : memref<72x512xf32, #tpu.memory_space<vmem>>, vector<72x512xf32>
    %cst = arith.constant dense<0.000000e+00> : vector<8x512xf32>
    %3 = tpu.matmul %1, %2, %cst {dimension_numbers = #tpu.dot_dimension_numbers<[1], [0], [0], [1], [0, 0, 1, 1], [], []>} : vector<8x72xf32>, vector<72x512xf32>, vector<8x512xf32> -> vector<8x512xf32>
    %c0_5 = arith.constant 0 : index
    %c0_6 = arith.constant 0 : index
    %4 = vector.load %arg3[%c0_5, %c0_6] : memref<8x1xf32, #tpu.memory_space<vmem>>, vector<8x1xf32>
    %5 = vector.broadcast %4 : vector<8x1xf32> to vector<8x512xf32>
    %6 = arith.addf %3, %5 : vector<8x512xf32>
    %cst_7 = arith.constant 0.00493683573 : f32
    %7 = vector.broadcast %cst_7 : f32 to vector<8x512xf32>
    %8 = arith.mulf %7, %6 : vector<8x512xf32>
    %9 = arith.addf %0, %8 : vector<8x512xf32>
    %c0_8 = arith.constant 0 : index
    %c0_9 = arith.constant 0 : index
    %10 = vector.load %arg4[%c0_8, %c0_9] : memref<8x512xf32, #tpu.memory_space<vmem>>, vector<8x512xf32>
    tpu.vector_store %arg4[%c0_8, %c0_9], %9 {strides = array<i32>} : memref<8x512xf32, #tpu.memory_space<vmem>>, vector<8x512xf32>,
    return
  }
}

module attributes {stable_mosaic.version = 11 : i64} {
  func.func @_sepconv_res_kernel(%arg0: memref<72x512xf32, #tpu.memory_space<vmem>>, %arg1: memref<4x512xf32, #tpu.memory_space<vmem>>, %arg2: memref<4x72xf32, #tpu.memory_space<vmem>>, %arg3: memref<4x1xf32, #tpu.memory_space<vmem>>, %arg4: memref<4x512xf32, #tpu.memory_space<vmem>>) attributes {dimension_semantics = [], scalar_prefetch = 0 : i64, scratch_operands = 0 : i64, tpu.core_type = #tpu.core_type<tc>} {
    %c0 = arith.constant 0 : index
    %c0_0 = arith.constant 0 : index
    %0 = vector.load %arg1[%c0, %c0_0] : memref<4x512xf32, #tpu.memory_space<vmem>>, vector<4x512xf32>
    %c0_1 = arith.constant 0 : index
    %c0_2 = arith.constant 0 : index
    %1 = vector.load %arg2[%c0_1, %c0_2] : memref<4x72xf32, #tpu.memory_space<vmem>>, vector<4x72xf32>
    %c0_3 = arith.constant 0 : index
    %c0_4 = arith.constant 0 : index
    %2 = vector.load %arg0[%c0_3, %c0_4] : memref<72x512xf32, #tpu.memory_space<vmem>>, vector<72x512xf32>
    %cst = arith.constant dense<0.000000e+00> : vector<4x512xf32>
    %3 = tpu.matmul %1, %2, %cst {dimension_numbers = #tpu.dot_dimension_numbers<[1], [0], [0], [1], [0, 0, 1, 1], [], []>} : vector<4x72xf32>, vector<72x512xf32>, vector<4x512xf32> -> vector<4x512xf32>
    %c0_5 = arith.constant 0 : index
    %c0_6 = arith.constant 0 : index
    %4 = vector.load %arg3[%c0_5, %c0_6] : memref<4x1xf32, #tpu.memory_space<vmem>>, vector<4x1xf32>
    %5 = vector.broadcast %4 : vector<4x1xf32> to vector<4x512xf32>
    %6 = arith.addf %3, %5 : vector<4x512xf32>
    %cst_7 = arith.constant 1.000000e+00 : f32
    %7 = vector.broadcast %cst_7 : f32 to vector<4x512xf32>
    %8 = arith.mulf %7, %6 : vector<4x512xf32>
    %9 = arith.addf %0, %8 : vector<4x512xf32>
    %c0_8 = arith.constant 0 : index
    %c0_9 = arith.constant 0 : index
    %10 = vector.load %arg4[%c0_8, %c0_9] : memref<4x512xf32, #tpu.memory_space<vmem>>, vector<4x512xf32>
    tpu.vector_store %arg4[%c0_8, %c0_9], %9 {strides = array<i32>} : memref<4x512xf32, #tpu.memory_space<vmem>>, vector<4x512xf32>,
    return
  }
}

</mosaic_0001>

<llo_original>
// kernel: paradis_forward.9
$region0: #{paradis_forward.9}
  #allocation0 [shape = 'u32[]', space=smem, size = 0x4, offset = 0x4, fixed_abs, tag = 'smem constant byte address 0x4 - core index']
  #allocation1 [shape = 'u32[72,128]{1,0:T(1,128)}', space=vmem, size = 0x9000, scoped, tag = 'internal scratch']
  %s0 = inlined_call_operand.vmem [shape: f32[72,512], index: 0, kind: input, shape index: {}]
  %s1 = inlined_call_operand.vmem [shape: f32[8,72], index: 1, kind: input, shape index: {}]
  %s2 = inlined_call_operand.vmem [shape: f32[8,1], index: 2, kind: input, shape index: {}]
  %s3 = inlined_call_operand.vmem [shape: f32[8,512], index: 3, kind: output, shape index: {}]
  %s4 = sld [smem:[#allocation0]]
  $region22: #{paradis_forward.9} parent=0
    _
  %s6 = ssub.s32 1, %s4
  %s7 = scalar_select 0, %s6, %s4
  // Predicated region
  $region2: #{paradis_forward.9} parent=0 // pred_check
    _
  $region3: #{paradis_forward.9} parent=0 // pred_check_branch
    %9 = sbr.rel (0) target = $region5
  $region4: #{paradis_forward.9} parent=0 // pred_region
    _
  $region5: #{paradis_forward.9} parent=0 // pred_fallthru
    _
  // Predicated region
  $region6: #{paradis_forward.9} parent=0 // pred_check
    _
  $region7: #{paradis_forward.9} parent=0 // pred_check_branch
    %11 = sbr.rel (0) target = $region9
  $region8: #{paradis_forward.9} parent=0 // pred_region
    _
  $region9: #{paradis_forward.9} parent=0 // pred_fallthru
    _
  // Predicated region
  $region10: #{paradis_forward.9} parent=0 // pred_check
    _
  $region11: #{paradis_forward.9} parent=0 // pred_check_branch
    %13 = sbr.rel (0) target = $region13
  $region12: #{paradis_forward.9} parent=0 // pred_region
    _
  $region13: #{paradis_forward.9} parent=0 // pred_fallthru
    _
  %v14 = vld [vmem:[%s1] sm:$0xff]
  %v15 = vld [vmem:[%s0] sm:$0xff]
  %v16 = vld [vmem:[%s0 + $0x8] sm:$0xff]
  %v17 = vld [vmem:[%s0 + $0x10] sm:$0xff]
  %v18 = vld [vmem:[%s0 + $0x18] sm:$0xff]
  %v19 = vld [vmem:[%s0 + $0x20] sm:$0xff]
  %v20 = vld [vmem:[%s0 + $0x28] sm:$0xff]
  %v21 = vld [vmem:[%s0 + $0x30] sm:$0xff]
  %v22 = vld [vmem:[%s0 + $0x38] sm:$0xff]
  %v23 = vld [vmem:[%s0 + $0x40] sm:$0xff]
  %v24 = vld [vmem:[%s0 + $0x48] sm:$0xff]
  %v25 = vld [vmem:[%s0 + $0x50] sm:$0xff]
  %v26 = vld [vmem:[%s0 + $0x58] sm:$0xff]
  %v27 = vld [vmem:[%s0 + $0x60] sm:$0xff]
  %v28 = vld [vmem:[%s0 + $0x68] sm:$0xff]
  %v29 = vld [vmem:[%s0 + $0x70] sm:$0xff]
  %v30 = vld [vmem:[%s0 + $0x78] sm:$0xff]
  %v31 = vld [vmem:[%s0 + $0x80] sm:$0xff]
  %v32 = vld [vmem:[%s0 + $0x88] sm:$0xff]
  %v33 = vld [vmem:[%s0 + $0x90] sm:$0xff]
  %v34 = vld [vmem:[%s0 + $0x98] sm:$0xff]
  %v35 = vld [vmem:[%s0 + $0xa0] sm:$0xff]
  %v36 = vld [vmem:[%s0 + $0xa8] sm:$0xff]
  %v37 = vld [vmem:[%s0 + $0xb0] sm:$0xff]
  %v38 = vld [vmem:[%s0 + $0xb8] sm:$0xff]
  %v39 = vld [vmem:[%s0 + $0xc0] sm:$0xff]
  %v40 = vld [vmem:[%s0 + $0xc8] sm:$0xff]
  %v41 = vld [vmem:[%s0 + $0xd0] sm:$0xff]
  %v42 = vld [vmem:[%s0 + $0xd8] sm:$0xff]
  %v43 = vld [vmem:[%s0 + $0xe0] sm:$0xff]
  %v44 = vld [vmem:[%s0 + $0xe8] sm:$0xff]
  %v45 = vld [vmem:[%s0 + $0xf0] sm:$0xff]
  %v46 = vld [vmem:[%s0 + $0xf8] sm:$0xff]
  %v47 = vld [vmem:[%s0 + $0x100] sm:$0xff]
  %v48 = vld [vmem:[%s0 + $0x108] sm:$0xff]
  %v49 = vld [vmem:[%s0 + $0x110] sm:$0xff]
  %v50 = vld [vmem:[%s0 + $0x118] sm:$0xff]
  %v51 = vld [vmem:[%s2] sm:$0xff]
  %53 = vset.pattern.permute.xlu0 0
  %54 = vperm.xlu0 %53, %v51
  %v55 = vpop.permute.xlu0 %54
  %vm57 = vcmask 588800
  %v59 = vsel %vm57, %v14, 0
  %61 = vmatpush.msra.mxu0 0.0
  %62 = vmatpush.msra.mxu0 0.0
  %63 = vmatpush.msra.mxu0 0.0
  %64 = vmatpush.msra.mxu0 0.0
  %65 = vmatpush.msra.mxu0 0.0
  %66 = vmatpush.msra.mxu0 0.0
  %67 = vmatpush.msra.mxu0 0.0
  %68 = vmatpush.msra.mxu0 %v47
  %69 = vmatpush.msra.mxu0 %v43
  %70 = vmatpush.msra.mxu0 %v39
  %71 = vmatpush.msra.mxu0 %v35
  %72 = vmatpush.msra.mxu0 %v31
  %73 = vmatpush.msra.mxu0 %v27
  %74 = vmatpush.msra.mxu0 %v23
  %75 = vmatpush.msra.mxu0 %v19
  %76 = vmatpush.msra.mxu0 %v15
  %77 = vmatmul.f32.gmra.mxu0 %v59
  %v78 = vpop.f32.mrf.mxu0
  %v79 = vadd.f32 %v55, %v78
  %80 = vdwg.mxu0
  %81 = vmatpush.msra.mxu0 0.0
  %82 = vmatpush.msra.mxu0 0.0
  %83 = vmatpush.msra.mxu0 0.0
  %84 = vmatpush.msra.mxu0 0.0
  %85 = vmatpush.msra.mxu0 0.0
  %86 = vmatpush.msra.mxu0 0.0
  %87 = vmatpush.msra.mxu0 0.0
  %88 = vmatpush.msra.mxu0 %v48
  %89 = vmatpush.msra.mxu0 %v44
  %90 = vmatpush.msra.mxu0 %v40
  %91 = vmatpush.msra.mxu0 %v36
  %92 = vmatpush.msra.mxu0 %v32
  %93 = vmatpush.msra.mxu0 %v28
  %94 = vmatpush.msra.mxu0 %v24
  %95 = vmatpush.msra.mxu0 %v20
  %96 = vmatpush.msra.mxu0 %v16
  %97 = vmatmul.f32.gmra.mxu0 %v59
  %v98 = vpop.f32.mrf.mxu0
  %v99 = vadd.f32 %v55, %v98
  %100 = vdwg.mxu0
  %101 = vmatpush.msra.mxu0 0.0
  %102 = vmatpush.msra.mxu0 0.0
  %103 = vmatpush.msra.mxu0 0.0
  %104 = vmatpush.msra.mxu0 0.0
  %105 = vmatpush.msra.mxu0 0.0
  %106 = vmatpush.msra.mxu0 0.0
  %107 = vmatpush.msra.mxu0 0.0
  %108 = vmatpush.msra.mxu0 %v49
  %109 = vmatpush.msra.mxu0 %v45
  %110 = vmatpush.msra.mxu0 %v41
  %111 = vmatpush.msra.mxu0 %v37
  %112 = vmatpush.msra.mxu0 %v33
  %113 = vmatpush.msra.mxu0 %v29
  %114 = vmatpush.msra.mxu0 %v25
  %115 = vmatpush.msra.mxu0 %v21
  %116 = vmatpush.msra.mxu0 %v17
  %117 = vmatmul.f32.gmra.mxu0 %v59
  %v118 = vpop.f32.mrf.mxu0
  %v119 = vadd.f32 %v55, %v118
  %120 = vdwg.mxu0
  %121 = vmatpush.msra.mxu0 0.0
  %122 = vmatpush.msra.mxu0 0.0
  %123 = vmatpush.msra.mxu0 0.0
  %124 = vmatpush.msra.mxu0 0.0
  %125 = vmatpush.msra.mxu0 0.0
  %126 = vmatpush.msra.mxu0 0.0
  %127 = vmatpush.msra.mxu0 0.0
  %128 = vmatpush.msra.mxu0 %v50
  %129 = vmatpush.msra.mxu0 %v46
  %130 = vmatpush.msra.mxu0 %v42
  %131 = vmatpush.msra.mxu0 %v38
  %132 = vmatpush.msra.mxu0 %v34
  %133 = vmatpush.msra.mxu0 %v30
  %134 = vmatpush.msra.mxu0 %v26
  %135 = vmatpush.msra.mxu0 %v22
  %136 = vmatpush.msra.mxu0 %v18
  %137 = vmatmul.f32.gmra.mxu0 %v59
  %v138 = vpop.f32.mrf.mxu0
  %v139 = vadd.f32 %v55, %v138
  %140 = vdwg.mxu0
  %141 = vst [vmem:[%s3] sm:$0xff] %v79
  %142 = vst [vmem:[%s3 + $0x8] sm:$0xff] %v99
  %143 = vst [vmem:[%s3 + $0x10] sm:$0xff] %v119
  %144 = vst [vmem:[%s3 + $0x18] sm:$0xff] %v139
  // Predicated region
  $region14: #{paradis_forward.9} parent=0 // pred_check
    _
  $region15: #{paradis_forward.9} parent=0 // pred_check_branch
    %146 = sbr.rel (0) target = $region17
  $region16: #{paradis_forward.9} parent=0 // pred_region
    _
  $region17: #{paradis_forward.9} parent=0 // pred_fallthru
    _
  // Predicated region
  $region18: #{paradis_forward.9} parent=0 // pred_check
    _
  $region19: #{paradis_forward.9} parent=0 // pred_check_branch
    %148 = sbr.rel (0) target = $region21
  $region20: #{paradis_forward.9} parent=0 // pred_region
    _
  $region21: #{paradis_forward.9} parent=0 // pred_fallthru
    _

// kernel: paradis_forward.11
$region0: #{paradis_forward.11}
  #allocation0 [shape = 'u32[]', space=smem, size = 0x4, offset = 0x4, fixed_abs, tag = 'smem constant byte address 0x4 - core index']
  #allocation1 [shape = 'u32[72,128]{1,0:T(1,128)}', space=vmem, size = 0x9000, scoped, tag = 'internal scratch']
  %s0 = inlined_call_operand.vmem [shape: f32[72,512], index: 0, kind: input, shape index: {}]
  %s1 = inlined_call_operand.vmem [shape: f32[8,72], index: 1, kind: input, shape index: {}]
  %s2 = inlined_call_operand.vmem [shape: f32[4,72], index: 2, kind: input, shape index: {}]
  %s3 = inlined_call_operand.vmem [shape: f32[9,72], index: 3, kind: input, shape index: {}]
  %s4 = inlined_call_operand.vmem [shape: f32[72,9], index: 4, kind: input, shape index: {}]
  %s5 = inlined_call_operand.vmem [shape: f32[156,1], index: 5, kind: input, shape index: {}]
  %s6 = inlined_call_operand.vmem [shape: f32[8,512], index: 6, kind: output, shape index: {0}]
  %s7 = inlined_call_operand.vmem [shape: f32[4,512], index: 7, kind: output, shape index: {1}]
  %8 = xla_tuple %s6, %s7
  %s9 = sld [smem:[#allocation0]]
  $region42: #{paradis_forward.11} parent=0
    _
  %s11 = ssub.s32 1, %s9
  %s12 = scalar_select 0, %s11, %s9
  // Predicated region
  $region2: #{paradis_forward.11} parent=0 // pred_check
    _
  $region3: #{paradis_forward.11} parent=0 // pred_check_branch
    %14 = sbr.rel (0) target = $region5
  $region4: #{paradis_forward.11} parent=0 // pred_region
    _
  $region5: #{paradis_forward.11} parent=0 // pred_fallthru
    _
  // Predicated region
  $region6: #{paradis_forward.11} parent=0 // pred_check
    _
  $region7: #{paradis_forward.11} parent=0 // pred_check_branch
    %16 = sbr.rel (0) target = $region9
  $region8: #{paradis_forward.11} parent=0 // pred_region
    _
  $region9: #{paradis_forward.11} parent=0 // pred_fallthru
    _
  // Predicated region
  $region10: #{paradis_forward.11} parent=0 // pred_check
    _
  $region11: #{paradis_forward.11} parent=0 // pred_check_branch
    %18 = sbr.rel (0) target = $region13
  $region12: #{paradis_forward.11} parent=0 // pred_region
    _
  $region13: #{paradis_forward.11} parent=0 // pred_fallthru
    _
  // Predicated region
  $region14: #{paradis_forward.11} parent=0 // pred_check
    _
  $region15: #{paradis_forward.11} parent=0 // pred_check_branch
    %20 = sbr.rel (0) target = $region17
  $region16: #{paradis_forward.11} parent=0 // pred_region
    _
  $region17: #{paradis_forward.11} parent=0 // pred_fallthru
    _
  // Predicated region
  $region18: #{paradis_forward.11} parent=0 // pred_check
    _
  $region19: #{paradis_forward.11} parent=0 // pred_check_branch
    %22 = sbr.rel (0) target = $region21
  $region20: #{paradis_forward.11} parent=0 // pred_region
    _
  $region21: #{paradis_forward.11} parent=0 // pred_fallthru
    _
  // Predicated region
  $region22: #{paradis_forward.11} parent=0 // pred_check
    _
  $region23: #{paradis_forward.11} parent=0 // pred_check_branch
    %24 = sbr.rel (0) target = $region25
  $region24: #{paradis_forward.11} parent=0 // pred_region
    _
  $region25: #{paradis_forward.11} parent=0 // pred_fallthru
    _
  %v25 = vld [vmem:[%s0] sm:$0xff]
  %v26 = vld [vmem:[%s0 + $0x8] sm:$0xff]
  %v27 = vld [vmem:[%s0 + $0x10] sm:$0xff]
  %v28 = vld [vmem:[%s0 + $0x18] sm:$0xff]
  %v29 = vld [vmem:[%s0 + $0x20] sm:$0xff]
  %v30 = vld [vmem:[%s0 + $0x28] sm:$0xff]
  %v31 = vld [vmem:[%s0 + $0x30] sm:$0xff]
  %v32 = vld [vmem:[%s0 + $0x38] sm:$0xff]
  %v33 = vld [vmem:[%s0 + $0x40] sm:$0xff]
  %v34 = vld [vmem:[%s0 + $0x48] sm:$0xff]
  %v35 = vld [vmem:[%s0 + $0x50] sm:$0xff]
  %v36 = vld [vmem:[%s0 + $0x58] sm:$0xff]
  %v37 = vld [vmem:[%s0 + $0x60] sm:$0xff]
  %v38 = vld [vmem:[%s0 + $0x68] sm:$0xff]
  %v39 = vld [vmem:[%s0 + $0x70] sm:$0xff]
  %v40 = vld [vmem:[%s0 + $0x78] sm:$0xff]
  %v41 = vld [vmem:[%s0 + $0x80] sm:$0xff]
  %v42 = vld [vmem:[%s0 + $0x88] sm:$0xff]
  %v43 = vld [vmem:[%s0 + $0x90] sm:$0xff]
  %v44 = vld [vmem:[%s0 + $0x98] sm:$0xff]
  %v45 = vld [vmem:[%s0 + $0xa0] sm:$0xff]
  %v46 = vld [vmem:[%s0 + $0xa8] sm:$0xff]
  %v47 = vld [vmem:[%s0 + $0xb0] sm:$0xff]
  %v48 = vld [vmem:[%s0 + $0xb8] sm:$0xff]
  %v49 = vld [vmem:[%s0 + $0xc0] sm:$0xff]
  %v50 = vld [vmem:[%s0 + $0xc8] sm:$0xff]
  %v51 = vld [vmem:[%s0 + $0xd0] sm:$0xff]
  %v52 = vld [vmem:[%s0 + $0xd8] sm:$0xff]
  %v53 = vld [vmem:[%s0 + $0xe0] sm:$0xff]
  %v54 = vld [vmem:[%s0 + $0xe8] sm:$0xff]
  %v55 = vld [vmem:[%s0 + $0xf0] sm:$0xff]
  %v56 = vld [vmem:[%s0 + $0xf8] sm:$0xff]
  %v57 = vld [vmem:[%s0 + $0x100] sm:$0xff]
  %v58 = vld [vmem:[%s0 + $0x108] sm:$0xff]
  %v59 = vld [vmem:[%s0 + $0x110] sm:$0xff]
  %v60 = vld [vmem:[%s0 + $0x118] sm:$0xff]
  %v61 = vld [vmem:[%s5] sm:$0xff]
  %v62 = vld [vmem:[%s5 + $0x8] sm:$0xff]
  %v63 = vld [vmem:[%s5 + $0x10] sm:$0xff]
  %v64 = vld [vmem:[%s5 + $0x18] sm:$0xff]
  %v65 = vld [vmem:[%s5 + $0x20] sm:$0xff]
  %v66 = vld [vmem:[%s5 + $0x28] sm:$0xff]
  %v67 = vld [vmem:[%s5 + $0x30] sm:$0xff]
  %v68 = vld [vmem:[%s5 + $0x38] sm:$0xff]
  %v69 = vld [vmem:[%s5 + $0x40] sm:$0xff]
  %v70 = vld [vmem:[%s5 + $0x48] sm:$0xff]
  %v71 = vld [vmem:[%s5 + $0x50] sm:$0xff]
  %v72 = vld [vmem:[%s5 + $0x58] sm:$0xff]
  %v73 = vld [vmem:[%s5 + $0x60] sm:$0xff]
  %v74 = vld [vmem:[%s5 + $0x68] sm:$0xff]
  %v75 = vld [vmem:[%s5 + $0x70] sm:$0xff]
  %v76 = vld [vmem:[%s5 + $0x78] sm:$0xff]
  %v77 = vld [vmem:[%s5 + $0x80] sm:$0xff]
  %v78 = vld [vmem:[%s5 + $0x88] sm:$0xff]
  %v79 = vld [vmem:[%s5 + $0x90] sm:$0xff]
  %v80 = vld [vmem:[%s5 + $0x98] sm:$0xf]
  %v81 = vld [vmem:[%s2] sm:$0xf]
  %83 = vset.pattern.permute.xlu0 0
  %84 = vperm.xlu0 %83, %v80
  %v85 = vpop.permute.xlu0 %84
  %vm87 = vcmask 588800
  %v89 = vsel %vm87, %v81, 0
  %91 = vmatpush.msra.mxu0 0.0
  %92 = vmatpush.msra.mxu0 0.0
  %93 = vmatpush.msra.mxu0 0.0
  %94 = vmatpush.msra.mxu0 0.0
  %95 = vmatpush.msra.mxu0 0.0
  %96 = vmatpush.msra.mxu0 0.0
  %97 = vmatpush.msra.mxu0 0.0
  %98 = vmatpush.msra.mxu0 %v57
  %99 = vmatpush.msra.mxu0 %v53
  %100 = vmatpush.msra.mxu0 %v49
  %101 = vmatpush.msra.mxu0 %v45
  %102 = vmatpush.msra.mxu0 %v41
  %103 = vmatpush.msra.mxu0 %v37
  %104 = vmatpush.msra.mxu0 %v33
  %105 = vmatpush.msra.mxu0 %v29
  %106 = vmatpush.msra.mxu0 %v25
  %107 = vmatmul.f32.gmra.mxu0 %v89
  %v108 = vpop.f32.mrf.mxu0
  %v109 = vadd.f32 %v85, %v108
  %110 = vdwg.mxu0
  %111 = vmatpush.msra.mxu0 0.0
  %112 = vmatpush.msra.mxu0 0.0
  %113 = vmatpush.msra.mxu0 0.0
  %114 = vmatpush.msra.mxu0 0.0
  %115 = vmatpush.msra.mxu0 0.0
  %116 = vmatpush.msra.mxu0 0.0
  %117 = vmatpush.msra.mxu0 0.0
  %118 = vmatpush.msra.mxu0 %v58
  %119 = vmatpush.msra.mxu0 %v54
  %120 = vmatpush.msra.mxu0 %v50
  %121 = vmatpush.msra.mxu0 %v46
  %122 = vmatpush.msra.mxu0 %v42
  %123 = vmatpush.msra.mxu0 %v38
  %124 = vmatpush.msra.mxu0 %v34
  %125 = vmatpush.msra.mxu0 %v30
  %126 = vmatpush.msra.mxu0 %v26
  %127 = vmatmul.f32.gmra.mxu0 %v89
  %v128 = vpop.f32.mrf.mxu0
  %v129 = vadd.f32 %v85, %v128
  %130 = vdwg.mxu0
  %131 = vmatpush.msra.mxu0 0.0
  %132 = vmatpush.msra.mxu0 0.0
  %133 = vmatpush.msra.mxu0 0.0
  %134 = vmatpush.msra.mxu0 0.0
  %135 = vmatpush.msra.mxu0 0.0
  %136 = vmatpush.msra.mxu0 0.0
  %137 = vmatpush.msra.mxu0 0.0
  %138 = vmatpush.msra.mxu0 %v59
  %139 = vmatpush.msra.mxu0 %v55
  %140 = vmatpush.msra.mxu0 %v51
  %141 = vmatpush.msra.mxu0 %v47
  %142 = vmatpush.msra.mxu0 %v43
  %143 = vmatpush.msra.mxu0 %v39
  %144 = vmatpush.msra.mxu0 %v35
  %145 = vmatpush.msra.mxu0 %v31
  %146 = vmatpush.msra.mxu0 %v27
  %147 = vmatmul.f32.gmra.mxu0 %v89
  %v148 = vpop.f32.mrf.mxu0
  %v149 = vadd.f32 %v85, %v148
  %150 = vdwg.mxu0
  %151 = vmatpush.msra.mxu0 0.0
  %152 = vmatpush.msra.mxu0 0.0
  %153 = vmatpush.msra.mxu0 0.0
  %154 = vmatpush.msra.mxu0 0.0
  %155 = vmatpush.msra.mxu0 0.0
  %156 = vmatpush.msra.mxu0 0.0
  %157 = vmatpush.msra.mxu0 0.0
  %158 = vmatpush.msra.mxu0 %v60
  %159 = vmatpush.msra.mxu0 %v56
  %160 = vmatpush.msra.mxu0 %v52
  %161 = vmatpush.msra.mxu0 %v48
  %162 = vmatpush.msra.mxu0 %v44
  %163 = vmatpush.msra.mxu0 %v40
  %164 = vmatpush.msra.mxu0 %v36
  %165 = vmatpush.msra.mxu0 %v32
  %166 = vmatpush.msra.mxu0 %v28
  %167 = vmatmul.f32.gmra.mxu0 %v89
  %v168 = vpop.f32.mrf.mxu0
  %v169 = vadd.f32 %v85, %v168
  %170 = vdwg.mxu0
  %v175 = vrot.slane %v129, 4
  %v176 = vrot.slane %v169, 4
  %vm177 = vcmask 1043456
  %v178 = vsel %vm177, %v109, %v175
  %v179 = vsel %vm177, %v149, %v176
  %182 = vst [vmem:[%s7] sm:$0xff] %v178
  %183 = vst [vmem:[%s7 + $0x8] sm:$0xff] %v179
  %v184 = vld [vmem:[%s3] sm:$0xff]
  %v185 = vld [vmem:[%s3 + $0x8] sm:$0x1]
  %v186 = vld [vmem:[%s4] sm:$0xff]
  %v187 = vld [vmem:[%s4 + $0x8] sm:$0xff]
  %v188 = vld [vmem:[%s4 + $0x10] sm:$0xff]
  %v189 = vld [vmem:[%s4 + $0x18] sm:$0xff]
  %v190 = vld [vmem:[%s4 + $0x20] sm:$0xff]
  %v191 = vld [vmem:[%s4 + $0x28] sm:$0xff]
  %v192 = vld [vmem:[%s4 + $0x30] sm:$0xff]
  %v193 = vld [vmem:[%s4 + $0x38] sm:$0xff]
  %v194 = vld [vmem:[%s4 + $0x40] sm:$0xff]
  %v196 = vsel %vm87, %v184, 0
  %v199 = vsel %vm87, %v185, 0
  %201 = vmatpush.msra.mxu0 0.0
  %202 = vmatpush.msra.mxu0 0.0
  %203 = vmatpush.msra.mxu0 0.0
  %204 = vmatpush.msra.mxu0 0.0
  %205 = vmatpush.msra.mxu0 0.0
  %206 = vmatpush.msra.mxu0 0.0
  %207 = vmatpush.msra.mxu0 0.0
  %208 = vmatpush.msra.mxu0 %v57
  %209 = vmatpush.msra.mxu0 %v53
  %210 = vmatpush.msra.mxu0 %v49
  %211 = vmatpush.msra.mxu0 %v45
  %212 = vmatpush.msra.mxu0 %v41
  %213 = vmatpush.msra.mxu0 %v37
  %214 = vmatpush.msra.mxu0 %v33
  %215 = vmatpush.msra.mxu0 %v29
  %216 = vmatpush.msra.mxu0 %v25
  %217 = vmatmul.f32.gmra.mxu0 %v196
  %v218 = vpop.f32.mrf.mxu0
  %v219 = vadd.f32 0.0, %v218
  %220 = vmatmul.f32.gmra.mxu0 %v199
  %v221 = vpop.f32.mrf.mxu0
  %v222 = vadd.f32 0.0, %v221
  %223 = vdwg.mxu0
  %224 = vmatpush.msra.mxu0 0.0
  %225 = vmatpush.msra.mxu0 0.0
  %226 = vmatpush.msra.mxu0 0.0
  %227 = vmatpush.msra.mxu0 0.0
  %228 = vmatpush.msra.mxu0 0.0
  %229 = vmatpush.msra.mxu0 0.0
  %230 = vmatpush.msra.mxu0 0.0
  %231 = vmatpush.msra.mxu0 %v58
  %232 = vmatpush.msra.mxu0 %v54
  %233 = vmatpush.msra.mxu0 %v50
  %234 = vmatpush.msra.mxu0 %v46
  %235 = vmatpush.msra.mxu0 %v42
  %236 = vmatpush.msra.mxu0 %v38
  %237 = vmatpush.msra.mxu0 %v34
  %238 = vmatpush.msra.mxu0 %v30
  %239 = vmatpush.msra.mxu0 %v26
  %240 = vmatmul.f32.gmra.mxu0 %v196
  %v241 = vpop.f32.mrf.mxu0
  %v242 = vadd.f32 0.0, %v241
  %243 = vmatmul.f32.gmra.mxu0 %v199
  %v244 = vpop.f32.mrf.mxu0
  %v245 = vadd.f32 0.0, %v244
  %246 = vdwg.mxu0
  %247 = vmatpush.msra.mxu0 0.0
  %248 = vmatpush.msra.mxu0 0.0
  %249 = vmatpush.msra.mxu0 0.0
  %250 = vmatpush.msra.mxu0 0.0
  %251 = vmatpush.msra.mxu0 0.0
  %252 = vmatpush.msra.mxu0 0.0
  %253 = vmatpush.msra.mxu0 0.0
  %254 = vmatpush.msra.mxu0 %v59
  %255 = vmatpush.msra.mxu0 %v55
  %256 = vmatpush.msra.mxu0 %v51
  %257 = vmatpush.msra.mxu0 %v47
  %258 = vmatpush.msra.mxu0 %v43
  %259 = vmatpush.msra.mxu0 %v39
  %260 = vmatpush.msra.mxu0 %v35
  %261 = vmatpush.msra.mxu0 %v31
  %262 = vmatpush.msra.mxu0 %v27
  %263 = vmatmul.f32.gmra.mxu0 %v196
  %v264 = vpop.f32.mrf.mxu0
  %v265 = vadd.f32 0.0, %v264
  %266 = vmatmul.f32.gmra.mxu0 %v199
  %v267 = vpop.f32.mrf.mxu0
  %v268 = vadd.f32 0.0, %v267
  %269 = vdwg.mxu0
  %270 = vmatpush.msra.mxu0 0.0
  %271 = vmatpush.msra.mxu0 0.0
  %272 = vmatpush.msra.mxu0 0.0
  %273 = vmatpush.msra.mxu0 0.0
  %274 = vmatpush.msra.mxu0 0.0
  %275 = vmatpush.msra.mxu0 0.0
  %276 = vmatpush.msra.mxu0 0.0
  %277 = vmatpush.msra.mxu0 %v60
  %278 = vmatpush.msra.mxu0 %v56
  %279 = vmatpush.msra.mxu0 %v52
  %280 = vmatpush.msra.mxu0 %v48
  %281 = vmatpush.msra.mxu0 %v44
  %282 = vmatpush.msra.mxu0 %v40
  %283 = vmatpush.msra.mxu0 %v36
  %284 = vmatpush.msra.mxu0 %v32
  %285 = vmatpush.msra.mxu0 %v28
  %286 = vmatmul.f32.gmra.mxu0 %v196
  %v287 = vpop.f32.mrf.mxu0
  %v288 = vadd.f32 0.0, %v287
  %289 = vmatmul.f32.gmra.mxu0 %v199
  %v290 = vpop.f32.mrf.mxu0
  %v291 = vadd.f32 0.0, %v290
  %292 = vdwg.mxu0
  %v293 = vmul.f32 %v219, 0.125
  %v294 = vmul.f32 %v242, 0.125
  %v295 = vmul.f32 %v265, 0.125
  %v296 = vmul.f32 %v288, 0.125
  %v297 = vmul.f32 %v222, 0.125
  %v298 = vmul.f32 %v245, 0.125
  %v299 = vmul.f32 %v268, 0.125
  %v300 = vmul.f32 %v291, 0.125
  %vm301 = vcmask 72704
  %v303 = vsel %vm301, %v186, 0
  %v306 = vsel %vm301, %v187, 0
  %v309 = vsel %vm301, %v188, 0
  %v312 = vsel %vm301, %v189, 0
  %v315 = vsel %vm301, %v190, 0
  %v318 = vsel %vm301, %v191, 0
  %v321 = vsel %vm301, %v192, 0
  %v324 = vsel %vm301, %v193, 0
  %v327 = vsel %vm301, %v194, 0
  %vm329 = vcmask 1040384
  %v331 = vsel %vm329, %v297, 0
  %v334 = vsel %vm329, %v298, 0
  %v337 = vsel %vm329, %v299, 0
  %v340 = vsel %vm329, %v300, 0
  %342 = vmatpush.msra.mxu0 0.0
  %343 = vmatpush.msra.mxu0 0.0
  %344 = vmatpush.msra.mxu0 0.0
  %345 = vmatpush.msra.mxu0 0.0
  %346 = vmatpush.msra.mxu0 0.0
  %347 = vmatpush.msra.mxu0 0.0
  %348 = vmatpush.msra.mxu0 0.0
  %349 = vmatpush.msra.mxu0 0.0
  %350 = vmatpush.msra.mxu0 0.0
  %351 = vmatpush.msra.mxu0 0.0
  %352 = vmatpush.msra.mxu0 0.0
  %353 = vmatpush.msra.mxu0 0.0
  %354 = vmatpush.msra.mxu0 0.0
  %355 = vmatpush.msra.mxu0 0.0
  %356 = vmatpush.msra.mxu0 %v331
  %357 = vmatpush.msra.mxu0 %v293
  %358 = vmatmul.f32.gmra.mxu0 %v303
  %v359 = vpop.f32.mrf.mxu0
  %v360 = vadd.f32 0.0, %v359
  %361 = vmatmul.f32.gmra.mxu0 %v306
  %v362 = vpop.f32.mrf.mxu0
  %v363 = vadd.f32 0.0, %v362
  %364 = vmatmul.f32.gmra.mxu0 %v309
  %v365 = vpop.f32.mrf.mxu0
  %v366 = vadd.f32 0.0, %v365
  %367 = vmatmul.f32.gmra.mxu0 %v312
  %v368 = vpop.f32.mrf.mxu0
  %v369 = vadd.f32 0.0, %v368
  %370 = vmatmul.f32.gmra.mxu0 %v315
  %v371 = vpop.f32.mrf.mxu0
  %v372 = vadd.f32 0.0, %v371
  %373 = vmatmul.f32.gmra.mxu0 %v318
  %v374 = vpop.f32.mrf.mxu0
  %v375 = vadd.f32 0.0, %v374
  %376 = vmatmul.f32.gmra.mxu0 %v321
  %v377 = vpop.f32.mrf.mxu0
  %v378 = vadd.f32 0.0, %v377
  %379 = vmatmul.f32.gmra.mxu0 %v324
  %v380 = vpop.f32.mrf.mxu0
  %v381 = vadd.f32 0.0, %v380
  %382 = vmatmul.f32.gmra.mxu0 %v327
  %v383 = vpop.f32.mrf.mxu0
  %v384 = vadd.f32 0.0, %v383
  %385 = vdwg.mxu0
  %386 = vmatpush.msra.mxu0 0.0
  %387 = vmatpush.msra.mxu0 0.0
  %388 = vmatpush.msra.mxu0 0.0
  %389 = vmatpush.msra.mxu0 0.0
  %390 = vmatpush.msra.mxu0 0.0
  %391 = vmatpush.msra.mxu0 0.0
  %392 = vmatpush.msra.mxu0 0.0
  %393 = vmatpush.msra.mxu0 0.0
  %394 = vmatpush.msra.mxu0 0.0
  %395 = vmatpush.msra.mxu0 0.0
  %396 = vmatpush.msra.mxu0 0.0
  %397 = vmatpush.msra.mxu0 0.0
  %398 = vmatpush.msra.mxu0 0.0
  %399 = vmatpush.msra.mxu0 0.0
  %400 = vmatpush.msra.mxu0 %v334
  %401 = vmatpush.msra.mxu0 %v294
  %402 = vmatmul.f32.gmra.mxu0 %v303
  %v403 = vpop.f32.mrf.mxu0
  %v404 = vadd.f32 0.0, %v403
  %405 = vmatmul.f32.gmra.mxu0 %v306
  %v406 = vpop.f32.mrf.mxu0
  %v407 = vadd.f32 0.0, %v406
  %408 = vmatmul.f32.gmra.mxu0 %v309
  %v409 = vpop.f32.mrf.mxu0
  %v410 = vadd.f32 0.0, %v409
  %411 = vmatmul.f32.gmra.mxu0 %v312
  %v412 = vpop.f32.mrf.mxu0
  %v413 = vadd.f32 0.0, %v412
  %414 = vmatmul.f32.gmra.mxu0 %v315
  %v415 = vpop.f32.mrf.mxu0
  %v416 = vadd.f32 0.0, %v415
  %417 = vmatmul.f32.gmra.mxu0 %v318
  %v418 = vpop.f32.mrf.mxu0
  %v419 = vadd.f32 0.0, %v418
  %420 = vmatmul.f32.gmra.mxu0 %v321
  %v421 = vpop.f32.mrf.mxu0
  %v422 = vadd.f32 0.0, %v421
  %423 = vmatmul.f32.gmra.mxu0 %v324
  %v424 = vpop.f32.mrf.mxu0
  %v425 = vadd.f32 0.0, %v424
  %426 = vmatmul.f32.gmra.mxu0 %v327
  %v427 = vpop.f32.mrf.mxu0
  %v428 = vadd.f32 0.0, %v427
  %429 = vdwg.mxu0
  %430 = vmatpush.msra.mxu0 0.0
  %431 = vmatpush.msra.mxu0 0.0
  %432 = vmatpush.msra.mxu0 0.0
  %433 = vmatpush.msra.mxu0 0.0
  %434 = vmatpush.msra.mxu0 0.0
  %435 = vmatpush.msra.mxu0 0.0
  %436 = vmatpush.msra.mxu0 0.0
  %437 = vmatpush.msra.mxu0 0.0
  %438 = vmatpush.msra.mxu0 0.0
  %439 = vmatpush.msra.mxu0 0.0
  %440 = vmatpush.msra.mxu0 0.0
  %441 = vmatpush.msra.mxu0 0.0
  %442 = vmatpush.msra.mxu0 0.0
  %443 = vmatpush.msra.mxu0 0.0
  %444 = vmatpush.msra.mxu0 %v337
  %445 = vmatpush.msra.mxu0 %v295
  %446 = vmatmul.f32.gmra.mxu0 %v303
  %v447 = vpop.f32.mrf.mxu0
  %v448 = vadd.f32 0.0, %v447
  %449 = vmatmul.f32.gmra.mxu0 %v306
  %v450 = vpop.f32.mrf.mxu0
  %v451 = vadd.f32 0.0, %v450
  %452 = vmatmul.f32.gmra.mxu0 %v309
  %v453 = vpop.f32.mrf.mxu0
  %v454 = vadd.f32 0.0, %v453
  %455 = vmatmul.f32.gmra.mxu0 %v312
  %v456 = vpop.f32.mrf.mxu0
  %v457 = vadd.f32 0.0, %v456
  %458 = vmatmul.f32.gmra.mxu0 %v315
  %v459 = vpop.f32.mrf.mxu0
  %v460 = vadd.f32 0.0, %v459
  %461 = vmatmul.f32.gmra.mxu0 %v318
  %v462 = vpop.f32.mrf.mxu0
  %v463 = vadd.f32 0.0, %v462
  %464 = vmatmul.f32.gmra.mxu0 %v321
  %v465 = vpop.f32.mrf.mxu0
  %v466 = vadd.f32 0.0, %v465
  %467 = vmatmul.f32.gmra.mxu0 %v324
  %v468 = vpop.f32.mrf.mxu0
  %v469 = vadd.f32 0.0, %v468
  %470 = vmatmul.f32.gmra.mxu0 %v327
  %v471 = vpop.f32.mrf.mxu0
  %v472 = vadd.f32 0.0, %v471
  %473 = vdwg.mxu0
  %474 = vmatpush.msra.mxu0 0.0
  %475 = vmatpush.msra.mxu0 0.0
  %476 = vmatpush.msra.mxu0 0.0
  %477 = vmatpush.msra.mxu0 0.0
  %478 = vmatpush.msra.mxu0 0.0
  %479 = vmatpush.msra.mxu0 0.0
  %480 = vmatpush.msra.mxu0 0.0
  %481 = vmatpush.msra.mxu0 0.0
  %482 = vmatpush.msra.mxu0 0.0
  %483 = vmatpush.msra.mxu0 0.0
  %484 = vmatpush.msra.mxu0 0.0
  %485 = vmatpush.msra.mxu0 0.0
  %486 = vmatpush.msra.mxu0 0.0
  %487 = vmatpush.msra.mxu0 0.0
  %488 = vmatpush.msra.mxu0 %v340
  %489 = vmatpush.msra.mxu0 %v296
  %490 = vmatmul.f32.gmra.mxu0 %v303
  %v491 = vpop.f32.mrf.mxu0
  %v492 = vadd.f32 0.0, %v491
  %493 = vmatmul.f32.gmra.mxu0 %v306
  %v494 = vpop.f32.mrf.mxu0
  %v495 = vadd.f32 0.0, %v494
  %496 = vmatmul.f32.gmra.mxu0 %v309
  %v497 = vpop.f32.mrf.mxu0
  %v498 = vadd.f32 0.0, %v497
  %499 = vmatmul.f32.gmra.mxu0 %v312
  %v500 = vpop.f32.mrf.mxu0
  %v501 = vadd.f32 0.0, %v500
  %502 = vmatmul.f32.gmra.mxu0 %v315
  %v503 = vpop.f32.mrf.mxu0
  %v504 = vadd.f32 0.0, %v503
  %505 = vmatmul.f32.gmra.mxu0 %v318
  %v506 = vpop.f32.mrf.mxu0
  %v507 = vadd.f32 0.0, %v506
  %508 = vmatmul.f32.gmra.mxu0 %v321
  %v509 = vpop.f32.mrf.mxu0
  %v510 = vadd.f32 0.0, %v509
  %511 = vmatmul.f32.gmra.mxu0 %v324
  %v512 = vpop.f32.mrf.mxu0
  %v513 = vadd.f32 0.0, %v512
  %514 = vmatmul.f32.gmra.mxu0 %v327
  %v515 = vpop.f32.mrf.mxu0
  %v516 = vadd.f32 0.0, %v515
  %517 = vdwg.mxu0
  %v518 = vsub.f32 %v25, %v360
  %v519 = vsub.f32 %v26, %v404
  %v520 = vsub.f32 %v27, %v448
  %v521 = vsub.f32 %v28, %v492
  %v522 = vsub.f32 %v29, %v363
  %v523 = vsub.f32 %v30, %v407
  %v524 = vsub.f32 %v31, %v451
  %v525 = vsub.f32 %v32, %v495
  %v526 = vsub.f32 %v33, %v366
  %v527 = vsub.f32 %v34, %v410
  %v528 = vsub.f32 %v35, %v454
  %v529 = vsub.f32 %v36, %v498
  %v530 = vsub.f32 %v37, %v369
  %v531 = vsub.f32 %v38, %v413
  %v532 = vsub.f32 %v39, %v457
  %v533 = vsub.f32 %v40, %v501
  %v534 = vsub.f32 %v41, %v372
  %v535 = vsub.f32 %v42, %v416
  %v536 = vsub.f32 %v43, %v460
  %v537 = vsub.f32 %v44, %v504
  %v538 = vsub.f32 %v45, %v375
  %v539 = vsub.f32 %v46, %v419
  %v540 = vsub.f32 %v47, %v463
  %v541 = vsub.f32 %v48, %v507
  %v542 = vsub.f32 %v49, %v378
  %v543 = vsub.f32 %v50, %v422
  %v544 = vsub.f32 %v51, %v466
  %v545 = vsub.f32 %v52, %v510
  %v546 = vsub.f32 %v53, %v381
  %v547 = vsub.f32 %v54, %v425
  %v548 = vsub.f32 %v55, %v469
  %v549 = vsub.f32 %v56, %v513
  %v550 = vsub.f32 %v57, %v384
  %v551 = vsub.f32 %v58, %v428
  %v552 = vsub.f32 %v59, %v472
  %v553 = vsub.f32 %v60, %v516
  %v554 = vmul.f32 %v518, %v518
  %v555 = vmul.f32 %v519, %v519
  %v556 = vmul.f32 %v520, %v520
  %v557 = vmul.f32 %v521, %v521
  %v558 = vmul.f32 %v522, %v522
  %v559 = vmul.f32 %v523, %v523
  %v560 = vmul.f32 %v524, %v524
  %v561 = vmul.f32 %v525, %v525
  %v562 = vmul.f32 %v526, %v526
  %v563 = vmul.f32 %v527, %v527
  %v564 = vmul.f32 %v528, %v528
  %v565 = vmul.f32 %v529, %v529
  %v566 = vmul.f32 %v530, %v530
  %v567 = vmul.f32 %v531, %v531
  %v568 = vmul.f32 %v532, %v532
  %v569 = vmul.f32 %v533, %v533
  %v570 = vmul.f32 %v534, %v534
  %v571 = vmul.f32 %v535, %v535
  %v572 = vmul.f32 %v536, %v536
  %v573 = vmul.f32 %v537, %v537
  %v574 = vmul.f32 %v538, %v538
  %v575 = vmul.f32 %v539, %v539
  %v576 = vmul.f32 %v540, %v540
  %v577 = vmul.f32 %v541, %v541
  %v578 = vmul.f32 %v542, %v542
  %v579 = vmul.f32 %v543, %v543
  %v580 = vmul.f32 %v544, %v544
  %v581 = vmul.f32 %v545, %v545
  %v582 = vmul.f32 %v546, %v546
  %v583 = vmul.f32 %v547, %v547
  %v584 = vmul.f32 %v548, %v548
  %v585 = vmul.f32 %v549, %v549
  %v586 = vmul.f32 %v550, %v550
  %v587 = vmul.f32 %v551, %v551
  %v588 = vmul.f32 %v552, %v552
  %v589 = vmul.f32 %v553, %v553
  %590 = vmatpush.msra.mxu0 0.0
  %591 = vmatpush.msra.mxu0 0.0
  %592 = vmatpush.msra.mxu0 0.0
  %593 = vmatpush.msra.mxu0 0.0
  %594 = vmatpush.msra.mxu0 0.0
  %595 = vmatpush.msra.mxu0 0.0
  %596 = vmatpush.msra.mxu0 0.0
  %597 = vmatpush.msra.mxu0 %v586
  %598 = vmatpush.msra.mxu0 %v582
  %599 = vmatpush.msra.mxu0 %v578
  %600 = vmatpush.msra.mxu0 %v574
  %601 = vmatpush.msra.mxu0 %v570
  %602 = vmatpush.msra.mxu0 %v566
  %603 = vmatpush.msra.mxu0 %v562
  %604 = vmatpush.msra.mxu0 %v558
  %605 = vmatpush.msra.mxu0 %v554
  %606 = vmatmul.f32.gmra.mxu0 %v196
  %v607 = vpop.f32.mrf.mxu0
  %v608 = vadd.f32 0.0, %v607
  %609 = vmatmul.f32.gmra.mxu0 %v199
  %v610 = vpop.f32.mrf.mxu0
  %v611 = vadd.f32 0.0, %v610
  %612 = vdwg.mxu0
  %613 = vmatpush.msra.mxu0 0.0
  %614 = vmatpush.msra.mxu0 0.0
  %615 = vmatpush.msra.mxu0 0.0
  %616 = vmatpush.msra.mxu0 0.0
  %617 = vmatpush.msra.mxu0 0.0
  %618 = vmatpush.msra.mxu0 0.0
  %619 = vmatpush.msra.mxu0 0.0
  %620 = vmatpush.msra.mxu0 %v587
  %621 = vmatpush.msra.mxu0 %v583
  %622 = vmatpush.msra.mxu0 %v579
  %623 = vmatpush.msra.mxu0 %v575
  %624 = vmatpush.msra.mxu0 %v571
  %625 = vmatpush.msra.mxu0 %v567
  %626 = vmatpush.msra.mxu0 %v563
  %627 = vmatpush.msra.mxu0 %v559
  %628 = vmatpush.msra.mxu0 %v555
  %629 = vmatmul.f32.gmra.mxu0 %v196
  %v630 = vpop.f32.mrf.mxu0
  %v631 = vadd.f32 0.0, %v630
  %632 = vmatmul.f32.gmra.mxu0 %v199
  %v633 = vpop.f32.mrf.mxu0
  %v634 = vadd.f32 0.0, %v633
  %635 = vdwg.mxu0
  %636 = vmatpush.msra.mxu0 0.0
  %637 = vmatpush.msra.mxu0 0.0
  %638 = vmatpush.msra.mxu0 0.0
  %639 = vmatpush.msra.mxu0 0.0
  %640 = vmatpush.msra.mxu0 0.0
  %641 = vmatpush.msra.mxu0 0.0
  %642 = vmatpush.msra.mxu0 0.0
  %643 = vmatpush.msra.mxu0 %v588
  %644 = vmatpush.msra.mxu0 %v584
  %645 = vmatpush.msra.mxu0 %v580
  %646 = vmatpush.msra.mxu0 %v576
  %647 = vmatpush.msra.mxu0 %v572
  %648 = vmatpush.msra.mxu0 %v568
  %649 = vmatpush.msra.mxu0 %v564
  %650 = vmatpush.msra.mxu0 %v560
  %651 = vmatpush.msra.mxu0 %v556
  %652 = vmatmul.f32.gmra.mxu0 %v196
  %v653 = vpop.f32.mrf.mxu0
  %v654 = vadd.f32 0.0, %v653
  %655 = vmatmul.f32.gmra.mxu0 %v199
  %v656 = vpop.f32.mrf.mxu0
  %v657 = vadd.f32 0.0, %v656
  %658 = vdwg.mxu0
  %659 = vmatpush.msra.mxu0 0.0
  %660 = vmatpush.msra.mxu0 0.0
  %661 = vmatpush.msra.mxu0 0.0
  %662 = vmatpush.msra.mxu0 0.0
  %663 = vmatpush.msra.mxu0 0.0
  %664 = vmatpush.msra.mxu0 0.0
  %665 = vmatpush.msra.mxu0 0.0
  %666 = vmatpush.msra.mxu0 %v589
  %667 = vmatpush.msra.mxu0 %v585
  %668 = vmatpush.msra.mxu0 %v581
  %669 = vmatpush.msra.mxu0 %v577
  %670 = vmatpush.msra.mxu0 %v573
  %671 = vmatpush.msra.mxu0 %v569
  %672 = vmatpush.msra.mxu0 %v565
  %673 = vmatpush.msra.mxu0 %v561
  %674 = vmatpush.msra.mxu0 %v557
  %675 = vmatmul.f32.gmra.mxu0 %v196
  %v676 = vpop.f32.mrf.mxu0
  %v677 = vadd.f32 0.0, %v676
  %678 = vmatmul.f32.gmra.mxu0 %v199
  %v679 = vpop.f32.mrf.mxu0
  %v680 = vadd.f32 0.0, %v679
  %681 = vdwg.mxu0
  %v682 = vmul.f32 %v608, 0.125
  %v683 = vmul.f32 %v631, 0.125
  %v684 = vmul.f32 %v654, 0.125
  %v685 = vmul.f32 %v677, 0.125
  %v686 = vmul.f32 %v611, 0.125
  %v687 = vmul.f32 %v634, 0.125
  %v688 = vmul.f32 %v657, 0.125
  %v689 = vmul.f32 %v680, 0.125
  %v690 = vadd.f32 %v682, 1e-05
  %v691 = vadd.f32 %v683, 1e-05
  %v692 = vadd.f32 %v684, 1e-05
  %v693 = vadd.f32 %v685, 1e-05
  %v694 = vadd.f32 %v686, 1e-05
  %v695 = vadd.f32 %v687, 1e-05
  %v696 = vadd.f32 %v688, 1e-05
  %v697 = vadd.f32 %v689, 1e-05
  %v698 = vrsqrt.pop %v690
  %v699 = vmul.f32 %v698, %v690
  %v700 = vmul.f32 %v699, %v698
  %v701 = vmul.f32 0.5, %v700
  %v702 = vsub.f32 1.5, %v701
  %v703 = vmul.f32 %v698, %v702
  %vm704 = vweird.f32 %v690
  %vm705 = vweird.f32 %v698
  %vm706 = vmor %vm704, %vm705
  %v707 = vsel %vm706, %v698, %v703
  %v708 = vrsqrt.pop %v691
  %v709 = vmul.f32 %v708, %v691
  %v710 = vmul.f32 %v709, %v708
  %v711 = vmul.f32 0.5, %v710
  %v712 = vsub.f32 1.5, %v711
  %v713 = vmul.f32 %v708, %v712
  %vm714 = vweird.f32 %v691
  %vm715 = vweird.f32 %v708
  %vm716 = vmor %vm714, %vm715
  %v717 = vsel %vm716, %v708, %v713
  %v718 = vrsqrt.pop %v692
  %v719 = vmul.f32 %v718, %v692
  %v720 = vmul.f32 %v719, %v718
  %v721 = vmul.f32 0.5, %v720
  %v722 = vsub.f32 1.5, %v721
  %v723 = vmul.f32 %v718, %v722
  %vm724 = vweird.f32 %v692
  %vm725 = vweird.f32 %v718
  %vm726 = vmor %vm724, %vm725
  %v727 = vsel %vm726, %v718, %v723
  %v728 = vrsqrt.pop %v693
  %v729 = vmul.f32 %v728, %v693
  %v730 = vmul.f32 %v729, %v728
  %v731 = vmul.f32 0.5, %v730
  %v732 = vsub.f32 1.5, %v731
  %v733 = vmul.f32 %v728, %v732
  %vm734 = vweird.f32 %v693
  %vm735 = vweird.f32 %v728
  %vm736 = vmor %vm734, %vm735
  %v737 = vsel %vm736, %v728, %v733
  %v738 = vrsqrt.pop %v694
  %v739 = vmul.f32 %v738, %v694
  %v740 = vmul.f32 %v739, %v738
  %v741 = vmul.f32 0.5, %v740
  %v742 = vsub.f32 1.5, %v741
  %v743 = vmul.f32 %v738, %v742
  %vm744 = vweird.f32 %v694
  %vm745 = vweird.f32 %v738
  %vm746 = vmor %vm744, %vm745
  %v747 = vsel %vm746, %v738, %v743
  %v748 = vrsqrt.pop %v695
  %v749 = vmul.f32 %v748, %v695
  %v750 = vmul.f32 %v749, %v748
  %v751 = vmul.f32 0.5, %v750
  %v752 = vsub.f32 1.5, %v751
  %v753 = vmul.f32 %v748, %v752
  %vm754 = vweird.f32 %v695
  %vm755 = vweird.f32 %v748
  %vm756 = vmor %vm754, %vm755
  %v757 = vsel %vm756, %v748, %v753
  %v758 = vrsqrt.pop %v696
  %v759 = vmul.f32 %v758, %v696
  %v760 = vmul.f32 %v759, %v758
  %v761 = vmul.f32 0.5, %v760
  %v762 = vsub.f32 1.5, %v761
  %v763 = vmul.f32 %v758, %v762
  %vm764 = vweird.f32 %v696
  %vm765 = vweird.f32 %v758
  %vm766 = vmor %vm764, %vm765
  %v767 = vsel %vm766, %v758, %v763
  %v768 = vrsqrt.pop %v697
  %v769 = vmul.f32 %v768, %v697
  %v770 = vmul.f32 %v769, %v768
  %v771 = vmul.f32 0.5, %v770
  %v772 = vsub.f32 1.5, %v771
  %v773 = vmul.f32 %v768, %v772
  %vm774 = vweird.f32 %v697
  %vm775 = vweird.f32 %v768
  %vm776 = vmor %vm774, %vm775
  %v777 = vsel %vm776, %v768, %v773
  %v779 = vsel %vm329, %v747, 0
  %v782 = vsel %vm329, %v757, 0
  %v785 = vsel %vm329, %v767, 0
  %v788 = vsel %vm329, %v777, 0
  %790 = vmatpush.msra.mxu0 0.0
  %791 = vmatpush.msra.mxu0 0.0
  %792 = vmatpush.msra.mxu0 0.0
  %793 = vmatpush.msra.mxu0 0.0
  %794 = vmatpush.msra.mxu0 0.0
  %795 = vmatpush.msra.mxu0 0.0
  %796 = vmatpush.msra.mxu0 0.0
  %797 = vmatpush.msra.mxu0 0.0
  %798 = vmatpush.msra.mxu0 0.0
  %799 = vmatpush.msra.mxu0 0.0
  %800 = vmatpush.msra.mxu0 0.0
  %801 = vmatpush.msra.mxu0 0.0
  %802 = vmatpush.msra.mxu0 0.0
  %803 = vmatpush.msra.mxu0 0.0
  %804 = vmatpush.msra.mxu0 %v779
  %805 = vmatpush.msra.mxu0 %v707
  %806 = vmatmul.f32.gmra.mxu0 %v303
  %v807 = vpop.f32.mrf.mxu0
  %v808 = vadd.f32 0.0, %v807
  %809 = vmatmul.f32.gmra.mxu0 %v306
  %v810 = vpop.f32.mrf.mxu0
  %v811 = vadd.f32 0.0, %v810
  %812 = vmatmul.f32.gmra.mxu0 %v309
  %v813 = vpop.f32.mrf.mxu0
  %v814 = vadd.f32 0.0, %v813
  %815 = vmatmul.f32.gmra.mxu0 %v312
  %v816 = vpop.f32.mrf.mxu0
  %v817 = vadd.f32 0.0, %v816
  %818 = vmatmul.f32.gmra.mxu0 %v315
  %v819 = vpop.f32.mrf.mxu0
  %v820 = vadd.f32 0.0, %v819
  %821 = vmatmul.f32.gmra.mxu0 %v318
  %v822 = vpop.f32.mrf.mxu0
  %v823 = vadd.f32 0.0, %v822
  %824 = vmatmul.f32.gmra.mxu0 %v321
  %v825 = vpop.f32.mrf.mxu0
  %v826 = vadd.f32 0.0, %v825
  %827 = vmatmul.f32.gmra.mxu0 %v324
  %v828 = vpop.f32.mrf.mxu0
  %v829 = vadd.f32 0.0, %v828
  %830 = vmatmul.f32.gmra.mxu0 %v327
  %v831 = vpop.f32.mrf.mxu0
  %v832 = vadd.f32 0.0, %v831
  %833 = vdwg.mxu0
  %834 = vmatpush.msra.mxu0 0.0
  %835 = vmatpush.msra.mxu0 0.0
  %836 = vmatpush.msra.mxu0 0.0
  %837 = vmatpush.msra.mxu0 0.0
  %838 = vmatpush.msra.mxu0 0.0
  %839 = vmatpush.msra.mxu0 0.0
  %840 = vmatpush.msra.mxu0 0.0
  %841 = vmatpush.msra.mxu0 0.0
  %842 = vmatpush.msra.mxu0 0.0
  %843 = vmatpush.msra.mxu0 0.0
  %844 = vmatpush.msra.mxu0 0.0
  %845 = vmatpush.msra.mxu0 0.0
  %846 = vmatpush.msra.mxu0 0.0
  %847 = vmatpush.msra.mxu0 0.0
  %848 = vmatpush.msra.mxu0 %v782
  %849 = vmatpush.msra.mxu0 %v717
  %850 = vmatmul.f32.gmra.mxu0 %v303
  %v851 = vpop.f32.mrf.mxu0
  %v852 = vadd.f32 0.0, %v851
  %853 = vmatmul.f32.gmra.mxu0 %v306
  %v854 = vpop.f32.mrf.mxu0
  %v855 = vadd.f32 0.0, %v854
  %856 = vmatmul.f32.gmra.mxu0 %v309
  %v857 = vpop.f32.mrf.mxu0
  %v858 = vadd.f32 0.0, %v857
  %859 = vmatmul.f32.gmra.mxu0 %v312
  %v860 = vpop.f32.mrf.mxu0
  %v861 = vadd.f32 0.0, %v860
  %862 = vmatmul.f32.gmra.mxu0 %v315
  %v863 = vpop.f32.mrf.mxu0
  %v864 = vadd.f32 0.0, %v863
  %865 = vmatmul.f32.gmra.mxu0 %v318
  %v866 = vpop.f32.mrf.mxu0
  %v867 = vadd.f32 0.0, %v866
  %868 = vmatmul.f32.gmra.mxu0 %v321
  %v869 = vpop.f32.mrf.mxu0
  %v870 = vadd.f32 0.0, %v869
  %871 = vmatmul.f32.gmra.mxu0 %v324
  %v872 = vpop.f32.mrf.mxu0
  %v873 = vadd.f32 0.0, %v872
  %874 = vmatmul.f32.gmra.mxu0 %v327
  %v875 = vpop.f32.mrf.mxu0
  %v876 = vadd.f32 0.0, %v875
  %877 = vdwg.mxu0
  %878 = vmatpush.msra.mxu0 0.0
  %879 = vmatpush.msra.mxu0 0.0
  %880 = vmatpush.msra.mxu0 0.0
  %881 = vmatpush.msra.mxu0 0.0
  %882 = vmatpush.msra.mxu0 0.0
  %883 = vmatpush.msra.mxu0 0.0
  %884 = vmatpush.msra.mxu0 0.0
  %885 = vmatpush.msra.mxu0 0.0
  %886 = vmatpush.msra.mxu0 0.0
  %887 = vmatpush.msra.mxu0 0.0
  %888 = vmatpush.msra.mxu0 0.0
  %889 = vmatpush.msra.mxu0 0.0
  %890 = vmatpush.msra.mxu0 0.0
  %891 = vmatpush.msra.mxu0 0.0
  %892 = vmatpush.msra.mxu0 %v785
  %893 = vmatpush.msra.mxu0 %v727
  %894 = vmatmul.f32.gmra.mxu0 %v303
  %v895 = vpop.f32.mrf.mxu0
  %v896 = vadd.f32 0.0, %v895
  %897 = vmatmul.f32.gmra.mxu0 %v306
  %v898 = vpop.f32.mrf.mxu0
  %v899 = vadd.f32 0.0, %v898
  %900 = vmatmul.f32.gmra.mxu0 %v309
  %v901 = vpop.f32.mrf.mxu0
  %v902 = vadd.f32 0.0, %v901
  %903 = vmatmul.f32.gmra.mxu0 %v312
  %v904 = vpop.f32.mrf.mxu0
  %v905 = vadd.f32 0.0, %v904
  %906 = vmatmul.f32.gmra.mxu0 %v315
  %v907 = vpop.f32.mrf.mxu0
  %v908 = vadd.f32 0.0, %v907
  %909 = vmatmul.f32.gmra.mxu0 %v318
  %v910 = vpop.f32.mrf.mxu0
  %v911 = vadd.f32 0.0, %v910
  %912 = vmatmul.f32.gmra.mxu0 %v321
  %v913 = vpop.f32.mrf.mxu0
  %v914 = vadd.f32 0.0, %v913
  %915 = vmatmul.f32.gmra.mxu0 %v324
  %v916 = vpop.f32.mrf.mxu0
  %v917 = vadd.f32 0.0, %v916
  %918 = vmatmul.f32.gmra.mxu0 %v327
  %v919 = vpop.f32.mrf.mxu0
  %v920 = vadd.f32 0.0, %v919
  %921 = vdwg.mxu0
  %922 = vmatpush.msra.mxu0 0.0
  %923 = vmatpush.msra.mxu0 0.0
  %924 = vmatpush.msra.mxu0 0.0
  %925 = vmatpush.msra.mxu0 0.0
  %926 = vmatpush.msra.mxu0 0.0
  %927 = vmatpush.msra.mxu0 0.0
  %928 = vmatpush.msra.mxu0 0.0
  %929 = vmatpush.msra.mxu0 0.0
  %930 = vmatpush.msra.mxu0 0.0
  %931 = vmatpush.msra.mxu0 0.0
  %932 = vmatpush.msra.mxu0 0.0
  %933 = vmatpush.msra.mxu0 0.0
  %934 = vmatpush.msra.mxu0 0.0
  %935 = vmatpush.msra.mxu0 0.0
  %936 = vmatpush.msra.mxu0 %v788
  %937 = vmatpush.msra.mxu0 %v737
  %938 = vmatmul.f32.gmra.mxu0 %v303
  %v939 = vpop.f32.mrf.mxu0
  %v940 = vadd.f32 0.0, %v939
  %941 = vmatmul.f32.gmra.mxu0 %v306
  %v942 = vpop.f32.mrf.mxu0
  %v943 = vadd.f32 0.0, %v942
  %944 = vmatmul.f32.gmra.mxu0 %v309
  %v945 = vpop.f32.mrf.mxu0
  %v946 = vadd.f32 0.0, %v945
  %947 = vmatmul.f32.gmra.mxu0 %v312
  %v948 = vpop.f32.mrf.mxu0
  %v949 = vadd.f32 0.0, %v948
  %950 = vmatmul.f32.gmra.mxu0 %v315
  %v951 = vpop.f32.mrf.mxu0
  %v952 = vadd.f32 0.0, %v951
  %953 = vmatmul.f32.gmra.mxu0 %v318
  %v954 = vpop.f32.mrf.mxu0
  %v955 = vadd.f32 0.0, %v954
  %956 = vmatmul.f32.gmra.mxu0 %v321
  %v957 = vpop.f32.mrf.mxu0
  %v958 = vadd.f32 0.0, %v957
  %959 = vmatmul.f32.gmra.mxu0 %v324
  %v960 = vpop.f32.mrf.mxu0
  %v961 = vadd.f32 0.0, %v960
  %962 = vmatmul.f32.gmra.mxu0 %v327
  %v963 = vpop.f32.mrf.mxu0
  %v964 = vadd.f32 0.0, %v963
  %965 = vdwg.mxu0
  %v966 = vmul.f32 %v518, %v808
  %v967 = vmul.f32 %v519, %v852
  %v968 = vmul.f32 %v520, %v896
  %v969 = vmul.f32 %v521, %v940
  %v970 = vmul.f32 %v522, %v811
  %v971 = vmul.f32 %v523, %v855
  %v972 = vmul.f32 %v524, %v899
  %v973 = vmul.f32 %v525, %v943
  %v974 = vmul.f32 %v526, %v814
  %v975 = vmul.f32 %v527, %v858
  %v976 = vmul.f32 %v528, %v902
  %v977 = vmul.f32 %v529, %v946
  %v978 = vmul.f32 %v530, %v817
  %v979 = vmul.f32 %v531, %v861
  %v980 = vmul.f32 %v532, %v905
  %v981 = vmul.f32 %v533, %v949
  %v982 = vmul.f32 %v534, %v820
  %v983 = vmul.f32 %v535, %v864
  %v984 = vmul.f32 %v536, %v908
  %v985 = vmul.f32 %v537, %v952
  %v986 = vmul.f32 %v538, %v823
  %v987 = vmul.f32 %v539, %v867
  %v988 = vmul.f32 %v540, %v911
  %v989 = vmul.f32 %v541, %v955
  %v990 = vmul.f32 %v542, %v826
  %v991 = vmul.f32 %v543, %v870
  %v992 = vmul.f32 %v544, %v914
  %v993 = vmul.f32 %v545, %v958
  %v994 = vmul.f32 %v546, %v829
  %v995 = vmul.f32 %v547, %v873
  %v996 = vmul.f32 %v548, %v917
  %v997 = vmul.f32 %v549, %v961
  %v998 = vmul.f32 %v550, %v832
  %v999 = vmul.f32 %v551, %v876
  %v1000 = vmul.f32 %v552, %v920
  %v1001 = vmul.f32 %v553, %v964
  %1003 = vset.pattern.permute.xlu0 0
  %1004 = vperm.xlu0 %1003, %v61
  %v1005 = vpop.permute.xlu0 %1004
  %1008 = vset.pattern.permute.xlu0 0
  %1009 = vperm.xlu0 %1008, %v62
  %v1010 = vpop.permute.xlu0 %1009
  %1013 = vset.pattern.permute.xlu0 0
  %1014 = vperm.xlu0 %1013, %v63
  %v1015 = vpop.permute.xlu0 %1014
  %1018 = vset.pattern.permute.xlu0 0
  %1019 = vperm.xlu0 %1018, %v64
  %v1020 = vpop.permute.xlu0 %1019
  %1023 = vset.pattern.permute.xlu0 0
  %1024 = vperm.xlu0 %1023, %v65
  %v1025 = vpop.permute.xlu0 %1024
  %1028 = vset.pattern.permute.xlu0 0
  %1029 = vperm.xlu0 %1028, %v66
  %v1030 = vpop.permute.xlu0 %1029
  %1033 = vset.pattern.permute.xlu0 0
  %1034 = vperm.xlu0 %1033, %v67
  %v1035 = vpop.permute.xlu0 %1034
  %1038 = vset.pattern.permute.xlu0 0
  %1039 = vperm.xlu0 %1038, %v68
  %v1040 = vpop.permute.xlu0 %1039
  %1043 = vset.pattern.permute.xlu0 0
  %1044 = vperm.xlu0 %1043, %v69
  %v1045 = vpop.permute.xlu0 %1044
  %v1047 = vmul.f32 %v966, %v1005
  %v1048 = vmul.f32 %v967, %v1005
  %v1049 = vmul.f32 %v968, %v1005
  %v1050 = vmul.f32 %v969, %v1005
  %v1051 = vmul.f32 %v970, %v1010
  %v1052 = vmul.f32 %v971, %v1010
  %v1053 = vmul.f32 %v972, %v1010
  %v1054 = vmul.f32 %v973, %v1010
  %v1055 = vmul.f32 %v974, %v1015
  %v1056 = vmul.f32 %v975, %v1015
  %v1057 = vmul.f32 %v976, %v1015
  %v1058 = vmul.f32 %v977, %v1015
  %v1059 = vmul.f32 %v978, %v1020
  %v1060 = vmul.f32 %v979, %v1020
  %v1061 = vmul.f32 %v980, %v1020
  %v1062 = vmul.f32 %v981, %v1020
  %v1063 = vmul.f32 %v982, %v1025
  %v1064 = vmul.f32 %v983, %v1025
  %v1065 = vmul.f32 %v984, %v1025
  %v1066 = vmul.f32 %v985, %v1025
  %v1067 = vmul.f32 %v986, %v1030
  %v1068 = vmul.f32 %v987, %v1030
  %v1069 = vmul.f32 %v988, %v1030
  %v1070 = vmul.f32 %v989, %v1030
  %v1071 = vmul.f32 %v990, %v1035
  %v1072 = vmul.f32 %v991, %v1035
  %v1073 = vmul.f32 %v992, %v1035
  %v1074 = vmul.f32 %v993, %v1035
  %v1075 = vmul.f32 %v994, %v1040
  %v1076 = vmul.f32 %v995, %v1040
  %v1077 = vmul.f32 %v996, %v1040
  %v1078 = vmul.f32 %v997, %v1040
  %v1079 = vmul.f32 %v998, %v1045
  %v1080 = vmul.f32 %v999, %v1045
  %v1081 = vmul.f32 %v1000, %v1045
  %v1082 = vmul.f32 %v1001, %v1045
  %1084 = vset.pattern.permute.xlu0 0
  %1085 = vperm.xlu0 %1084, %v70
  %v1086 = vpop.permute.xlu0 %1085
  %1089 = vset.pattern.permute.xlu0 0
  %1090 = vperm.xlu0 %1089, %v71
  %v1091 = vpop.permute.xlu0 %1090
  %1094 = vset.pattern.permute.xlu0 0
  %1095 = vperm.xlu0 %1094, %v72
  %v1096 = vpop.permute.xlu0 %1095
  %1099 = vset.pattern.permute.xlu0 0
  %1100 = vperm.xlu0 %1099, %v73
  %v1101 = vpop.permute.xlu0 %1100
  %1104 = vset.pattern.permute.xlu0 0
  %1105 = vperm.xlu0 %1104, %v74
  %v1106 = vpop.permute.xlu0 %1105
  %1109 = vset.pattern.permute.xlu0 0
  %1110 = vperm.xlu0 %1109, %v75
  %v1111 = vpop.permute.xlu0 %1110
  %1114 = vset.pattern.permute.xlu0 0
  %1115 = vperm.xlu0 %1114, %v76
  %v1116 = vpop.permute.xlu0 %1115
  %1119 = vset.pattern.permute.xlu0 0
  %1120 = vperm.xlu0 %1119, %v77
  %v1121 = vpop.permute.xlu0 %1120
  %1124 = vset.pattern.permute.xlu0 0
  %1125 = vperm.xlu0 %1124, %v78
  %v1126 = vpop.permute.xlu0 %1125
  %v1128 = vadd.f32 %v1047, %v1086
  %v1129 = vadd.f32 %v1048, %v1086
  %v1130 = vadd.f32 %v1049, %v1086
  %v1131 = vadd.f32 %v1050, %v1086
  %v1132 = vadd.f32 %v1051, %v1091
  %v1133 = vadd.f32 %v1052, %v1091
  %v1134 = vadd.f32 %v1053, %v1091
  %v1135 = vadd.f32 %v1054, %v1091
  %v1136 = vadd.f32 %v1055, %v1096
  %v1137 = vadd.f32 %v1056, %v1096
  %v1138 = vadd.f32 %v1057, %v1096
  %v1139 = vadd.f32 %v1058, %v1096
  %v1140 = vadd.f32 %v1059, %v1101
  %v1141 = vadd.f32 %v1060, %v1101
  %v1142 = vadd.f32 %v1061, %v1101
  %v1143 = vadd.f32 %v1062, %v1101
  %v1144 = vadd.f32 %v1063, %v1106
  %v1145 = vadd.f32 %v1064, %v1106
  %v1146 = vadd.f32 %v1065, %v1106
  %v1147 = vadd.f32 %v1066, %v1106
  %v1148 = vadd.f32 %v1067, %v1111
  %v1149 = vadd.f32 %v1068, %v1111
  %v1150 = vadd.f32 %v1069, %v1111
  %v1151 = vadd.f32 %v1070, %v1111
  %v1152 = vadd.f32 %v1071, %v1116
  %v1153 = vadd.f32 %v1072, %v1116
  %v1154 = vadd.f32 %v1073, %v1116
  %v1155 = vadd.f32 %v1074, %v1116
  %v1156 = vadd.f32 %v1075, %v1121
  %v1157 = vadd.f32 %v1076, %v1121
  %v1158 = vadd.f32 %v1077, %v1121
  %v1159 = vadd.f32 %v1078, %v1121
  %v1160 = vadd.f32 %v1079, %v1126
  %v1161 = vadd.f32 %v1080, %v1126
  %v1162 = vadd.f32 %v1081, %v1126
  %v1163 = vadd.f32 %v1082, %v1126
  %v1164 = vld [vmem:[%s1] sm:$0xff]
  %1166 = vset.pattern.permute.xlu0 0
  %1167 = vperm.xlu0 %1166, %v79
  %v1168 = vpop.permute.xlu0 %1167
  %v1171 = vsel %vm87, %v1164, 0
  %1173 = vmatpush.msra.mxu0 0.0
  %1174 = vmatpush.msra.mxu0 0.0
  %1175 = vmatpush.msra.mxu0 0.0
  %1176 = vmatpush.msra.mxu0 0.0
  %1177 = vmatpush.msra.mxu0 0.0
  %1178 = vmatpush.msra.mxu0 0.0
  %1179 = vmatpush.msra.mxu0 0.0
  %1180 = vmatpush.msra.mxu0 %v1160
  %1181 = vmatpush.msra.mxu0 %v1156
  %1182 = vmatpush.msra.mxu0 %v1152
  %1183 = vmatpush.msra.mxu0 %v1148
  %1184 = vmatpush.msra.mxu0 %v1144
  %1185 = vmatpush.msra.mxu0 %v1140
  %1186 = vmatpush.msra.mxu0 %v1136
  %1187 = vmatpush.msra.mxu0 %v1132
  %1188 = vmatpush.msra.mxu0 %v1128
  %1189 = vmatmul.f32.gmra.mxu0 %v1171
  %v1190 = vpop.f32.mrf.mxu0
  %v1191 = vadd.f32 %v1168, %v1190
  %1192 = vdwg.mxu0
  %1193 = vmatpush.msra.mxu0 0.0
  %1194 = vmatpush.msra.mxu0 0.0
  %1195 = vmatpush.msra.mxu0 0.0
  %1196 = vmatpush.msra.mxu0 0.0
  %1197 = vmatpush.msra.mxu0 0.0
  %1198 = vmatpush.msra.mxu0 0.0
  %1199 = vmatpush.msra.mxu0 0.0
  %1200 = vmatpush.msra.mxu0 %v1161
  %1201 = vmatpush.msra.mxu0 %v1157
  %1202 = vmatpush.msra.mxu0 %v1153
  %1203 = vmatpush.msra.mxu0 %v1149
  %1204 = vmatpush.msra.mxu0 %v1145
  %1205 = vmatpush.msra.mxu0 %v1141
  %1206 = vmatpush.msra.mxu0 %v1137
  %1207 = vmatpush.msra.mxu0 %v1133
  %1208 = vmatpush.msra.mxu0 %v1129
  %1209 = vmatmul.f32.gmra.mxu0 %v1171
  %v1210 = vpop.f32.mrf.mxu0
  %v1211 = vadd.f32 %v1168, %v1210
  %1212 = vdwg.mxu0
  %1213 = vmatpush.msra.mxu0 0.0
  %1214 = vmatpush.msra.mxu0 0.0
  %1215 = vmatpush.msra.mxu0 0.0
  %1216 = vmatpush.msra.mxu0 0.0
  %1217 = vmatpush.msra.mxu0 0.0
  %1218 = vmatpush.msra.mxu0 0.0
  %1219 = vmatpush.msra.mxu0 0.0
  %1220 = vmatpush.msra.mxu0 %v1162
  %1221 = vmatpush.msra.mxu0 %v1158
  %1222 = vmatpush.msra.mxu0 %v1154
  %1223 = vmatpush.msra.mxu0 %v1150
  %1224 = vmatpush.msra.mxu0 %v1146
  %1225 = vmatpush.msra.mxu0 %v1142
  %1226 = vmatpush.msra.mxu0 %v1138
  %1227 = vmatpush.msra.mxu0 %v1134
  %1228 = vmatpush.msra.mxu0 %v1130
  %1229 = vmatmul.f32.gmra.mxu0 %v1171
  %v1230 = vpop.f32.mrf.mxu0
  %v1231 = vadd.f32 %v1168, %v1230
  %1232 = vdwg.mxu0
  %1233 = vmatpush.msra.mxu0 0.0
  %1234 = vmatpush.msra.mxu0 0.0
  %1235 = vmatpush.msra.mxu0 0.0
  %1236 = vmatpush.msra.mxu0 0.0
  %1237 = vmatpush.msra.mxu0 0.0
  %1238 = vmatpush.msra.mxu0 0.0
  %1239 = vmatpush.msra.mxu0 0.0
  %1240 = vmatpush.msra.mxu0 %v1163
  %1241 = vmatpush.msra.mxu0 %v1159
  %1242 = vmatpush.msra.mxu0 %v1155
  %1243 = vmatpush.msra.mxu0 %v1151
  %1244 = vmatpush.msra.mxu0 %v1147
  %1245 = vmatpush.msra.mxu0 %v1143
  %1246 = vmatpush.msra.mxu0 %v1139
  %1247 = vmatpush.msra.mxu0 %v1135
  %1248 = vmatpush.msra.mxu0 %v1131
  %1249 = vmatmul.f32.gmra.mxu0 %v1171
  %v1250 = vpop.f32.mrf.mxu0
  %v1251 = vadd.f32 %v1168, %v1250
  %1252 = vdwg.mxu0
  %1253 = vst [vmem:[%s6] sm:$0xff] %v1191
  %1254 = vst [vmem:[%s6 + $0x8] sm:$0xff] %v1211
  %1255 = vst [vmem:[%s6 + $0x10] sm:$0xff] %v1231
  %1256 = vst [vmem:[%s6 + $0x18] sm:$0xff] %v1251
  // Predicated region
  $region26: #{paradis_forward.11} parent=0 // pred_check
    _
  $region27: #{paradis_forward.11} parent=0 // pred_check_branch
    %1258 = sbr.rel (0) target = $region29
  $region28: #{paradis_forward.11} parent=0 // pred_region
    _
  $region29: #{paradis_forward.11} parent=0 // pred_fallthru
    _
  // Predicated region
  $region30: #{paradis_forward.11} parent=0 // pred_check
    _
  $region31: #{paradis_forward.11} parent=0 // pred_check_branch
    %1260 = sbr.rel (0) target = $region33
  $region32: #{paradis_forward.11} parent=0 // pred_region
    _
  $region33: #{paradis_forward.11} parent=0 // pred_fallthru
    _
  // Predicated region
  $region34: #{paradis_forward.11} parent=0 // pred_check
    _
  $region35: #{paradis_forward.11} parent=0 // pred_check_branch
    %1262 = sbr.rel (0) target = $region37
  $region36: #{paradis_forward.11} parent=0 // pred_region
    _
  $region37: #{paradis_forward.11} parent=0 // pred_fallthru
    _
  // Predicated region
  $region38: #{paradis_forward.11} parent=0 // pred_check
    _
  $region39: #{paradis_forward.11} parent=0 // pred_check_branch
    %1264 = sbr.rel (0) target = $region41
  $region40: #{paradis_forward.11} parent=0 // pred_region
    _
  $region41: #{paradis_forward.11} parent=0 // pred_fallthru
    _

// kernel: paradis_forward.12
$region0: #{paradis_forward.12}
  #allocation0 [shape = 'u32[]', space=smem, size = 0x4, offset = 0x4, fixed_abs, tag = 'smem constant byte address 0x4 - core index']
  #allocation1 [shape = 'u32[72,128]{1,0:T(1,128)}', space=vmem, size = 0x9000, scoped, tag = 'internal scratch']
  %s0 = inlined_call_operand.vmem [shape: f32[36,512], index: 0, kind: input, shape index: {}]
  %s1 = inlined_call_operand.vmem [shape: f32[72,36], index: 1, kind: input, shape index: {}]
  %s2 = inlined_call_operand.vmem [shape: f32[8,72], index: 2, kind: input, shape index: {}]
  %s3 = inlined_call_operand.vmem [shape: f32[9,72], index: 3, kind: input, shape index: {}]
  %s4 = inlined_call_operand.vmem [shape: f32[72,9], index: 4, kind: input, shape index: {}]
  %s5 = inlined_call_operand.vmem [shape: f32[224,1], index: 5, kind: input, shape index: {}]
  %s6 = inlined_call_operand.vmem [shape: f32[8,512], index: 6, kind: output, shape index: {}]
  %s7 = sld [smem:[#allocation0]]
  $region34: #{paradis_forward.12} parent=0
    _
  %s9 = ssub.s32 1, %s7
  %s10 = scalar_select 0, %s9, %s7
  // Predicated region
  $region2: #{paradis_forward.12} parent=0 // pred_check
    _
  $region3: #{paradis_forward.12} parent=0 // pred_check_branch
    %12 = sbr.rel (0) target = $region5
  $region4: #{paradis_forward.12} parent=0 // pred_region
    _
  $region5: #{paradis_forward.12} parent=0 // pred_fallthru
    _
  // Predicated region
  $region6: #{paradis_forward.12} parent=0 // pred_check
    _
  $region7: #{paradis_forward.12} parent=0 // pred_check_branch
    %14 = sbr.rel (0) target = $region9
  $region8: #{paradis_forward.12} parent=0 // pred_region
    _
  $region9: #{paradis_forward.12} parent=0 // pred_fallthru
    _
  // Predicated region
  $region10: #{paradis_forward.12} parent=0 // pred_check
    _
  $region11: #{paradis_forward.12} parent=0 // pred_check_branch
    %16 = sbr.rel (0) target = $region13
  $region12: #{paradis_forward.12} parent=0 // pred_region
    _
  $region13: #{paradis_forward.12} parent=0 // pred_fallthru
    _
  // Predicated region
  $region14: #{paradis_forward.12} parent=0 // pred_check
    _
  $region15: #{paradis_forward.12} parent=0 // pred_check_branch
    %18 = sbr.rel (0) target = $region17
  $region16: #{paradis_forward.12} parent=0 // pred_region
    _
  $region17: #{paradis_forward.12} parent=0 // pred_fallthru
    _
  // Predicated region
  $region18: #{paradis_forward.12} parent=0 // pred_check
    _
  $region19: #{paradis_forward.12} parent=0 // pred_check_branch
    %20 = sbr.rel (0) target = $region21
  $region20: #{paradis_forward.12} parent=0 // pred_region
    _
  $region21: #{paradis_forward.12} parent=0 // pred_fallthru
    _
  // Predicated region
  $region22: #{paradis_forward.12} parent=0 // pred_check
    _
  $region23: #{paradis_forward.12} parent=0 // pred_check_branch
    %22 = sbr.rel (0) target = $region25
  $region24: #{paradis_forward.12} parent=0 // pred_region
    _
  $region25: #{paradis_forward.12} parent=0 // pred_fallthru
    _
  %v23 = vld [vmem:[%s5] sm:$0xff]
  %v24 = vld [vmem:[%s5 + $0x8] sm:$0xff]
  %v25 = vld [vmem:[%s5 + $0x10] sm:$0xff]
  %v26 = vld [vmem:[%s5 + $0x18] sm:$0xff]
  %v27 = vld [vmem:[%s5 + $0x20] sm:$0xff]
  %v28 = vld [vmem:[%s5 + $0x28] sm:$0xff]
  %v29 = vld [vmem:[%s5 + $0x30] sm:$0xff]
  %v30 = vld [vmem:[%s5 + $0x38] sm:$0xff]
  %v31 = vld [vmem:[%s5 + $0x40] sm:$0xff]
  %v32 = vld [vmem:[%s5 + $0x48] sm:$0xff]
  %v33 = vld [vmem:[%s5 + $0x50] sm:$0xff]
  %v34 = vld [vmem:[%s5 + $0x58] sm:$0xff]
  %v35 = vld [vmem:[%s5 + $0x60] sm:$0xff]
  %v36 = vld [vmem:[%s5 + $0x68] sm:$0xff]
  %v37 = vld [vmem:[%s5 + $0x70] sm:$0xff]
  %v38 = vld [vmem:[%s5 + $0x78] sm:$0xff]
  %v39 = vld [vmem:[%s5 + $0x80] sm:$0xff]
  %v40 = vld [vmem:[%s5 + $0x88] sm:$0xff]
  %v41 = vld [vmem:[%s5 + $0x90] sm:$0xff]
  %v42 = vld [vmem:[%s5 + $0x98] sm:$0xff]
  %v43 = vld [vmem:[%s5 + $0xa0] sm:$0xff]
  %v44 = vld [vmem:[%s5 + $0xa8] sm:$0xff]
  %v45 = vld [vmem:[%s5 + $0xb0] sm:$0xff]
  %v46 = vld [vmem:[%s5 + $0xb8] sm:$0xff]
  %v47 = vld [vmem:[%s5 + $0xc0] sm:$0xff]
  %v48 = vld [vmem:[%s5 + $0xc8] sm:$0xff]
  %v49 = vld [vmem:[%s5 + $0xd0] sm:$0xff]
  %v50 = vld [vmem:[%s5 + $0xd8] sm:$0xff]
  %v51 = vld [vmem:[%s1] sm:$0xff]
  %v52 = vld [vmem:[%s1 + $0x8] sm:$0xff]
  %v53 = vld [vmem:[%s1 + $0x10] sm:$0xff]
  %v54 = vld [vmem:[%s1 + $0x18] sm:$0xff]
  %v55 = vld [vmem:[%s1 + $0x20] sm:$0xff]
  %v56 = vld [vmem:[%s1 + $0x28] sm:$0xff]
  %v57 = vld [vmem:[%s1 + $0x30] sm:$0xff]
  %v58 = vld [vmem:[%s1 + $0x38] sm:$0xff]
  %v59 = vld [vmem:[%s1 + $0x40] sm:$0xff]
  %v60 = vld [vmem:[%s0] sm:$0xff]
  %v61 = vld [vmem:[%s0 + $0x8] sm:$0xff]
  %v62 = vld [vmem:[%s0 + $0x10] sm:$0xff]
  %v63 = vld [vmem:[%s0 + $0x18] sm:$0xff]
  %v64 = vld [vmem:[%s0 + $0x20] sm:$0xff]
  %v65 = vld [vmem:[%s0 + $0x28] sm:$0xff]
  %v66 = vld [vmem:[%s0 + $0x30] sm:$0xff]
  %v67 = vld [vmem:[%s0 + $0x38] sm:$0xff]
  %v68 = vld [vmem:[%s0 + $0x40] sm:$0xff]
  %v69 = vld [vmem:[%s0 + $0x48] sm:$0xff]
  %v70 = vld [vmem:[%s0 + $0x50] sm:$0xff]
  %v71 = vld [vmem:[%s0 + $0x58] sm:$0xff]
  %v72 = vld [vmem:[%s0 + $0x60] sm:$0xff]
  %v73 = vld [vmem:[%s0 + $0x68] sm:$0xff]
  %v74 = vld [vmem:[%s0 + $0x70] sm:$0xff]
  %v75 = vld [vmem:[%s0 + $0x78] sm:$0xff]
  %v76 = vld [vmem:[%s0 + $0x80] sm:$0xf]
  %v77 = vld [vmem:[%s0 + $0x88] sm:$0xf]
  %v78 = vld [vmem:[%s0 + $0x90] sm:$0xf]
  %v79 = vld [vmem:[%s0 + $0x98] sm:$0xf]
  %81 = vset.pattern.permute.xlu0 0
  %82 = vperm.xlu0 %81, %v23
  %v83 = vpop.permute.xlu0 %82
  %86 = vset.pattern.permute.xlu0 0
  %87 = vperm.xlu0 %86, %v24
  %v88 = vpop.permute.xlu0 %87
  %91 = vset.pattern.permute.xlu0 0
  %92 = vperm.xlu0 %91, %v25
  %v93 = vpop.permute.xlu0 %92
  %96 = vset.pattern.permute.xlu0 0
  %97 = vperm.xlu0 %96, %v26
  %v98 = vpop.permute.xlu0 %97
  %101 = vset.pattern.permute.xlu0 0
  %102 = vperm.xlu0 %101, %v27
  %v103 = vpop.permute.xlu0 %102
  %106 = vset.pattern.permute.xlu0 0
  %107 = vperm.xlu0 %106, %v28
  %v108 = vpop.permute.xlu0 %107
  %111 = vset.pattern.permute.xlu0 0
  %112 = vperm.xlu0 %111, %v29
  %v113 = vpop.permute.xlu0 %112
  %116 = vset.pattern.permute.xlu0 0
  %117 = vperm.xlu0 %116, %v30
  %v118 = vpop.permute.xlu0 %117
  %121 = vset.pattern.permute.xlu0 0
  %122 = vperm.xlu0 %121, %v31
  %v123 = vpop.permute.xlu0 %122
  %vm125 = vcmask 293888
  %v127 = vsel %vm125, %v51, 0
  %v130 = vsel %vm125, %v52, 0
  %v133 = vsel %vm125, %v53, 0
  %v136 = vsel %vm125, %v54, 0
  %v139 = vsel %vm125, %v55, 0
  %v142 = vsel %vm125, %v56, 0
  %v145 = vsel %vm125, %v57, 0
  %v148 = vsel %vm125, %v58, 0
  %v151 = vsel %vm125, %v59, 0
  %vm153 = vcmask 1043456
  %v155 = vsel %vm153, %v76, 0
  %v158 = vsel %vm153, %v77, 0
  %v161 = vsel %vm153, %v78, 0
  %v164 = vsel %vm153, %v79, 0
  %166 = vmatpush.msra.mxu0 0.0
  %167 = vmatpush.msra.mxu0 0.0
  %168 = vmatpush.msra.mxu0 0.0
  %169 = vmatpush.msra.mxu0 0.0
  %170 = vmatpush.msra.mxu0 0.0
  %171 = vmatpush.msra.mxu0 0.0
  %172 = vmatpush.msra.mxu0 0.0
  %173 = vmatpush.msra.mxu0 0.0
  %174 = vmatpush.msra.mxu0 0.0
  %175 = vmatpush.msra.mxu0 0.0
  %176 = vmatpush.msra.mxu0 0.0
  %177 = vmatpush.msra.mxu0 %v155
  %178 = vmatpush.msra.mxu0 %v72
  %179 = vmatpush.msra.mxu0 %v68
  %180 = vmatpush.msra.mxu0 %v64
  %181 = vmatpush.msra.mxu0 %v60
  %182 = vmatmul.f32.gmra.mxu0 %v127
  %v183 = vpop.f32.mrf.mxu0
  %v184 = vadd.f32 %v83, %v183
  %185 = vmatmul.f32.gmra.mxu0 %v130
  %v186 = vpop.f32.mrf.mxu0
  %v187 = vadd.f32 %v88, %v186
  %188 = vmatmul.f32.gmra.mxu0 %v133
  %v189 = vpop.f32.mrf.mxu0
  %v190 = vadd.f32 %v93, %v189
  %191 = vmatmul.f32.gmra.mxu0 %v136
  %v192 = vpop.f32.mrf.mxu0
  %v193 = vadd.f32 %v98, %v192
  %194 = vmatmul.f32.gmra.mxu0 %v139
  %v195 = vpop.f32.mrf.mxu0
  %v196 = vadd.f32 %v103, %v195
  %197 = vmatmul.f32.gmra.mxu0 %v142
  %v198 = vpop.f32.mrf.mxu0
  %v199 = vadd.f32 %v108, %v198
  %200 = vmatmul.f32.gmra.mxu0 %v145
  %v201 = vpop.f32.mrf.mxu0
  %v202 = vadd.f32 %v113, %v201
  %203 = vmatmul.f32.gmra.mxu0 %v148
  %v204 = vpop.f32.mrf.mxu0
  %v205 = vadd.f32 %v118, %v204
  %206 = vmatmul.f32.gmra.mxu0 %v151
  %v207 = vpop.f32.mrf.mxu0
  %v208 = vadd.f32 %v123, %v207
  %209 = vdwg.mxu0
  %210 = vmatpush.msra.mxu0 0.0
  %211 = vmatpush.msra.mxu0 0.0
  %212 = vmatpush.msra.mxu0 0.0
  %213 = vmatpush.msra.mxu0 0.0
  %214 = vmatpush.msra.mxu0 0.0
  %215 = vmatpush.msra.mxu0 0.0
  %216 = vmatpush.msra.mxu0 0.0
  %217 = vmatpush.msra.mxu0 0.0
  %218 = vmatpush.msra.mxu0 0.0
  %219 = vmatpush.msra.mxu0 0.0
  %220 = vmatpush.msra.mxu0 0.0
  %221 = vmatpush.msra.mxu0 %v158
  %222 = vmatpush.msra.mxu0 %v73
  %223 = vmatpush.msra.mxu0 %v69
  %224 = vmatpush.msra.mxu0 %v65
  %225 = vmatpush.msra.mxu0 %v61
  %226 = vmatmul.f32.gmra.mxu0 %v127
  %v227 = vpop.f32.mrf.mxu0
  %v228 = vadd.f32 %v83, %v227
  %229 = vmatmul.f32.gmra.mxu0 %v130
  %v230 = vpop.f32.mrf.mxu0
  %v231 = vadd.f32 %v88, %v230
  %232 = vmatmul.f32.gmra.mxu0 %v133
  %v233 = vpop.f32.mrf.mxu0
  %v234 = vadd.f32 %v93, %v233
  %235 = vmatmul.f32.gmra.mxu0 %v136
  %v236 = vpop.f32.mrf.mxu0
  %v237 = vadd.f32 %v98, %v236
  %238 = vmatmul.f32.gmra.mxu0 %v139
  %v239 = vpop.f32.mrf.mxu0
  %v240 = vadd.f32 %v103, %v239
  %241 = vmatmul.f32.gmra.mxu0 %v142
  %v242 = vpop.f32.mrf.mxu0
  %v243 = vadd.f32 %v108, %v242
  %244 = vmatmul.f32.gmra.mxu0 %v145
  %v245 = vpop.f32.mrf.mxu0
  %v246 = vadd.f32 %v113, %v245
  %247 = vmatmul.f32.gmra.mxu0 %v148
  %v248 = vpop.f32.mrf.mxu0
  %v249 = vadd.f32 %v118, %v248
  %250 = vmatmul.f32.gmra.mxu0 %v151
  %v251 = vpop.f32.mrf.mxu0
  %v252 = vadd.f32 %v123, %v251
  %253 = vdwg.mxu0
  %254 = vmatpush.msra.mxu0 0.0
  %255 = vmatpush.msra.mxu0 0.0
  %256 = vmatpush.msra.mxu0 0.0
  %257 = vmatpush.msra.mxu0 0.0
  %258 = vmatpush.msra.mxu0 0.0
  %259 = vmatpush.msra.mxu0 0.0
  %260 = vmatpush.msra.mxu0 0.0
  %261 = vmatpush.msra.mxu0 0.0
  %262 = vmatpush.msra.mxu0 0.0
  %263 = vmatpush.msra.mxu0 0.0
  %264 = vmatpush.msra.mxu0 0.0
  %265 = vmatpush.msra.mxu0 %v161
  %266 = vmatpush.msra.mxu0 %v74
  %267 = vmatpush.msra.mxu0 %v70
  %268 = vmatpush.msra.mxu0 %v66
  %269 = vmatpush.msra.mxu0 %v62
  %270 = vmatmul.f32.gmra.mxu0 %v127
  %v271 = vpop.f32.mrf.mxu0
  %v272 = vadd.f32 %v83, %v271
  %273 = vmatmul.f32.gmra.mxu0 %v130
  %v274 = vpop.f32.mrf.mxu0
  %v275 = vadd.f32 %v88, %v274
  %276 = vmatmul.f32.gmra.mxu0 %v133
  %v277 = vpop.f32.mrf.mxu0
  %v278 = vadd.f32 %v93, %v277
  %279 = vmatmul.f32.gmra.mxu0 %v136
  %v280 = vpop.f32.mrf.mxu0
  %v281 = vadd.f32 %v98, %v280
  %282 = vmatmul.f32.gmra.mxu0 %v139
  %v283 = vpop.f32.mrf.mxu0
  %v284 = vadd.f32 %v103, %v283
  %285 = vmatmul.f32.gmra.mxu0 %v142
  %v286 = vpop.f32.mrf.mxu0
  %v287 = vadd.f32 %v108, %v286
  %288 = vmatmul.f32.gmra.mxu0 %v145
  %v289 = vpop.f32.mrf.mxu0
  %v290 = vadd.f32 %v113, %v289
  %291 = vmatmul.f32.gmra.mxu0 %v148
  %v292 = vpop.f32.mrf.mxu0
  %v293 = vadd.f32 %v118, %v292
  %294 = vmatmul.f32.gmra.mxu0 %v151
  %v295 = vpop.f32.mrf.mxu0
  %v296 = vadd.f32 %v123, %v295
  %297 = vdwg.mxu0
  %298 = vmatpush.msra.mxu0 0.0
  %299 = vmatpush.msra.mxu0 0.0
  %300 = vmatpush.msra.mxu0 0.0
  %301 = vmatpush.msra.mxu0 0.0
  %302 = vmatpush.msra.mxu0 0.0
  %303 = vmatpush.msra.mxu0 0.0
  %304 = vmatpush.msra.mxu0 0.0
  %305 = vmatpush.msra.mxu0 0.0
  %306 = vmatpush.msra.mxu0 0.0
  %307 = vmatpush.msra.mxu0 0.0
  %308 = vmatpush.msra.mxu0 0.0
  %309 = vmatpush.msra.mxu0 %v164
  %310 = vmatpush.msra.mxu0 %v75
  %311 = vmatpush.msra.mxu0 %v71
  %312 = vmatpush.msra.mxu0 %v67
  %313 = vmatpush.msra.mxu0 %v63
  %314 = vmatmul.f32.gmra.mxu0 %v127
  %v315 = vpop.f32.mrf.mxu0
  %v316 = vadd.f32 %v83, %v315
  %317 = vmatmul.f32.gmra.mxu0 %v130
  %v318 = vpop.f32.mrf.mxu0
  %v319 = vadd.f32 %v88, %v318
  %320 = vmatmul.f32.gmra.mxu0 %v133
  %v321 = vpop.f32.mrf.mxu0
  %v322 = vadd.f32 %v93, %v321
  %323 = vmatmul.f32.gmra.mxu0 %v136
  %v324 = vpop.f32.mrf.mxu0
  %v325 = vadd.f32 %v98, %v324
  %326 = vmatmul.f32.gmra.mxu0 %v139
  %v327 = vpop.f32.mrf.mxu0
  %v328 = vadd.f32 %v103, %v327
  %329 = vmatmul.f32.gmra.mxu0 %v142
  %v330 = vpop.f32.mrf.mxu0
  %v331 = vadd.f32 %v108, %v330
  %332 = vmatmul.f32.gmra.mxu0 %v145
  %v333 = vpop.f32.mrf.mxu0
  %v334 = vadd.f32 %v113, %v333
  %335 = vmatmul.f32.gmra.mxu0 %v148
  %v336 = vpop.f32.mrf.mxu0
  %v337 = vadd.f32 %v118, %v336
  %338 = vmatmul.f32.gmra.mxu0 %v151
  %v339 = vpop.f32.mrf.mxu0
  %v340 = vadd.f32 %v123, %v339
  %341 = vdwg.mxu0
  %v342 = vld [vmem:[%s3] sm:$0xff]
  %v343 = vld [vmem:[%s3 + $0x8] sm:$0x1]
  %v344 = vld [vmem:[%s4] sm:$0xff]
  %v345 = vld [vmem:[%s4 + $0x8] sm:$0xff]
  %v346 = vld [vmem:[%s4 + $0x10] sm:$0xff]
  %v347 = vld [vmem:[%s4 + $0x18] sm:$0xff]
  %v348 = vld [vmem:[%s4 + $0x20] sm:$0xff]
  %v349 = vld [vmem:[%s4 + $0x28] sm:$0xff]
  %v350 = vld [vmem:[%s4 + $0x30] sm:$0xff]
  %v351 = vld [vmem:[%s4 + $0x38] sm:$0xff]
  %v352 = vld [vmem:[%s4 + $0x40] sm:$0xff]
  %vm353 = vcmask 588800
  %v355 = vsel %vm353, %v342, 0
  %v358 = vsel %vm353, %v343, 0
  %360 = vmatpush.msra.mxu0 0.0
  %361 = vmatpush.msra.mxu0 0.0
  %362 = vmatpush.msra.mxu0 0.0
  %363 = vmatpush.msra.mxu0 0.0
  %364 = vmatpush.msra.mxu0 0.0
  %365 = vmatpush.msra.mxu0 0.0
  %366 = vmatpush.msra.mxu0 0.0
  %367 = vmatpush.msra.mxu0 %v208
  %368 = vmatpush.msra.mxu0 %v205
  %369 = vmatpush.msra.mxu0 %v202
  %370 = vmatpush.msra.mxu0 %v199
  %371 = vmatpush.msra.mxu0 %v196
  %372 = vmatpush.msra.mxu0 %v193
  %373 = vmatpush.msra.mxu0 %v190
  %374 = vmatpush.msra.mxu0 %v187
  %375 = vmatpush.msra.mxu0 %v184
  %376 = vmatmul.f32.gmra.mxu0 %v355
  %v377 = vpop.f32.mrf.mxu0
  %v378 = vadd.f32 0.0, %v377
  %379 = vmatmul.f32.gmra.mxu0 %v358
  %v380 = vpop.f32.mrf.mxu0
  %v381 = vadd.f32 0.0, %v380
  %382 = vdwg.mxu0
  %383 = vmatpush.msra.mxu0 0.0
  %384 = vmatpush.msra.mxu0 0.0
  %385 = vmatpush.msra.mxu0 0.0
  %386 = vmatpush.msra.mxu0 0.0
  %387 = vmatpush.msra.mxu0 0.0
  %388 = vmatpush.msra.mxu0 0.0
  %389 = vmatpush.msra.mxu0 0.0
  %390 = vmatpush.msra.mxu0 %v252
  %391 = vmatpush.msra.mxu0 %v249
  %392 = vmatpush.msra.mxu0 %v246
  %393 = vmatpush.msra.mxu0 %v243
  %394 = vmatpush.msra.mxu0 %v240
  %395 = vmatpush.msra.mxu0 %v237
  %396 = vmatpush.msra.mxu0 %v234
  %397 = vmatpush.msra.mxu0 %v231
  %398 = vmatpush.msra.mxu0 %v228
  %399 = vmatmul.f32.gmra.mxu0 %v355
  %v400 = vpop.f32.mrf.mxu0
  %v401 = vadd.f32 0.0, %v400
  %402 = vmatmul.f32.gmra.mxu0 %v358
  %v403 = vpop.f32.mrf.mxu0
  %v404 = vadd.f32 0.0, %v403
  %405 = vdwg.mxu0
  %406 = vmatpush.msra.mxu0 0.0
  %407 = vmatpush.msra.mxu0 0.0
  %408 = vmatpush.msra.mxu0 0.0
  %409 = vmatpush.msra.mxu0 0.0
  %410 = vmatpush.msra.mxu0 0.0
  %411 = vmatpush.msra.mxu0 0.0
  %412 = vmatpush.msra.mxu0 0.0
  %413 = vmatpush.msra.mxu0 %v296
  %414 = vmatpush.msra.mxu0 %v293
  %415 = vmatpush.msra.mxu0 %v290
  %416 = vmatpush.msra.mxu0 %v287
  %417 = vmatpush.msra.mxu0 %v284
  %418 = vmatpush.msra.mxu0 %v281
  %419 = vmatpush.msra.mxu0 %v278
  %420 = vmatpush.msra.mxu0 %v275
  %421 = vmatpush.msra.mxu0 %v272
  %422 = vmatmul.f32.gmra.mxu0 %v355
  %v423 = vpop.f32.mrf.mxu0
  %v424 = vadd.f32 0.0, %v423
  %425 = vmatmul.f32.gmra.mxu0 %v358
  %v426 = vpop.f32.mrf.mxu0
  %v427 = vadd.f32 0.0, %v426
  %428 = vdwg.mxu0
  %429 = vmatpush.msra.mxu0 0.0
  %430 = vmatpush.msra.mxu0 0.0
  %431 = vmatpush.msra.mxu0 0.0
  %432 = vmatpush.msra.mxu0 0.0
  %433 = vmatpush.msra.mxu0 0.0
  %434 = vmatpush.msra.mxu0 0.0
  %435 = vmatpush.msra.mxu0 0.0
  %436 = vmatpush.msra.mxu0 %v340
  %437 = vmatpush.msra.mxu0 %v337
  %438 = vmatpush.msra.mxu0 %v334
  %439 = vmatpush.msra.mxu0 %v331
  %440 = vmatpush.msra.mxu0 %v328
  %441 = vmatpush.msra.mxu0 %v325
  %442 = vmatpush.msra.mxu0 %v322
  %443 = vmatpush.msra.mxu0 %v319
  %444 = vmatpush.msra.mxu0 %v316
  %445 = vmatmul.f32.gmra.mxu0 %v355
  %v446 = vpop.f32.mrf.mxu0
  %v447 = vadd.f32 0.0, %v446
  %448 = vmatmul.f32.gmra.mxu0 %v358
  %v449 = vpop.f32.mrf.mxu0
  %v450 = vadd.f32 0.0, %v449
  %451 = vdwg.mxu0
  %v452 = vmul.f32 %v378, 0.125
  %v453 = vmul.f32 %v401, 0.125
  %v454 = vmul.f32 %v424, 0.125
  %v455 = vmul.f32 %v447, 0.125
  %v456 = vmul.f32 %v381, 0.125
  %v457 = vmul.f32 %v404, 0.125
  %v458 = vmul.f32 %v427, 0.125
  %v459 = vmul.f32 %v450, 0.125
  %vm460 = vcmask 72704
  %v462 = vsel %vm460, %v344, 0
  %v465 = vsel %vm460, %v345, 0
  %v468 = vsel %vm460, %v346, 0
  %v471 = vsel %vm460, %v347, 0
  %v474 = vsel %vm460, %v348, 0
  %v477 = vsel %vm460, %v349, 0
  %v480 = vsel %vm460, %v350, 0
  %v483 = vsel %vm460, %v351, 0
  %v486 = vsel %vm460, %v352, 0
  %vm488 = vcmask 1040384
  %v490 = vsel %vm488, %v456, 0
  %v493 = vsel %vm488, %v457, 0
  %v496 = vsel %vm488, %v458, 0
  %v499 = vsel %vm488, %v459, 0
  %501 = vmatpush.msra.mxu0 0.0
  %502 = vmatpush.msra.mxu0 0.0
  %503 = vmatpush.msra.mxu0 0.0
  %504 = vmatpush.msra.mxu0 0.0
  %505 = vmatpush.msra.mxu0 0.0
  %506 = vmatpush.msra.mxu0 0.0
  %507 = vmatpush.msra.mxu0 0.0
  %508 = vmatpush.msra.mxu0 0.0
  %509 = vmatpush.msra.mxu0 0.0
  %510 = vmatpush.msra.mxu0 0.0
  %511 = vmatpush.msra.mxu0 0.0
  %512 = vmatpush.msra.mxu0 0.0
  %513 = vmatpush.msra.mxu0 0.0
  %514 = vmatpush.msra.mxu0 0.0
  %515 = vmatpush.msra.mxu0 %v490
  %516 = vmatpush.msra.mxu0 %v452
  %517 = vmatmul.f32.gmra.mxu0 %v462
  %v518 = vpop.f32.mrf.mxu0
  %v519 = vadd.f32 0.0, %v518
  %520 = vmatmul.f32.gmra.mxu0 %v465
  %v521 = vpop.f32.mrf.mxu0
  %v522 = vadd.f32 0.0, %v521
  %523 = vmatmul.f32.gmra.mxu0 %v468
  %v524 = vpop.f32.mrf.mxu0
  %v525 = vadd.f32 0.0, %v524
  %526 = vmatmul.f32.gmra.mxu0 %v471
  %v527 = vpop.f32.mrf.mxu0
  %v528 = vadd.f32 0.0, %v527
  %529 = vmatmul.f32.gmra.mxu0 %v474
  %v530 = vpop.f32.mrf.mxu0
  %v531 = vadd.f32 0.0, %v530
  %532 = vmatmul.f32.gmra.mxu0 %v477
  %v533 = vpop.f32.mrf.mxu0
  %v534 = vadd.f32 0.0, %v533
  %535 = vmatmul.f32.gmra.mxu0 %v480
  %v536 = vpop.f32.mrf.mxu0
  %v537 = vadd.f32 0.0, %v536
  %538 = vmatmul.f32.gmra.mxu0 %v483
  %v539 = vpop.f32.mrf.mxu0
  %v540 = vadd.f32 0.0, %v539
  %541 = vmatmul.f32.gmra.mxu0 %v486
  %v542 = vpop.f32.mrf.mxu0
  %v543 = vadd.f32 0.0, %v542
  %544 = vdwg.mxu0
  %545 = vmatpush.msra.mxu0 0.0
  %546 = vmatpush.msra.mxu0 0.0
  %547 = vmatpush.msra.mxu0 0.0
  %548 = vmatpush.msra.mxu0 0.0
  %549 = vmatpush.msra.mxu0 0.0
  %550 = vmatpush.msra.mxu0 0.0
  %551 = vmatpush.msra.mxu0 0.0
  %552 = vmatpush.msra.mxu0 0.0
  %553 = vmatpush.msra.mxu0 0.0
  %554 = vmatpush.msra.mxu0 0.0
  %555 = vmatpush.msra.mxu0 0.0
  %556 = vmatpush.msra.mxu0 0.0
  %557 = vmatpush.msra.mxu0 0.0
  %558 = vmatpush.msra.mxu0 0.0
  %559 = vmatpush.msra.mxu0 %v493
  %560 = vmatpush.msra.mxu0 %v453
  %561 = vmatmul.f32.gmra.mxu0 %v462
  %v562 = vpop.f32.mrf.mxu0
  %v563 = vadd.f32 0.0, %v562
  %564 = vmatmul.f32.gmra.mxu0 %v465
  %v565 = vpop.f32.mrf.mxu0
  %v566 = vadd.f32 0.0, %v565
  %567 = vmatmul.f32.gmra.mxu0 %v468
  %v568 = vpop.f32.mrf.mxu0
  %v569 = vadd.f32 0.0, %v568
  %570 = vmatmul.f32.gmra.mxu0 %v471
  %v571 = vpop.f32.mrf.mxu0
  %v572 = vadd.f32 0.0, %v571
  %573 = vmatmul.f32.gmra.mxu0 %v474
  %v574 = vpop.f32.mrf.mxu0
  %v575 = vadd.f32 0.0, %v574
  %576 = vmatmul.f32.gmra.mxu0 %v477
  %v577 = vpop.f32.mrf.mxu0
  %v578 = vadd.f32 0.0, %v577
  %579 = vmatmul.f32.gmra.mxu0 %v480
  %v580 = vpop.f32.mrf.mxu0
  %v581 = vadd.f32 0.0, %v580
  %582 = vmatmul.f32.gmra.mxu0 %v483
  %v583 = vpop.f32.mrf.mxu0
  %v584 = vadd.f32 0.0, %v583
  %585 = vmatmul.f32.gmra.mxu0 %v486
  %v586 = vpop.f32.mrf.mxu0
  %v587 = vadd.f32 0.0, %v586
  %588 = vdwg.mxu0
  %589 = vmatpush.msra.mxu0 0.0
  %590 = vmatpush.msra.mxu0 0.0
  %591 = vmatpush.msra.mxu0 0.0
  %592 = vmatpush.msra.mxu0 0.0
  %593 = vmatpush.msra.mxu0 0.0
  %594 = vmatpush.msra.mxu0 0.0
  %595 = vmatpush.msra.mxu0 0.0
  %596 = vmatpush.msra.mxu0 0.0
  %597 = vmatpush.msra.mxu0 0.0
  %598 = vmatpush.msra.mxu0 0.0
  %599 = vmatpush.msra.mxu0 0.0
  %600 = vmatpush.msra.mxu0 0.0
  %601 = vmatpush.msra.mxu0 0.0
  %602 = vmatpush.msra.mxu0 0.0
  %603 = vmatpush.msra.mxu0 %v496
  %604 = vmatpush.msra.mxu0 %v454
  %605 = vmatmul.f32.gmra.mxu0 %v462
  %v606 = vpop.f32.mrf.mxu0
  %v607 = vadd.f32 0.0, %v606
  %608 = vmatmul.f32.gmra.mxu0 %v465
  %v609 = vpop.f32.mrf.mxu0
  %v610 = vadd.f32 0.0, %v609
  %611 = vmatmul.f32.gmra.mxu0 %v468
  %v612 = vpop.f32.mrf.mxu0
  %v613 = vadd.f32 0.0, %v612
  %614 = vmatmul.f32.gmra.mxu0 %v471
  %v615 = vpop.f32.mrf.mxu0
  %v616 = vadd.f32 0.0, %v615
  %617 = vmatmul.f32.gmra.mxu0 %v474
  %v618 = vpop.f32.mrf.mxu0
  %v619 = vadd.f32 0.0, %v618
  %620 = vmatmul.f32.gmra.mxu0 %v477
  %v621 = vpop.f32.mrf.mxu0
  %v622 = vadd.f32 0.0, %v621
  %623 = vmatmul.f32.gmra.mxu0 %v480
  %v624 = vpop.f32.mrf.mxu0
  %v625 = vadd.f32 0.0, %v624
  %626 = vmatmul.f32.gmra.mxu0 %v483
  %v627 = vpop.f32.mrf.mxu0
  %v628 = vadd.f32 0.0, %v627
  %629 = vmatmul.f32.gmra.mxu0 %v486
  %v630 = vpop.f32.mrf.mxu0
  %v631 = vadd.f32 0.0, %v630
  %632 = vdwg.mxu0
  %633 = vmatpush.msra.mxu0 0.0
  %634 = vmatpush.msra.mxu0 0.0
  %635 = vmatpush.msra.mxu0 0.0
  %636 = vmatpush.msra.mxu0 0.0
  %637 = vmatpush.msra.mxu0 0.0
  %638 = vmatpush.msra.mxu0 0.0
  %639 = vmatpush.msra.mxu0 0.0
  %640 = vmatpush.msra.mxu0 0.0
  %641 = vmatpush.msra.mxu0 0.0
  %642 = vmatpush.msra.mxu0 0.0
  %643 = vmatpush.msra.mxu0 0.0
  %644 = vmatpush.msra.mxu0 0.0
  %645 = vmatpush.msra.mxu0 0.0
  %646 = vmatpush.msra.mxu0 0.0
  %647 = vmatpush.msra.mxu0 %v499
  %648 = vmatpush.msra.mxu0 %v455
  %649 = vmatmul.f32.gmra.mxu0 %v462
  %v650 = vpop.f32.mrf.mxu0
  %v651 = vadd.f32 0.0, %v650
  %652 = vmatmul.f32.gmra.mxu0 %v465
  %v653 = vpop.f32.mrf.mxu0
  %v654 = vadd.f32 0.0, %v653
  %655 = vmatmul.f32.gmra.mxu0 %v468
  %v656 = vpop.f32.mrf.mxu0
  %v657 = vadd.f32 0.0, %v656
  %658 = vmatmul.f32.gmra.mxu0 %v471
  %v659 = vpop.f32.mrf.mxu0
  %v660 = vadd.f32 0.0, %v659
  %661 = vmatmul.f32.gmra.mxu0 %v474
  %v662 = vpop.f32.mrf.mxu0
  %v663 = vadd.f32 0.0, %v662
  %664 = vmatmul.f32.gmra.mxu0 %v477
  %v665 = vpop.f32.mrf.mxu0
  %v666 = vadd.f32 0.0, %v665
  %667 = vmatmul.f32.gmra.mxu0 %v480
  %v668 = vpop.f32.mrf.mxu0
  %v669 = vadd.f32 0.0, %v668
  %670 = vmatmul.f32.gmra.mxu0 %v483
  %v671 = vpop.f32.mrf.mxu0
  %v672 = vadd.f32 0.0, %v671
  %673 = vmatmul.f32.gmra.mxu0 %v486
  %v674 = vpop.f32.mrf.mxu0
  %v675 = vadd.f32 0.0, %v674
  %676 = vdwg.mxu0
  %v677 = vsub.f32 %v184, %v519
  %v678 = vsub.f32 %v228, %v563
  %v679 = vsub.f32 %v272, %v607
  %v680 = vsub.f32 %v316, %v651
  %v681 = vsub.f32 %v187, %v522
  %v682 = vsub.f32 %v231, %v566
  %v683 = vsub.f32 %v275, %v610
  %v684 = vsub.f32 %v319, %v654
  %v685 = vsub.f32 %v190, %v525
  %v686 = vsub.f32 %v234, %v569
  %v687 = vsub.f32 %v278, %v613
  %v688 = vsub.f32 %v322, %v657
  %v689 = vsub.f32 %v193, %v528
  %v690 = vsub.f32 %v237, %v572
  %v691 = vsub.f32 %v281, %v616
  %v692 = vsub.f32 %v325, %v660
  %v693 = vsub.f32 %v196, %v531
  %v694 = vsub.f32 %v240, %v575
  %v695 = vsub.f32 %v284, %v619
  %v696 = vsub.f32 %v328, %v663
  %v697 = vsub.f32 %v199, %v534
  %v698 = vsub.f32 %v243, %v578
  %v699 = vsub.f32 %v287, %v622
  %v700 = vsub.f32 %v331, %v666
  %v701 = vsub.f32 %v202, %v537
  %v702 = vsub.f32 %v246, %v581
  %v703 = vsub.f32 %v290, %v625
  %v704 = vsub.f32 %v334, %v669
  %v705 = vsub.f32 %v205, %v540
  %v706 = vsub.f32 %v249, %v584
  %v707 = vsub.f32 %v293, %v628
  %v708 = vsub.f32 %v337, %v672
  %v709 = vsub.f32 %v208, %v543
  %v710 = vsub.f32 %v252, %v587
  %v711 = vsub.f32 %v296, %v631
  %v712 = vsub.f32 %v340, %v675
  %v713 = vmul.f32 %v677, %v677
  %v714 = vmul.f32 %v678, %v678
  %v715 = vmul.f32 %v679, %v679
  %v716 = vmul.f32 %v680, %v680
  %v717 = vmul.f32 %v681, %v681
  %v718 = vmul.f32 %v682, %v682
  %v719 = vmul.f32 %v683, %v683
  %v720 = vmul.f32 %v684, %v684
  %v721 = vmul.f32 %v685, %v685
  %v722 = vmul.f32 %v686, %v686
  %v723 = vmul.f32 %v687, %v687
  %v724 = vmul.f32 %v688, %v688
  %v725 = vmul.f32 %v689, %v689
  %v726 = vmul.f32 %v690, %v690
  %v727 = vmul.f32 %v691, %v691
  %v728 = vmul.f32 %v692, %v692
  %v729 = vmul.f32 %v693, %v693
  %v730 = vmul.f32 %v694, %v694
  %v731 = vmul.f32 %v695, %v695
  %v732 = vmul.f32 %v696, %v696
  %v733 = vmul.f32 %v697, %v697
  %v734 = vmul.f32 %v698, %v698
  %v735 = vmul.f32 %v699, %v699
  %v736 = vmul.f32 %v700, %v700
  %v737 = vmul.f32 %v701, %v701
  %v738 = vmul.f32 %v702, %v702
  %v739 = vmul.f32 %v703, %v703
  %v740 = vmul.f32 %v704, %v704
  %v741 = vmul.f32 %v705, %v705
  %v742 = vmul.f32 %v706, %v706
  %v743 = vmul.f32 %v707, %v707
  %v744 = vmul.f32 %v708, %v708
  %v745 = vmul.f32 %v709, %v709
  %v746 = vmul.f32 %v710, %v710
  %v747 = vmul.f32 %v711, %v711
  %v748 = vmul.f32 %v712, %v712
  %749 = vmatpush.msra.mxu0 0.0
  %750 = vmatpush.msra.mxu0 0.0
  %751 = vmatpush.msra.mxu0 0.0
  %752 = vmatpush.msra.mxu0 0.0
  %753 = vmatpush.msra.mxu0 0.0
  %754 = vmatpush.msra.mxu0 0.0
  %755 = vmatpush.msra.mxu0 0.0
  %756 = vmatpush.msra.mxu0 %v745
  %757 = vmatpush.msra.mxu0 %v741
  %758 = vmatpush.msra.mxu0 %v737
  %759 = vmatpush.msra.mxu0 %v733
  %760 = vmatpush.msra.mxu0 %v729
  %761 = vmatpush.msra.mxu0 %v725
  %762 = vmatpush.msra.mxu0 %v721
  %763 = vmatpush.msra.mxu0 %v717
  %764 = vmatpush.msra.mxu0 %v713
  %765 = vmatmul.f32.gmra.mxu0 %v355
  %v766 = vpop.f32.mrf.mxu0
  %v767 = vadd.f32 0.0, %v766
  %768 = vmatmul.f32.gmra.mxu0 %v358
  %v769 = vpop.f32.mrf.mxu0
  %v770 = vadd.f32 0.0, %v769
  %771 = vdwg.mxu0
  %772 = vmatpush.msra.mxu0 0.0
  %773 = vmatpush.msra.mxu0 0.0
  %774 = vmatpush.msra.mxu0 0.0
  %775 = vmatpush.msra.mxu0 0.0
  %776 = vmatpush.msra.mxu0 0.0
  %777 = vmatpush.msra.mxu0 0.0
  %778 = vmatpush.msra.mxu0 0.0
  %779 = vmatpush.msra.mxu0 %v746
  %780 = vmatpush.msra.mxu0 %v742
  %781 = vmatpush.msra.mxu0 %v738
  %782 = vmatpush.msra.mxu0 %v734
  %783 = vmatpush.msra.mxu0 %v730
  %784 = vmatpush.msra.mxu0 %v726
  %785 = vmatpush.msra.mxu0 %v722
  %786 = vmatpush.msra.mxu0 %v718
  %787 = vmatpush.msra.mxu0 %v714
  %788 = vmatmul.f32.gmra.mxu0 %v355
  %v789 = vpop.f32.mrf.mxu0
  %v790 = vadd.f32 0.0, %v789
  %791 = vmatmul.f32.gmra.mxu0 %v358
  %v792 = vpop.f32.mrf.mxu0
  %v793 = vadd.f32 0.0, %v792
  %794 = vdwg.mxu0
  %795 = vmatpush.msra.mxu0 0.0
  %796 = vmatpush.msra.mxu0 0.0
  %797 = vmatpush.msra.mxu0 0.0
  %798 = vmatpush.msra.mxu0 0.0
  %799 = vmatpush.msra.mxu0 0.0
  %800 = vmatpush.msra.mxu0 0.0
  %801 = vmatpush.msra.mxu0 0.0
  %802 = vmatpush.msra.mxu0 %v747
  %803 = vmatpush.msra.mxu0 %v743
  %804 = vmatpush.msra.mxu0 %v739
  %805 = vmatpush.msra.mxu0 %v735
  %806 = vmatpush.msra.mxu0 %v731
  %807 = vmatpush.msra.mxu0 %v727
  %808 = vmatpush.msra.mxu0 %v723
  %809 = vmatpush.msra.mxu0 %v719
  %810 = vmatpush.msra.mxu0 %v715
  %811 = vmatmul.f32.gmra.mxu0 %v355
  %v812 = vpop.f32.mrf.mxu0
  %v813 = vadd.f32 0.0, %v812
  %814 = vmatmul.f32.gmra.mxu0 %v358
  %v815 = vpop.f32.mrf.mxu0
  %v816 = vadd.f32 0.0, %v815
  %817 = vdwg.mxu0
  %818 = vmatpush.msra.mxu0 0.0
  %819 = vmatpush.msra.mxu0 0.0
  %820 = vmatpush.msra.mxu0 0.0
  %821 = vmatpush.msra.mxu0 0.0
  %822 = vmatpush.msra.mxu0 0.0
  %823 = vmatpush.msra.mxu0 0.0
  %824 = vmatpush.msra.mxu0 0.0
  %825 = vmatpush.msra.mxu0 %v748
  %826 = vmatpush.msra.mxu0 %v744
  %827 = vmatpush.msra.mxu0 %v740
  %828 = vmatpush.msra.mxu0 %v736
  %829 = vmatpush.msra.mxu0 %v732
  %830 = vmatpush.msra.mxu0 %v728
  %831 = vmatpush.msra.mxu0 %v724
  %832 = vmatpush.msra.mxu0 %v720
  %833 = vmatpush.msra.mxu0 %v716
  %834 = vmatmul.f32.gmra.mxu0 %v355
  %v835 = vpop.f32.mrf.mxu0
  %v836 = vadd.f32 0.0, %v835
  %837 = vmatmul.f32.gmra.mxu0 %v358
  %v838 = vpop.f32.mrf.mxu0
  %v839 = vadd.f32 0.0, %v838
  %840 = vdwg.mxu0
  %v841 = vmul.f32 %v767, 0.125
  %v842 = vmul.f32 %v790, 0.125
  %v843 = vmul.f32 %v813, 0.125
  %v844 = vmul.f32 %v836, 0.125
  %v845 = vmul.f32 %v770, 0.125
  %v846 = vmul.f32 %v793, 0.125
  %v847 = vmul.f32 %v816, 0.125
  %v848 = vmul.f32 %v839, 0.125
  %v849 = vadd.f32 %v841, 1e-05
  %v850 = vadd.f32 %v842, 1e-05
  %v851 = vadd.f32 %v843, 1e-05
  %v852 = vadd.f32 %v844, 1e-05
  %v853 = vadd.f32 %v845, 1e-05
  %v854 = vadd.f32 %v846, 1e-05
  %v855 = vadd.f32 %v847, 1e-05
  %v856 = vadd.f32 %v848, 1e-05
  %v857 = vrsqrt.pop %v849
  %v858 = vmul.f32 %v857, %v849
  %v859 = vmul.f32 %v858, %v857
  %v860 = vmul.f32 0.5, %v859
  %v861 = vsub.f32 1.5, %v860
  %v862 = vmul.f32 %v857, %v861
  %vm863 = vweird.f32 %v849
  %vm864 = vweird.f32 %v857
  %vm865 = vmor %vm863, %vm864
  %v866 = vsel %vm865, %v857, %v862
  %v867 = vrsqrt.pop %v850
  %v868 = vmul.f32 %v867, %v850
  %v869 = vmul.f32 %v868, %v867
  %v870 = vmul.f32 0.5, %v869
  %v871 = vsub.f32 1.5, %v870
  %v872 = vmul.f32 %v867, %v871
  %vm873 = vweird.f32 %v850
  %vm874 = vweird.f32 %v867
  %vm875 = vmor %vm873, %vm874
  %v876 = vsel %vm875, %v867, %v872
  %v877 = vrsqrt.pop %v851
  %v878 = vmul.f32 %v877, %v851
  %v879 = vmul.f32 %v878, %v877
  %v880 = vmul.f32 0.5, %v879
  %v881 = vsub.f32 1.5, %v880
  %v882 = vmul.f32 %v877, %v881
  %vm883 = vweird.f32 %v851
  %vm884 = vweird.f32 %v877
  %vm885 = vmor %vm883, %vm884
  %v886 = vsel %vm885, %v877, %v882
  %v887 = vrsqrt.pop %v852
  %v888 = vmul.f32 %v887, %v852
  %v889 = vmul.f32 %v888, %v887
  %v890 = vmul.f32 0.5, %v889
  %v891 = vsub.f32 1.5, %v890
  %v892 = vmul.f32 %v887, %v891
  %vm893 = vweird.f32 %v852
  %vm894 = vweird.f32 %v887
  %vm895 = vmor %vm893, %vm894
  %v896 = vsel %vm895, %v887, %v892
  %v897 = vrsqrt.pop %v853
  %v898 = vmul.f32 %v897, %v853
  %v899 = vmul.f32 %v898, %v897
  %v900 = vmul.f32 0.5, %v899
  %v901 = vsub.f32 1.5, %v900
  %v902 = vmul.f32 %v897, %v901
  %vm903 = vweird.f32 %v853
  %vm904 = vweird.f32 %v897
  %vm905 = vmor %vm903, %vm904
  %v906 = vsel %vm905, %v897, %v902
  %v907 = vrsqrt.pop %v854
  %v908 = vmul.f32 %v907, %v854
  %v909 = vmul.f32 %v908, %v907
  %v910 = vmul.f32 0.5, %v909
  %v911 = vsub.f32 1.5, %v910
  %v912 = vmul.f32 %v907, %v911
  %vm913 = vweird.f32 %v854
  %vm914 = vweird.f32 %v907
  %vm915 = vmor %vm913, %vm914
  %v916 = vsel %vm915, %v907, %v912
  %v917 = vrsqrt.pop %v855
  %v918 = vmul.f32 %v917, %v855
  %v919 = vmul.f32 %v918, %v917
  %v920 = vmul.f32 0.5, %v919
  %v921 = vsub.f32 1.5, %v920
  %v922 = vmul.f32 %v917, %v921
  %vm923 = vweird.f32 %v855
  %vm924 = vweird.f32 %v917
  %vm925 = vmor %vm923, %vm924
  %v926 = vsel %vm925, %v917, %v922
  %v927 = vrsqrt.pop %v856
  %v928 = vmul.f32 %v927, %v856
  %v929 = vmul.f32 %v928, %v927
  %v930 = vmul.f32 0.5, %v929
  %v931 = vsub.f32 1.5, %v930
  %v932 = vmul.f32 %v927, %v931
  %vm933 = vweird.f32 %v856
  %vm934 = vweird.f32 %v927
  %vm935 = vmor %vm933, %vm934
  %v936 = vsel %vm935, %v927, %v932
  %v938 = vsel %vm488, %v906, 0
  %v941 = vsel %vm488, %v916, 0
  %v944 = vsel %vm488, %v926, 0
  %v947 = vsel %vm488, %v936, 0
  %949 = vmatpush.msra.mxu0 0.0
  %950 = vmatpush.msra.mxu0 0.0
  %951 = vmatpush.msra.mxu0 0.0
  %952 = vmatpush.msra.mxu0 0.0
  %953 = vmatpush.msra.mxu0 0.0
  %954 = vmatpush.msra.mxu0 0.0
  %955 = vmatpush.msra.mxu0 0.0
  %956 = vmatpush.msra.mxu0 0.0
  %957 = vmatpush.msra.mxu0 0.0
  %958 = vmatpush.msra.mxu0 0.0
  %959 = vmatpush.msra.mxu0 0.0
  %960 = vmatpush.msra.mxu0 0.0
  %961 = vmatpush.msra.mxu0 0.0
  %962 = vmatpush.msra.mxu0 0.0
  %963 = vmatpush.msra.mxu0 %v938
  %964 = vmatpush.msra.mxu0 %v866
  %965 = vmatmul.f32.gmra.mxu0 %v462
  %v966 = vpop.f32.mrf.mxu0
  %v967 = vadd.f32 0.0, %v966
  %968 = vmatmul.f32.gmra.mxu0 %v465
  %v969 = vpop.f32.mrf.mxu0
  %v970 = vadd.f32 0.0, %v969
  %971 = vmatmul.f32.gmra.mxu0 %v468
  %v972 = vpop.f32.mrf.mxu0
  %v973 = vadd.f32 0.0, %v972
  %974 = vmatmul.f32.gmra.mxu0 %v471
  %v975 = vpop.f32.mrf.mxu0
  %v976 = vadd.f32 0.0, %v975
  %977 = vmatmul.f32.gmra.mxu0 %v474
  %v978 = vpop.f32.mrf.mxu0
  %v979 = vadd.f32 0.0, %v978
  %980 = vmatmul.f32.gmra.mxu0 %v477
  %v981 = vpop.f32.mrf.mxu0
  %v982 = vadd.f32 0.0, %v981
  %983 = vmatmul.f32.gmra.mxu0 %v480
  %v984 = vpop.f32.mrf.mxu0
  %v985 = vadd.f32 0.0, %v984
  %986 = vmatmul.f32.gmra.mxu0 %v483
  %v987 = vpop.f32.mrf.mxu0
  %v988 = vadd.f32 0.0, %v987
  %989 = vmatmul.f32.gmra.mxu0 %v486
  %v990 = vpop.f32.mrf.mxu0
  %v991 = vadd.f32 0.0, %v990
  %992 = vdwg.mxu0
  %993 = vmatpush.msra.mxu0 0.0
  %994 = vmatpush.msra.mxu0 0.0
  %995 = vmatpush.msra.mxu0 0.0
  %996 = vmatpush.msra.mxu0 0.0
  %997 = vmatpush.msra.mxu0 0.0
  %998 = vmatpush.msra.mxu0 0.0
  %999 = vmatpush.msra.mxu0 0.0
  %1000 = vmatpush.msra.mxu0 0.0
  %1001 = vmatpush.msra.mxu0 0.0
  %1002 = vmatpush.msra.mxu0 0.0
  %1003 = vmatpush.msra.mxu0 0.0
  %1004 = vmatpush.msra.mxu0 0.0
  %1005 = vmatpush.msra.mxu0 0.0
  %1006 = vmatpush.msra.mxu0 0.0
  %1007 = vmatpush.msra.mxu0 %v941
  %1008 = vmatpush.msra.mxu0 %v876
  %1009 = vmatmul.f32.gmra.mxu0 %v462
  %v1010 = vpop.f32.mrf.mxu0
  %v1011 = vadd.f32 0.0, %v1010
  %1012 = vmatmul.f32.gmra.mxu0 %v465
  %v1013 = vpop.f32.mrf.mxu0
  %v1014 = vadd.f32 0.0, %v1013
  %1015 = vmatmul.f32.gmra.mxu0 %v468
  %v1016 = vpop.f32.mrf.mxu0
  %v1017 = vadd.f32 0.0, %v1016
  %1018 = vmatmul.f32.gmra.mxu0 %v471
  %v1019 = vpop.f32.mrf.mxu0
  %v1020 = vadd.f32 0.0, %v1019
  %1021 = vmatmul.f32.gmra.mxu0 %v474
  %v1022 = vpop.f32.mrf.mxu0
  %v1023 = vadd.f32 0.0, %v1022
  %1024 = vmatmul.f32.gmra.mxu0 %v477
  %v1025 = vpop.f32.mrf.mxu0
  %v1026 = vadd.f32 0.0, %v1025
  %1027 = vmatmul.f32.gmra.mxu0 %v480
  %v1028 = vpop.f32.mrf.mxu0
  %v1029 = vadd.f32 0.0, %v1028
  %1030 = vmatmul.f32.gmra.mxu0 %v483
  %v1031 = vpop.f32.mrf.mxu0
  %v1032 = vadd.f32 0.0, %v1031
  %1033 = vmatmul.f32.gmra.mxu0 %v486
  %v1034 = vpop.f32.mrf.mxu0
  %v1035 = vadd.f32 0.0, %v1034
  %1036 = vdwg.mxu0
  %1037 = vmatpush.msra.mxu0 0.0
  %1038 = vmatpush.msra.mxu0 0.0
  %1039 = vmatpush.msra.mxu0 0.0
  %1040 = vmatpush.msra.mxu0 0.0
  %1041 = vmatpush.msra.mxu0 0.0
  %1042 = vmatpush.msra.mxu0 0.0
  %1043 = vmatpush.msra.mxu0 0.0
  %1044 = vmatpush.msra.mxu0 0.0
  %1045 = vmatpush.msra.mxu0 0.0
  %1046 = vmatpush.msra.mxu0 0.0
  %1047 = vmatpush.msra.mxu0 0.0
  %1048 = vmatpush.msra.mxu0 0.0
  %1049 = vmatpush.msra.mxu0 0.0
  %1050 = vmatpush.msra.mxu0 0.0
  %1051 = vmatpush.msra.mxu0 %v944
  %1052 = vmatpush.msra.mxu0 %v886
  %1053 = vmatmul.f32.gmra.mxu0 %v462
  %v1054 = vpop.f32.mrf.mxu0
  %v1055 = vadd.f32 0.0, %v1054
  %1056 = vmatmul.f32.gmra.mxu0 %v465
  %v1057 = vpop.f32.mrf.mxu0
  %v1058 = vadd.f32 0.0, %v1057
  %1059 = vmatmul.f32.gmra.mxu0 %v468
  %v1060 = vpop.f32.mrf.mxu0
  %v1061 = vadd.f32 0.0, %v1060
  %1062 = vmatmul.f32.gmra.mxu0 %v471
  %v1063 = vpop.f32.mrf.mxu0
  %v1064 = vadd.f32 0.0, %v1063
  %1065 = vmatmul.f32.gmra.mxu0 %v474
  %v1066 = vpop.f32.mrf.mxu0
  %v1067 = vadd.f32 0.0, %v1066
  %1068 = vmatmul.f32.gmra.mxu0 %v477
  %v1069 = vpop.f32.mrf.mxu0
  %v1070 = vadd.f32 0.0, %v1069
  %1071 = vmatmul.f32.gmra.mxu0 %v480
  %v1072 = vpop.f32.mrf.mxu0
  %v1073 = vadd.f32 0.0, %v1072
  %1074 = vmatmul.f32.gmra.mxu0 %v483
  %v1075 = vpop.f32.mrf.mxu0
  %v1076 = vadd.f32 0.0, %v1075
  %1077 = vmatmul.f32.gmra.mxu0 %v486
  %v1078 = vpop.f32.mrf.mxu0
  %v1079 = vadd.f32 0.0, %v1078
  %1080 = vdwg.mxu0
  %1081 = vmatpush.msra.mxu0 0.0
  %1082 = vmatpush.msra.mxu0 0.0
  %1083 = vmatpush.msra.mxu0 0.0
  %1084 = vmatpush.msra.mxu0 0.0
  %1085 = vmatpush.msra.mxu0 0.0
  %1086 = vmatpush.msra.mxu0 0.0
  %1087 = vmatpush.msra.mxu0 0.0
  %1088 = vmatpush.msra.mxu0 0.0
  %1089 = vmatpush.msra.mxu0 0.0
  %1090 = vmatpush.msra.mxu0 0.0
  %1091 = vmatpush.msra.mxu0 0.0
  %1092 = vmatpush.msra.mxu0 0.0
  %1093 = vmatpush.msra.mxu0 0.0
  %1094 = vmatpush.msra.mxu0 0.0
  %1095 = vmatpush.msra.mxu0 %v947
  %1096 = vmatpush.msra.mxu0 %v896
  %1097 = vmatmul.f32.gmra.mxu0 %v462
  %v1098 = vpop.f32.mrf.mxu0
  %v1099 = vadd.f32 0.0, %v1098
  %1100 = vmatmul.f32.gmra.mxu0 %v465
  %v1101 = vpop.f32.mrf.mxu0
  %v1102 = vadd.f32 0.0, %v1101
  %1103 = vmatmul.f32.gmra.mxu0 %v468
  %v1104 = vpop.f32.mrf.mxu0
  %v1105 = vadd.f32 0.0, %v1104
  %1106 = vmatmul.f32.gmra.mxu0 %v471
  %v1107 = vpop.f32.mrf.mxu0
  %v1108 = vadd.f32 0.0, %v1107
  %1109 = vmatmul.f32.gmra.mxu0 %v474
  %v1110 = vpop.f32.mrf.mxu0
  %v1111 = vadd.f32 0.0, %v1110
  %1112 = vmatmul.f32.gmra.mxu0 %v477
  %v1113 = vpop.f32.mrf.mxu0
  %v1114 = vadd.f32 0.0, %v1113
  %1115 = vmatmul.f32.gmra.mxu0 %v480
  %v1116 = vpop.f32.mrf.mxu0
  %v1117 = vadd.f32 0.0, %v1116
  %1118 = vmatmul.f32.gmra.mxu0 %v483
  %v1119 = vpop.f32.mrf.mxu0
  %v1120 = vadd.f32 0.0, %v1119
  %1121 = vmatmul.f32.gmra.mxu0 %v486
  %v1122 = vpop.f32.mrf.mxu0
  %v1123 = vadd.f32 0.0, %v1122
  %1124 = vdwg.mxu0
  %v1125 = vmul.f32 %v677, %v967
  %v1126 = vmul.f32 %v678, %v1011
  %v1127 = vmul.f32 %v679, %v1055
  %v1128 = vmul.f32 %v680, %v1099
  %v1129 = vmul.f32 %v681, %v970
  %v1130 = vmul.f32 %v682, %v1014
  %v1131 = vmul.f32 %v683, %v1058
  %v1132 = vmul.f32 %v684, %v1102
  %v1133 = vmul.f32 %v685, %v973
  %v1134 = vmul.f32 %v686, %v1017
  %v1135 = vmul.f32 %v687, %v1061
  %v1136 = vmul.f32 %v688, %v1105
  %v1137 = vmul.f32 %v689, %v976
  %v1138 = vmul.f32 %v690, %v1020
  %v1139 = vmul.f32 %v691, %v1064
  %v1140 = vmul.f32 %v692, %v1108
  %v1141 = vmul.f32 %v693, %v979
  %v1142 = vmul.f32 %v694, %v1023
  %v1143 = vmul.f32 %v695, %v1067
  %v1144 = vmul.f32 %v696, %v1111
  %v1145 = vmul.f32 %v697, %v982
  %v1146 = vmul.f32 %v698, %v1026
  %v1147 = vmul.f32 %v699, %v1070
  %v1148 = vmul.f32 %v700, %v1114
  %v1149 = vmul.f32 %v701, %v985
  %v1150 = vmul.f32 %v702, %v1029
  %v1151 = vmul.f32 %v703, %v1073
  %v1152 = vmul.f32 %v704, %v1117
  %v1153 = vmul.f32 %v705, %v988
  %v1154 = vmul.f32 %v706, %v1032
  %v1155 = vmul.f32 %v707, %v1076
  %v1156 = vmul.f32 %v708, %v1120
  %v1157 = vmul.f32 %v709, %v991
  %v1158 = vmul.f32 %v710, %v1035
  %v1159 = vmul.f32 %v711, %v1079
  %v1160 = vmul.f32 %v712, %v1123
  %1162 = vset.pattern.permute.xlu0 0
  %1163 = vperm.xlu0 %1162, %v32
  %v1164 = vpop.permute.xlu0 %1163
  %1167 = vset.pattern.permute.xlu0 0
  %1168 = vperm.xlu0 %1167, %v33
  %v1169 = vpop.permute.xlu0 %1168
  %1172 = vset.pattern.permute.xlu0 0
  %1173 = vperm.xlu0 %1172, %v34
  %v1174 = vpop.permute.xlu0 %1173
  %1177 = vset.pattern.permute.xlu0 0
  %1178 = vperm.xlu0 %1177, %v35
  %v1179 = vpop.permute.xlu0 %1178
  %1182 = vset.pattern.permute.xlu0 0
  %1183 = vperm.xlu0 %1182, %v36
  %v1184 = vpop.permute.xlu0 %1183
  %1187 = vset.pattern.permute.xlu0 0
  %1188 = vperm.xlu0 %1187, %v37
  %v1189 = vpop.permute.xlu0 %1188
  %1192 = vset.pattern.permute.xlu0 0
  %1193 = vperm.xlu0 %1192, %v38
  %v1194 = vpop.permute.xlu0 %1193
  %1197 = vset.pattern.permute.xlu0 0
  %1198 = vperm.xlu0 %1197, %v39
  %v1199 = vpop.permute.xlu0 %1198
  %1202 = vset.pattern.permute.xlu0 0
  %1203 = vperm.xlu0 %1202, %v40
  %v1204 = vpop.permute.xlu0 %1203
  %v1206 = vmul.f32 %v1125, %v1164
  %v1207 = vmul.f32 %v1126, %v1164
  %v1208 = vmul.f32 %v1127, %v1164
  %v1209 = vmul.f32 %v1128, %v1164
  %v1210 = vmul.f32 %v1129, %v1169
  %v1211 = vmul.f32 %v1130, %v1169
  %v1212 = vmul.f32 %v1131, %v1169
  %v1213 = vmul.f32 %v1132, %v1169
  %v1214 = vmul.f32 %v1133, %v1174
  %v1215 = vmul.f32 %v1134, %v1174
  %v1216 = vmul.f32 %v1135, %v1174
  %v1217 = vmul.f32 %v1136, %v1174
  %v1218 = vmul.f32 %v1137, %v1179
  %v1219 = vmul.f32 %v1138, %v1179
  %v1220 = vmul.f32 %v1139, %v1179
  %v1221 = vmul.f32 %v1140, %v1179
  %v1222 = vmul.f32 %v1141, %v1184
  %v1223 = vmul.f32 %v1142, %v1184
  %v1224 = vmul.f32 %v1143, %v1184
  %v1225 = vmul.f32 %v1144, %v1184
  %v1226 = vmul.f32 %v1145, %v1189
  %v1227 = vmul.f32 %v1146, %v1189
  %v1228 = vmul.f32 %v1147, %v1189
  %v1229 = vmul.f32 %v1148, %v1189
  %v1230 = vmul.f32 %v1149, %v1194
  %v1231 = vmul.f32 %v1150, %v1194
  %v1232 = vmul.f32 %v1151, %v1194
  %v1233 = vmul.f32 %v1152, %v1194
  %v1234 = vmul.f32 %v1153, %v1199
  %v1235 = vmul.f32 %v1154, %v1199
  %v1236 = vmul.f32 %v1155, %v1199
  %v1237 = vmul.f32 %v1156, %v1199
  %v1238 = vmul.f32 %v1157, %v1204
  %v1239 = vmul.f32 %v1158, %v1204
  %v1240 = vmul.f32 %v1159, %v1204
  %v1241 = vmul.f32 %v1160, %v1204
  %1243 = vset.pattern.permute.xlu0 0
  %1244 = vperm.xlu0 %1243, %v41
  %v1245 = vpop.permute.xlu0 %1244
  %1248 = vset.pattern.permute.xlu0 0
  %1249 = vperm.xlu0 %1248, %v42
  %v1250 = vpop.permute.xlu0 %1249
  %1253 = vset.pattern.permute.xlu0 0
  %1254 = vperm.xlu0 %1253, %v43
  %v1255 = vpop.permute.xlu0 %1254
  %1258 = vset.pattern.permute.xlu0 0
  %1259 = vperm.xlu0 %1258, %v44
  %v1260 = vpop.permute.xlu0 %1259
  %1263 = vset.pattern.permute.xlu0 0
  %1264 = vperm.xlu0 %1263, %v45
  %v1265 = vpop.permute.xlu0 %1264
  %1268 = vset.pattern.permute.xlu0 0
  %1269 = vperm.xlu0 %1268, %v46
  %v1270 = vpop.permute.xlu0 %1269
  %1273 = vset.pattern.permute.xlu0 0
  %1274 = vperm.xlu0 %1273, %v47
  %v1275 = vpop.permute.xlu0 %1274
  %1278 = vset.pattern.permute.xlu0 0
  %1279 = vperm.xlu0 %1278, %v48
  %v1280 = vpop.permute.xlu0 %1279
  %1283 = vset.pattern.permute.xlu0 0
  %1284 = vperm.xlu0 %1283, %v49
  %v1285 = vpop.permute.xlu0 %1284
  %v1287 = vadd.f32 %v1206, %v1245
  %v1288 = vadd.f32 %v1207, %v1245
  %v1289 = vadd.f32 %v1208, %v1245
  %v1290 = vadd.f32 %v1209, %v1245
  %v1291 = vadd.f32 %v1210, %v1250
  %v1292 = vadd.f32 %v1211, %v1250
  %v1293 = vadd.f32 %v1212, %v1250
  %v1294 = vadd.f32 %v1213, %v1250
  %v1295 = vadd.f32 %v1214, %v1255
  %v1296 = vadd.f32 %v1215, %v1255
  %v1297 = vadd.f32 %v1216, %v1255
  %v1298 = vadd.f32 %v1217, %v1255
  %v1299 = vadd.f32 %v1218, %v1260
  %v1300 = vadd.f32 %v1219, %v1260
  %v1301 = vadd.f32 %v1220, %v1260
  %v1302 = vadd.f32 %v1221, %v1260
  %v1303 = vadd.f32 %v1222, %v1265
  %v1304 = vadd.f32 %v1223, %v1265
  %v1305 = vadd.f32 %v1224, %v1265
  %v1306 = vadd.f32 %v1225, %v1265
  %v1307 = vadd.f32 %v1226, %v1270
  %v1308 = vadd.f32 %v1227, %v1270
  %v1309 = vadd.f32 %v1228, %v1270
  %v1310 = vadd.f32 %v1229, %v1270
  %v1311 = vadd.f32 %v1230, %v1275
  %v1312 = vadd.f32 %v1231, %v1275
  %v1313 = vadd.f32 %v1232, %v1275
  %v1314 = vadd.f32 %v1233, %v1275
  %v1315 = vadd.f32 %v1234, %v1280
  %v1316 = vadd.f32 %v1235, %v1280
  %v1317 = vadd.f32 %v1236, %v1280
  %v1318 = vadd.f32 %v1237, %v1280
  %v1319 = vadd.f32 %v1238, %v1285
  %v1320 = vadd.f32 %v1239, %v1285
  %v1321 = vadd.f32 %v1240, %v1285
  %v1322 = vadd.f32 %v1241, %v1285
  %v1323 = vld [vmem:[%s2] sm:$0xff]
  %1325 = vset.pattern.permute.xlu0 0
  %1326 = vperm.xlu0 %1325, %v50
  %v1327 = vpop.permute.xlu0 %1326
  %v1330 = vsel %vm353, %v1323, 0
  %1332 = vmatpush.msra.mxu0 0.0
  %1333 = vmatpush.msra.mxu0 0.0
  %1334 = vmatpush.msra.mxu0 0.0
  %1335 = vmatpush.msra.mxu0 0.0
  %1336 = vmatpush.msra.mxu0 0.0
  %1337 = vmatpush.msra.mxu0 0.0
  %1338 = vmatpush.msra.mxu0 0.0
  %1339 = vmatpush.msra.mxu0 %v1319
  %1340 = vmatpush.msra.mxu0 %v1315
  %1341 = vmatpush.msra.mxu0 %v1311
  %1342 = vmatpush.msra.mxu0 %v1307
  %1343 = vmatpush.msra.mxu0 %v1303
  %1344 = vmatpush.msra.mxu0 %v1299
  %1345 = vmatpush.msra.mxu0 %v1295
  %1346 = vmatpush.msra.mxu0 %v1291
  %1347 = vmatpush.msra.mxu0 %v1287
  %1348 = vmatmul.f32.gmra.mxu0 %v1330
  %v1349 = vpop.f32.mrf.mxu0
  %v1350 = vadd.f32 %v1327, %v1349
  %1351 = vdwg.mxu0
  %1352 = vmatpush.msra.mxu0 0.0
  %1353 = vmatpush.msra.mxu0 0.0
  %1354 = vmatpush.msra.mxu0 0.0
  %1355 = vmatpush.msra.mxu0 0.0
  %1356 = vmatpush.msra.mxu0 0.0
  %1357 = vmatpush.msra.mxu0 0.0
  %1358 = vmatpush.msra.mxu0 0.0
  %1359 = vmatpush.msra.mxu0 %v1320
  %1360 = vmatpush.msra.mxu0 %v1316
  %1361 = vmatpush.msra.mxu0 %v1312
  %1362 = vmatpush.msra.mxu0 %v1308
  %1363 = vmatpush.msra.mxu0 %v1304
  %1364 = vmatpush.msra.mxu0 %v1300
  %1365 = vmatpush.msra.mxu0 %v1296
  %1366 = vmatpush.msra.mxu0 %v1292
  %1367 = vmatpush.msra.mxu0 %v1288
  %1368 = vmatmul.f32.gmra.mxu0 %v1330
  %v1369 = vpop.f32.mrf.mxu0
  %v1370 = vadd.f32 %v1327, %v1369
  %1371 = vdwg.mxu0
  %1372 = vmatpush.msra.mxu0 0.0
  %1373 = vmatpush.msra.mxu0 0.0
  %1374 = vmatpush.msra.mxu0 0.0
  %1375 = vmatpush.msra.mxu0 0.0
  %1376 = vmatpush.msra.mxu0 0.0
  %1377 = vmatpush.msra.mxu0 0.0
  %1378 = vmatpush.msra.mxu0 0.0
  %1379 = vmatpush.msra.mxu0 %v1321
  %1380 = vmatpush.msra.mxu0 %v1317
  %1381 = vmatpush.msra.mxu0 %v1313
  %1382 = vmatpush.msra.mxu0 %v1309
  %1383 = vmatpush.msra.mxu0 %v1305
  %1384 = vmatpush.msra.mxu0 %v1301
  %1385 = vmatpush.msra.mxu0 %v1297
  %1386 = vmatpush.msra.mxu0 %v1293
  %1387 = vmatpush.msra.mxu0 %v1289
  %1388 = vmatmul.f32.gmra.mxu0 %v1330
  %v1389 = vpop.f32.mrf.mxu0
  %v1390 = vadd.f32 %v1327, %v1389
  %1391 = vdwg.mxu0
  %1392 = vmatpush.msra.mxu0 0.0
  %1393 = vmatpush.msra.mxu0 0.0
  %1394 = vmatpush.msra.mxu0 0.0
  %1395 = vmatpush.msra.mxu0 0.0
  %1396 = vmatpush.msra.mxu0 0.0
  %1397 = vmatpush.msra.mxu0 0.0
  %1398 = vmatpush.msra.mxu0 0.0
  %1399 = vmatpush.msra.mxu0 %v1322
  %1400 = vmatpush.msra.mxu0 %v1318
  %1401 = vmatpush.msra.mxu0 %v1314
  %1402 = vmatpush.msra.mxu0 %v1310
  %1403 = vmatpush.msra.mxu0 %v1306
  %1404 = vmatpush.msra.mxu0 %v1302
  %1405 = vmatpush.msra.mxu0 %v1298
  %1406 = vmatpush.msra.mxu0 %v1294
  %1407 = vmatpush.msra.mxu0 %v1290
  %1408 = vmatmul.f32.gmra.mxu0 %v1330
  %v1409 = vpop.f32.mrf.mxu0
  %v1410 = vadd.f32 %v1327, %v1409
  %1411 = vdwg.mxu0
  %1412 = vst [vmem:[%s6] sm:$0xff] %v1350
  %1413 = vst [vmem:[%s6 + $0x8] sm:$0xff] %v1370
  %1414 = vst [vmem:[%s6 + $0x10] sm:$0xff] %v1390
  %1415 = vst [vmem:[%s6 + $0x18] sm:$0xff] %v1410
  // Predicated region
  $region26: #{paradis_forward.12} parent=0 // pred_check
    _
  $region27: #{paradis_forward.12} parent=0 // pred_check_branch
    %1417 = sbr.rel (0) target = $region29
  $region28: #{paradis_forward.12} parent=0 // pred_region
    _
  $region29: #{paradis_forward.12} parent=0 // pred_fallthru
    _
  // Predicated region
  $region30: #{paradis_forward.12} parent=0 // pred_check
    _
  $region31: #{paradis_forward.12} parent=0 // pred_check_branch
    %1419 = sbr.rel (0) target = $region33
  $region32: #{paradis_forward.12} parent=0 // pred_region
    _
  $region33: #{paradis_forward.12} parent=0 // pred_fallthru
    _

// kernel: paradis_forward.13
$region0: #{paradis_forward.13}
  #allocation0 [shape = 'u32[]', space=smem, size = 0x4, offset = 0x4, fixed_abs, tag = 'smem constant byte address 0x4 - core index']
  #allocation1 [shape = 'u32[72,128]{1,0:T(1,128)}', space=vmem, size = 0x9000, scoped, tag = 'internal scratch']
  %s0 = inlined_call_operand.vmem [shape: f32[72,512], index: 0, kind: input, shape index: {}]
  %s1 = inlined_call_operand.vmem [shape: f32[8,512], index: 1, kind: input, shape index: {}, may-alias: {1,4}]
  %s2 = inlined_call_operand.vmem [shape: f32[8,72], index: 2, kind: input, shape index: {}]
  %s3 = inlined_call_operand.vmem [shape: f32[8,1], index: 3, kind: input, shape index: {}]
  %s4 = inlined_call_operand.vmem [shape: f32[8,512], index: 4, kind: output, shape index: {}, may-alias: {1,4}]
  %s5 = sld [smem:[#allocation0]]
  $region26: #{paradis_forward.13} parent=0
    _
  %s7 = ssub.s32 1, %s5
  %s8 = scalar_select 0, %s7, %s5
  // Predicated region
  $region2: #{paradis_forward.13} parent=0 // pred_check
    _
  $region3: #{paradis_forward.13} parent=0 // pred_check_branch
    %10 = sbr.rel (0) target = $region5
  $region4: #{paradis_forward.13} parent=0 // pred_region
    _
  $region5: #{paradis_forward.13} parent=0 // pred_fallthru
    _
  // Predicated region
  $region6: #{paradis_forward.13} parent=0 // pred_check
    _
  $region7: #{paradis_forward.13} parent=0 // pred_check_branch
    %12 = sbr.rel (0) target = $region9
  $region8: #{paradis_forward.13} parent=0 // pred_region
    _
  $region9: #{paradis_forward.13} parent=0 // pred_fallthru
    _
  // Predicated region
  $region10: #{paradis_forward.13} parent=0 // pred_check
    _
  $region11: #{paradis_forward.13} parent=0 // pred_check_branch
    %14 = sbr.rel (0) target = $region13
  $region12: #{paradis_forward.13} parent=0 // pred_region
    _
  $region13: #{paradis_forward.13} parent=0 // pred_fallthru
    _
  // Predicated region
  $region14: #{paradis_forward.13} parent=0 // pred_check
    _
  $region15: #{paradis_forward.13} parent=0 // pred_check_branch
    %16 = sbr.rel (0) target = $region17
  $region16: #{paradis_forward.13} parent=0 // pred_region
    _
  $region17: #{paradis_forward.13} parent=0 // pred_fallthru
    _
  %v17 = vld [vmem:[%s1] sm:$0xff]
  %v18 = vld [vmem:[%s1 + $0x8] sm:$0xff]
  %v19 = vld [vmem:[%s1 + $0x10] sm:$0xff]
  %v20 = vld [vmem:[%s1 + $0x18] sm:$0xff]
  %v21 = vld [vmem:[%s2] sm:$0xff]
  %v22 = vld [vmem:[%s0] sm:$0xff]
  %v23 = vld [vmem:[%s0 + $0x8] sm:$0xff]
  %v24 = vld [vmem:[%s0 + $0x10] sm:$0xff]
  %v25 = vld [vmem:[%s0 + $0x18] sm:$0xff]
  %v26 = vld [vmem:[%s0 + $0x20] sm:$0xff]
  %v27 = vld [vmem:[%s0 + $0x28] sm:$0xff]
  %v28 = vld [vmem:[%s0 + $0x30] sm:$0xff]
  %v29 = vld [vmem:[%s0 + $0x38] sm:$0xff]
  %v30 = vld [vmem:[%s0 + $0x40] sm:$0xff]
  %v31 = vld [vmem:[%s0 + $0x48] sm:$0xff]
  %v32 = vld [vmem:[%s0 + $0x50] sm:$0xff]
  %v33 = vld [vmem:[%s0 + $0x58] sm:$0xff]
  %v34 = vld [vmem:[%s0 + $0x60] sm:$0xff]
  %v35 = vld [vmem:[%s0 + $0x68] sm:$0xff]
  %v36 = vld [vmem:[%s0 + $0x70] sm:$0xff]
  %v37 = vld [vmem:[%s0 + $0x78] sm:$0xff]
  %v38 = vld [vmem:[%s0 + $0x80] sm:$0xff]
  %v39 = vld [vmem:[%s0 + $0x88] sm:$0xff]
  %v40 = vld [vmem:[%s0 + $0x90] sm:$0xff]
  %v41 = vld [vmem:[%s0 + $0x98] sm:$0xff]
  %v42 = vld [vmem:[%s0 + $0xa0] sm:$0xff]
  %v43 = vld [vmem:[%s0 + $0xa8] sm:$0xff]
  %v44 = vld [vmem:[%s0 + $0xb0] sm:$0xff]
  %v45 = vld [vmem:[%s0 + $0xb8] sm:$0xff]
  %v46 = vld [vmem:[%s0 + $0xc0] sm:$0xff]
  %v47 = vld [vmem:[%s0 + $0xc8] sm:$0xff]
  %v48 = vld [vmem:[%s0 + $0xd0] sm:$0xff]
  %v49 = vld [vmem:[%s0 + $0xd8] sm:$0xff]
  %v50 = vld [vmem:[%s0 + $0xe0] sm:$0xff]
  %v51 = vld [vmem:[%s0 + $0xe8] sm:$0xff]
  %v52 = vld [vmem:[%s0 + $0xf0] sm:$0xff]
  %v53 = vld [vmem:[%s0 + $0xf8] sm:$0xff]
  %v54 = vld [vmem:[%s0 + $0x100] sm:$0xff]
  %v55 = vld [vmem:[%s0 + $0x108] sm:$0xff]
  %v56 = vld [vmem:[%s0 + $0x110] sm:$0xff]
  %v57 = vld [vmem:[%s0 + $0x118] sm:$0xff]
  %v58 = vld [vmem:[%s3] sm:$0xff]
  %60 = vset.pattern.permute.xlu0 0
  %61 = vperm.xlu0 %60, %v58
  %v62 = vpop.permute.xlu0 %61
  %vm64 = vcmask 588800
  %v66 = vsel %vm64, %v21, 0
  %68 = vmatpush.msra.mxu0 0.0
  %69 = vmatpush.msra.mxu0 0.0
  %70 = vmatpush.msra.mxu0 0.0
  %71 = vmatpush.msra.mxu0 0.0
  %72 = vmatpush.msra.mxu0 0.0
  %73 = vmatpush.msra.mxu0 0.0
  %74 = vmatpush.msra.mxu0 0.0
  %75 = vmatpush.msra.mxu0 %v54
  %76 = vmatpush.msra.mxu0 %v50
  %77 = vmatpush.msra.mxu0 %v46
  %78 = vmatpush.msra.mxu0 %v42
  %79 = vmatpush.msra.mxu0 %v38
  %80 = vmatpush.msra.mxu0 %v34
  %81 = vmatpush.msra.mxu0 %v30
  %82 = vmatpush.msra.mxu0 %v26
  %83 = vmatpush.msra.mxu0 %v22
  %84 = vmatmul.f32.gmra.mxu0 %v66
  %v85 = vpop.f32.mrf.mxu0
  %v86 = vadd.f32 %v62, %v85
  %87 = vdwg.mxu0
  %88 = vmatpush.msra.mxu0 0.0
  %89 = vmatpush.msra.mxu0 0.0
  %90 = vmatpush.msra.mxu0 0.0
  %91 = vmatpush.msra.mxu0 0.0
  %92 = vmatpush.msra.mxu0 0.0
  %93 = vmatpush.msra.mxu0 0.0
  %94 = vmatpush.msra.mxu0 0.0
  %95 = vmatpush.msra.mxu0 %v55
  %96 = vmatpush.msra.mxu0 %v51
  %97 = vmatpush.msra.mxu0 %v47
  %98 = vmatpush.msra.mxu0 %v43
  %99 = vmatpush.msra.mxu0 %v39
  %100 = vmatpush.msra.mxu0 %v35
  %101 = vmatpush.msra.mxu0 %v31
  %102 = vmatpush.msra.mxu0 %v27
  %103 = vmatpush.msra.mxu0 %v23
  %104 = vmatmul.f32.gmra.mxu0 %v66
  %v105 = vpop.f32.mrf.mxu0
  %v106 = vadd.f32 %v62, %v105
  %107 = vdwg.mxu0
  %108 = vmatpush.msra.mxu0 0.0
  %109 = vmatpush.msra.mxu0 0.0
  %110 = vmatpush.msra.mxu0 0.0
  %111 = vmatpush.msra.mxu0 0.0
  %112 = vmatpush.msra.mxu0 0.0
  %113 = vmatpush.msra.mxu0 0.0
  %114 = vmatpush.msra.mxu0 0.0
  %115 = vmatpush.msra.mxu0 %v56
  %116 = vmatpush.msra.mxu0 %v52
  %117 = vmatpush.msra.mxu0 %v48
  %118 = vmatpush.msra.mxu0 %v44
  %119 = vmatpush.msra.mxu0 %v40
  %120 = vmatpush.msra.mxu0 %v36
  %121 = vmatpush.msra.mxu0 %v32
  %122 = vmatpush.msra.mxu0 %v28
  %123 = vmatpush.msra.mxu0 %v24
  %124 = vmatmul.f32.gmra.mxu0 %v66
  %v125 = vpop.f32.mrf.mxu0
  %v126 = vadd.f32 %v62, %v125
  %127 = vdwg.mxu0
  %128 = vmatpush.msra.mxu0 0.0
  %129 = vmatpush.msra.mxu0 0.0
  %130 = vmatpush.msra.mxu0 0.0
  %131 = vmatpush.msra.mxu0 0.0
  %132 = vmatpush.msra.mxu0 0.0
  %133 = vmatpush.msra.mxu0 0.0
  %134 = vmatpush.msra.mxu0 0.0
  %135 = vmatpush.msra.mxu0 %v57
  %136 = vmatpush.msra.mxu0 %v53
  %137 = vmatpush.msra.mxu0 %v49
  %138 = vmatpush.msra.mxu0 %v45
  %139 = vmatpush.msra.mxu0 %v41
  %140 = vmatpush.msra.mxu0 %v37
  %141 = vmatpush.msra.mxu0 %v33
  %142 = vmatpush.msra.mxu0 %v29
  %143 = vmatpush.msra.mxu0 %v25
  %144 = vmatmul.f32.gmra.mxu0 %v66
  %v145 = vpop.f32.mrf.mxu0
  %v146 = vadd.f32 %v62, %v145
  %147 = vdwg.mxu0
  %v148 = vmul.f32 %v86, 0.0049368357
  %v149 = vmul.f32 %v106, 0.0049368357
  %v150 = vmul.f32 %v126, 0.0049368357
  %v151 = vmul.f32 %v146, 0.0049368357
  %v152 = vadd.f32 %v17, %v148
  %v153 = vadd.f32 %v18, %v149
  %v154 = vadd.f32 %v19, %v150
  %v155 = vadd.f32 %v20, %v151
  %156 = vst [vmem:[%s4] sm:$0xff] %v152
  %157 = vst [vmem:[%s4 + $0x8] sm:$0xff] %v153
  %158 = vst [vmem:[%s4 + $0x10] sm:$0xff] %v154
  %159 = vst [vmem:[%s4 + $0x18] sm:$0xff] %v155
  // Predicated region
  $region18: #{paradis_forward.13} parent=0 // pred_check
    _
  $region19: #{paradis_forward.13} parent=0 // pred_check_branch
    %161 = sbr.rel (0) target = $region21
  $region20: #{paradis_forward.13} parent=0 // pred_region
    _
  $region21: #{paradis_forward.13} parent=0 // pred_fallthru
    _
  // Predicated region
  $region22: #{paradis_forward.13} parent=0 // pred_check
    _
  $region23: #{paradis_forward.13} parent=0 // pred_check_branch
    %163 = sbr.rel (0) target = $region25
  $region24: #{paradis_forward.13} parent=0 // pred_region
    _
  $region25: #{paradis_forward.13} parent=0 // pred_fallthru
    _

// kernel: paradis_forward.17
$region0: #{paradis_forward.17}
  #allocation0 [shape = 'u32[]', space=smem, size = 0x4, offset = 0x4, fixed_abs, tag = 'smem constant byte address 0x4 - core index']
  #allocation1 [shape = 'u32[72,128]{1,0:T(1,128)}', space=vmem, size = 0x9000, scoped, tag = 'internal scratch']
  %s0 = inlined_call_operand.vmem [shape: f32[72,512], index: 0, kind: input, shape index: {}]
  %s1 = inlined_call_operand.vmem [shape: f32[4,512], index: 1, kind: input, shape index: {}, may-alias: {1,4}]
  %s2 = inlined_call_operand.vmem [shape: f32[4,72], index: 2, kind: input, shape index: {}]
  %s3 = inlined_call_operand.vmem [shape: f32[4,1], index: 3, kind: input, shape index: {}]
  %s4 = inlined_call_operand.vmem [shape: f32[4,512], index: 4, kind: output, shape index: {}, may-alias: {1,4}]
  %s5 = sld [smem:[#allocation0]]
  $region26: #{paradis_forward.17} parent=0
    _
  %s7 = ssub.s32 1, %s5
  %s8 = scalar_select 0, %s7, %s5
  // Predicated region
  $region2: #{paradis_forward.17} parent=0 // pred_check
    _
  $region3: #{paradis_forward.17} parent=0 // pred_check_branch
    %10 = sbr.rel (0) target = $region5
  $region4: #{paradis_forward.17} parent=0 // pred_region
    _
  $region5: #{paradis_forward.17} parent=0 // pred_fallthru
    _
  // Predicated region
  $region6: #{paradis_forward.17} parent=0 // pred_check
    _
  $region7: #{paradis_forward.17} parent=0 // pred_check_branch
    %12 = sbr.rel (0) target = $region9
  $region8: #{paradis_forward.17} parent=0 // pred_region
    _
  $region9: #{paradis_forward.17} parent=0 // pred_fallthru
    _
  // Predicated region
  $region10: #{paradis_forward.17} parent=0 // pred_check
    _
  $region11: #{paradis_forward.17} parent=0 // pred_check_branch
    %14 = sbr.rel (0) target = $region13
  $region12: #{paradis_forward.17} parent=0 // pred_region
    _
  $region13: #{paradis_forward.17} parent=0 // pred_fallthru
    _
  // Predicated region
  $region14: #{paradis_forward.17} parent=0 // pred_check
    _
  $region15: #{paradis_forward.17} parent=0 // pred_check_branch
    %16 = sbr.rel (0) target = $region17
  $region16: #{paradis_forward.17} parent=0 // pred_region
    _
  $region17: #{paradis_forward.17} parent=0 // pred_fallthru
    _
  %v17 = vld [vmem:[%s1] sm:$0xff]
  %v18 = vld [vmem:[%s1 + $0x8] sm:$0xff]
  %v19 = vld [vmem:[%s2] sm:$0xf]
  %v20 = vld [vmem:[%s0] sm:$0xff]
  %v21 = vld [vmem:[%s0 + $0x8] sm:$0xff]
  %v22 = vld [vmem:[%s0 + $0x10] sm:$0xff]
  %v23 = vld [vmem:[%s0 + $0x18] sm:$0xff]
  %v24 = vld [vmem:[%s0 + $0x20] sm:$0xff]
  %v25 = vld [vmem:[%s0 + $0x28] sm:$0xff]
  %v26 = vld [vmem:[%s0 + $0x30] sm:$0xff]
  %v27 = vld [vmem:[%s0 + $0x38] sm:$0xff]
  %v28 = vld [vmem:[%s0 + $0x40] sm:$0xff]
  %v29 = vld [vmem:[%s0 + $0x48] sm:$0xff]
  %v30 = vld [vmem:[%s0 + $0x50] sm:$0xff]
  %v31 = vld [vmem:[%s0 + $0x58] sm:$0xff]
  %v32 = vld [vmem:[%s0 + $0x60] sm:$0xff]
  %v33 = vld [vmem:[%s0 + $0x68] sm:$0xff]
  %v34 = vld [vmem:[%s0 + $0x70] sm:$0xff]
  %v35 = vld [vmem:[%s0 + $0x78] sm:$0xff]
  %v36 = vld [vmem:[%s0 + $0x80] sm:$0xff]
  %v37 = vld [vmem:[%s0 + $0x88] sm:$0xff]
  %v38 = vld [vmem:[%s0 + $0x90] sm:$0xff]
  %v39 = vld [vmem:[%s0 + $0x98] sm:$0xff]
  %v40 = vld [vmem:[%s0 + $0xa0] sm:$0xff]
  %v41 = vld [vmem:[%s0 + $0xa8] sm:$0xff]
  %v42 = vld [vmem:[%s0 + $0xb0] sm:$0xff]
  %v43 = vld [vmem:[%s0 + $0xb8] sm:$0xff]
  %v44 = vld [vmem:[%s0 + $0xc0] sm:$0xff]
  %v45 = vld [vmem:[%s0 + $0xc8] sm:$0xff]
  %v46 = vld [vmem:[%s0 + $0xd0] sm:$0xff]
  %v47 = vld [vmem:[%s0 + $0xd8] sm:$0xff]
  %v48 = vld [vmem:[%s0 + $0xe0] sm:$0xff]
  %v49 = vld [vmem:[%s0 + $0xe8] sm:$0xff]
  %v50 = vld [vmem:[%s0 + $0xf0] sm:$0xff]
  %v51 = vld [vmem:[%s0 + $0xf8] sm:$0xff]
  %v52 = vld [vmem:[%s0 + $0x100] sm:$0xff]
  %v53 = vld [vmem:[%s0 + $0x108] sm:$0xff]
  %v54 = vld [vmem:[%s0 + $0x110] sm:$0xff]
  %v55 = vld [vmem:[%s0 + $0x118] sm:$0xff]
  %v56 = vld [vmem:[%s3] sm:$0xf]
  %58 = vset.pattern.permute.xlu0 0
  %59 = vperm.xlu0 %58, %v56
  %v60 = vpop.permute.xlu0 %59
  %vm62 = vcmask 588800
  %v64 = vsel %vm62, %v19, 0
  %66 = vmatpush.msra.mxu0 0.0
  %67 = vmatpush.msra.mxu0 0.0
  %68 = vmatpush.msra.mxu0 0.0
  %69 = vmatpush.msra.mxu0 0.0
  %70 = vmatpush.msra.mxu0 0.0
  %71 = vmatpush.msra.mxu0 0.0
  %72 = vmatpush.msra.mxu0 0.0
  %73 = vmatpush.msra.mxu0 %v52
  %74 = vmatpush.msra.mxu0 %v48
  %75 = vmatpush.msra.mxu0 %v44
  %76 = vmatpush.msra.mxu0 %v40
  %77 = vmatpush.msra.mxu0 %v36
  %78 = vmatpush.msra.mxu0 %v32
  %79 = vmatpush.msra.mxu0 %v28
  %80 = vmatpush.msra.mxu0 %v24
  %81 = vmatpush.msra.mxu0 %v20
  %82 = vmatmul.f32.gmra.mxu0 %v64
  %v83 = vpop.f32.mrf.mxu0
  %v84 = vadd.f32 %v60, %v83
  %85 = vdwg.mxu0
  %86 = vmatpush.msra.mxu0 0.0
  %87 = vmatpush.msra.mxu0 0.0
  %88 = vmatpush.msra.mxu0 0.0
  %89 = vmatpush.msra.mxu0 0.0
  %90 = vmatpush.msra.mxu0 0.0
  %91 = vmatpush.msra.mxu0 0.0
  %92 = vmatpush.msra.mxu0 0.0
  %93 = vmatpush.msra.mxu0 %v53
  %94 = vmatpush.msra.mxu0 %v49
  %95 = vmatpush.msra.mxu0 %v45
  %96 = vmatpush.msra.mxu0 %v41
  %97 = vmatpush.msra.mxu0 %v37
  %98 = vmatpush.msra.mxu0 %v33
  %99 = vmatpush.msra.mxu0 %v29
  %100 = vmatpush.msra.mxu0 %v25
  %101 = vmatpush.msra.mxu0 %v21
  %102 = vmatmul.f32.gmra.mxu0 %v64
  %v103 = vpop.f32.mrf.mxu0
  %v104 = vadd.f32 %v60, %v103
  %105 = vdwg.mxu0
  %106 = vmatpush.msra.mxu0 0.0
  %107 = vmatpush.msra.mxu0 0.0
  %108 = vmatpush.msra.mxu0 0.0
  %109 = vmatpush.msra.mxu0 0.0
  %110 = vmatpush.msra.mxu0 0.0
  %111 = vmatpush.msra.mxu0 0.0
  %112 = vmatpush.msra.mxu0 0.0
  %113 = vmatpush.msra.mxu0 %v54
  %114 = vmatpush.msra.mxu0 %v50
  %115 = vmatpush.msra.mxu0 %v46
  %116 = vmatpush.msra.mxu0 %v42
  %117 = vmatpush.msra.mxu0 %v38
  %118 = vmatpush.msra.mxu0 %v34
  %119 = vmatpush.msra.mxu0 %v30
  %120 = vmatpush.msra.mxu0 %v26
  %121 = vmatpush.msra.mxu0 %v22
  %122 = vmatmul.f32.gmra.mxu0 %v64
  %v123 = vpop.f32.mrf.mxu0
  %v124 = vadd.f32 %v60, %v123
  %125 = vdwg.mxu0
  %126 = vmatpush.msra.mxu0 0.0
  %127 = vmatpush.msra.mxu0 0.0
  %128 = vmatpush.msra.mxu0 0.0
  %129 = vmatpush.msra.mxu0 0.0
  %130 = vmatpush.msra.mxu0 0.0
  %131 = vmatpush.msra.mxu0 0.0
  %132 = vmatpush.msra.mxu0 0.0
  %133 = vmatpush.msra.mxu0 %v55
  %134 = vmatpush.msra.mxu0 %v51
  %135 = vmatpush.msra.mxu0 %v47
  %136 = vmatpush.msra.mxu0 %v43
  %137 = vmatpush.msra.mxu0 %v39
  %138 = vmatpush.msra.mxu0 %v35
  %139 = vmatpush.msra.mxu0 %v31
  %140 = vmatpush.msra.mxu0 %v27
  %141 = vmatpush.msra.mxu0 %v23
  %142 = vmatmul.f32.gmra.mxu0 %v64
  %v143 = vpop.f32.mrf.mxu0
  %v144 = vadd.f32 %v60, %v143
  %145 = vdwg.mxu0
  %v150 = vrot.slane %v104, 4
  %v151 = vrot.slane %v144, 4
  %vm152 = vcmask 1043456
  %v153 = vsel %vm152, %v84, %v150
  %v154 = vsel %vm152, %v124, %v151
  %v157 = vadd.f32 %v17, %v153
  %v158 = vadd.f32 %v18, %v154
  %159 = vst [vmem:[%s4] sm:$0xff] %v157
  %160 = vst [vmem:[%s4 + $0x8] sm:$0xff] %v158
  // Predicated region
  $region18: #{paradis_forward.17} parent=0 // pred_check
    _
  $region19: #{paradis_forward.17} parent=0 // pred_check_branch
    %162 = sbr.rel (0) target = $region21
  $region20: #{paradis_forward.17} parent=0 // pred_region
    _
  $region21: #{paradis_forward.17} parent=0 // pred_fallthru
    _
  // Predicated region
  $region22: #{paradis_forward.17} parent=0 // pred_check
    _
  $region23: #{paradis_forward.17} parent=0 // pred_check_branch
    %164 = sbr.rel (0) target = $region25
  $region24: #{paradis_forward.17} parent=0 // pred_region
    _
  $region25: #{paradis_forward.17} parent=0 // pred_fallthru
    _

</llo_original>
